<compile_context>
chip_gen: v7x
topology: tpu7x:2x2x1
jax: 0.10.0
libtpu: 0.0.40
codegen_flags: <defaults>
</compile_context>

<pallas_src>
import functools

import jax
import jax.numpy as jnp
from jax import lax
from jax.experimental import pallas as pl
from jax.experimental.pallas import tpu as pltpu


def _round_up(x, m):
    return ((x + m - 1) // m) * m


# ----------------------------------------------------------------------------
# Fused Pallas kernel: n-layer LSTM recurrence + linear head
# ----------------------------------------------------------------------------
def _fused_lstm_fc_kernel(*refs, n_layers):
    """Ref order (inputs, outputs, scratch):

      x_ref                          (T, Bp, Dp)   bf16, time-major, zero-padded
      per layer: wih (Din, 4Hp) bf16, whh (Hp, 4Hp) bf16, b (1, 4Hp) f32
      fc_w (Hp, Op) bf16, fc_b (1, Op) f32
      o_ref (Bp, Op) f32                           output
      gx_scr (T, Bp, 4Hp) bf16                     precomputed input gates
      hseq_scr (T, Bp, Hp) bf16                    inter-layer hidden sequence
                                                   (only when n_layers > 1)
    """
    x_ref = refs[0]
    layer_refs = refs[1:1 + 3 * n_layers]
    rest = refs[1 + 3 * n_layers:]
    fc_w_ref, fc_b_ref, o_ref, gx_scr = rest[0], rest[1], rest[2], rest[3]
    hseq_scr = rest[4] if n_layers > 1 else None

    T = x_ref.shape[0]
    Bp = x_ref.shape[1]
    Hp = gx_scr.shape[-1] // 4

    # Full unroll only for small T; partial unroll otherwise (bounded live ranges).
    unroll = True if T <= 16 else 8

    h = None
    for layer in range(n_layers):
        wih_ref = layer_refs[3 * layer]        # (Din, 4Hp) bf16
        whh_ref = layer_refs[3 * layer + 1]    # (Hp, 4Hp)  bf16
        b = layer_refs[3 * layer + 2][...]     # (1, 4Hp)   f32

        # Layer input sequence (bf16 value); last layer's output sequence is
        # never materialized.
        seq = x_ref[...] if layer == 0 else hseq_scr[...]
        din = seq.shape[-1]

        # Hoisted input-to-gates matmul for the WHOLE sequence: one big MXU op
        # with bf16 operands and f32 accumulation; bias folded in here.
        gx = jnp.dot(seq.reshape(T * Bp, din), wih_ref[...],
                     preferred_element_type=jnp.float32) + b
        gx_scr[...] = gx.reshape(T, Bp, 4 * Hp).astype(gx_scr.dtype)

        write_hseq = layer < n_layers - 1

        def step(t, carry, whh_ref=whh_ref, write_hseq=write_hseq):
            h, c = carry
            # whh read at the use site (kept VMEM-resident, low vreg pressure);
            # bf16 operands, f32 accumulation; gate slices lane-aligned.
            gates = gx_scr[t].astype(jnp.float32) + jnp.dot(
                h.astype(jnp.bfloat16), whh_ref[...],
                preferred_element_type=jnp.float32)
            i_g = jax.nn.sigmoid(gates[:, 0 * Hp:1 * Hp])
            f_g = jax.nn.sigmoid(gates[:, 1 * Hp:2 * Hp])
            g_g = jnp.tanh(gates[:, 2 * Hp:3 * Hp])
            o_g = jax.nn.sigmoid(gates[:, 3 * Hp:4 * Hp])
            c_new = f_g * c + i_g * g_g
            h_new = o_g * jnp.tanh(c_new)
            if write_hseq:                     # last layer: skip hseq writeback
                hseq_scr[t] = h_new.astype(hseq_scr.dtype)
            return h_new, c_new

        h0 = jnp.zeros((Bp, Hp), jnp.float32)
        c0 = jnp.zeros((Bp, Hp), jnp.float32)
        h, _ = lax.fori_loop(0, T, step, (h0, c0), unroll=unroll)

    # Linear head on hidden[-1] of the last layer, fused into the same kernel.
    o_ref[...] = (jnp.dot(h.astype(jnp.bfloat16), fc_w_ref[...],
                          preferred_element_type=jnp.float32)
                  + fc_b_ref[...])


# ----------------------------------------------------------------------------
# Wrappers
# ----------------------------------------------------------------------------
def _vmem_spec():
    return pl.BlockSpec(memory_space=pltpu.MemorySpace.VMEM)


def _pad_params(params):
    """Transpose + zero-pad PyTorch-layout params into the kernel layout.

    Padding is per-gate on the 4H axis so each gate block is a lane-aligned
    multiple of 128; all pad entries are zero, which keeps padded hidden units
    identically zero through the recurrence.  Weights are cast to bf16 (MXU
    operands); biases stay f32 (added to the f32 accumulator).
    """
    H = params["layers"][0]["w_hh"].shape[1]
    Hp = _round_up(H, 128)
    packed = []
    for lp in params["layers"]:
        w_ih, w_hh = lp["w_ih"], lp["w_hh"]            # (4H, Din), (4H, H)
        b = lp["b_ih"] + lp["b_hh"]                    # (4H,)
        d_in = w_ih.shape[1]
        d_in_p = _round_up(d_in, 128)
        w_ih_p = jnp.zeros((4, Hp, d_in_p), jnp.float32).at[:, :H, :d_in].set(
            w_ih.reshape(4, H, d_in))
        w_hh_p = jnp.zeros((4, Hp, Hp), jnp.float32).at[:, :H, :H].set(
            w_hh.reshape(4, H, H))
        b_p = jnp.zeros((4, Hp), jnp.float32).at[:, :H].set(b.reshape(4, H))
        packed += [
            jnp.transpose(w_ih_p.reshape(4 * Hp, d_in_p)).astype(jnp.bfloat16),
            jnp.transpose(w_hh_p.reshape(4 * Hp, Hp)).astype(jnp.bfloat16),
            b_p.reshape(1, 4 * Hp),                          # f32
        ]
    O = params["fc_w"].shape[0]
    Op = _round_up(O, 128)
    fc_w_p = jnp.zeros((Hp, Op), jnp.float32).at[:H, :O].set(
        params["fc_w"].T).astype(jnp.bfloat16)
    fc_b_p = jnp.zeros((1, Op), jnp.float32).at[0, :O].set(params["fc_b"])
    packed += [fc_w_p, fc_b_p]
    return packed, Hp, Op


@jax.jit
def lstm_classifier_forward(params, x):
    """x: (B, T, input_dim) -> (B, output_dim), batch_first like the nn.Module."""
    B, T, D = x.shape
    n_layers = len(params["layers"])
    O = params["fc_w"].shape[0]

    weights, Hp, Op = _pad_params(params)
    Bp = _round_up(B, 8)       # sublane alignment
    Dp = _round_up(D, 128)     # lane alignment

    # Time-major + zero-pad batch/feature dims; bf16 for the layer-0 gx matmul.
    # TODO(synk): for large inputs, fold this transpose/pad into the kernel's
    # first matmul (BlockSpec index_map) to avoid the extra HBM copy.
    x_tm = jnp.transpose(x.astype(jnp.float32), (1, 0, 2))          # (T, B, D)
    x_p = jnp.zeros((T, Bp, Dp), jnp.float32).at[:, :B, :D].set(
        x_tm).astype(jnp.bfloat16)

    scratch_shapes = [pltpu.VMEM((T, Bp, 4 * Hp), jnp.bfloat16)]    # input gates
    if n_layers > 1:
        scratch_shapes.append(pltpu.VMEM((T, Bp, Hp), jnp.bfloat16))  # hidden seq

    # Explicit VMEM budget sized from the padded shapes (matters on v7x: 64 MiB).
    needed = T * Bp * Dp * 2                              # x
    for lp in params["layers"]:
        d_in_p = _round_up(lp["w_ih"].shape[1], 128)
        needed += (d_in_p + Hp) * 4 * Hp * 2 + 4 * Hp * 4   # wih, whh, bias
    needed += Hp * Op * 2 + Op * 4 + Bp * Op * 4             # fc + out
    needed += T * Bp * 4 * Hp * 2                             # gx_scr
    if n_layers > 1:
        needed += T * Bp * Hp * 2                             # hseq_scr
    vmem_limit = int(min(128 * 1024 * 1024, max(32 * 1024 * 1024, 2 * needed)))

    out_p = pl.pallas_call(
        functools.partial(_fused_lstm_fc_kernel, n_layers=n_layers),
        out_shape=jax.ShapeDtypeStruct((Bp, Op), jnp.float32),
        in_specs=[_vmem_spec()] * (1 + 3 * n_layers + 2),
        out_specs=_vmem_spec(),
        scratch_shapes=scratch_shapes,
        compiler_params=pltpu.CompilerParams(vmem_limit_bytes=vmem_limit),
    )(x_p, *weights)
    return out_p[:B, :O]


def init_params(key, input_dim, hidden_dim, output_dim, n_layers):
    """PyTorch-shaped params, U(-1/sqrt(H), 1/sqrt(H)) like nn.LSTM / nn.Linear."""
    params = {"layers": []}
    k = 1.0 / jnp.sqrt(hidden_dim)
    for layer in range(n_layers):
        d_in = input_dim if layer == 0 else hidden_dim
        key, k1, k2, k3, k4 = jax.random.split(key, 5)
        params["layers"].append({
            "w_ih": jax.random.uniform(k1, (4 * hidden_dim, d_in), jnp.float32, -k, k),
            "w_hh": jax.random.uniform(k2, (4 * hidden_dim, hidden_dim), jnp.float32, -k, k),
            "b_ih": jax.random.uniform(k3, (4 * hidden_dim,), jnp.float32, -k, k),
            "b_hh": jax.random.uniform(k4, (4 * hidden_dim,), jnp.float32, -k, k),
        })
    key, k5, k6 = jax.random.split(key, 3)
    params["fc_w"] = jax.random.uniform(k5, (output_dim, hidden_dim), jnp.float32, -k, k)
    params["fc_b"] = jax.random.uniform(k6, (output_dim,), jnp.float32, -k, k)
    return params


# ----------------------------------------------------------------------------
# Pure-JAX reference (f32, correctness check only)
# ----------------------------------------------------------------------------
def reference_forward(params, x):
    H = params["layers"][0]["w_hh"].shape[1]
    x_tm = jnp.transpose(x.astype(jnp.float32), (1, 0, 2))
    B = x_tm.shape[1]
    for lp in params["layers"]:
        w_ih_t, w_hh_t = lp["w_ih"].T, lp["w_hh"].T
        b = (lp["b_ih"] + lp["b_hh"]).reshape(1, -1)

        def cell(carry, x_t, w_ih_t=w_ih_t, w_hh_t=w_hh_t, b=b):
            h, c = carry
            gates = x_t @ w_ih_t + h @ w_hh_t + b
            i_g = jax.nn.sigmoid(gates[:, 0 * H:1 * H])
            f_g = jax.nn.sigmoid(gates[:, 1 * H:2 * H])
            g_g = jnp.tanh(gates[:, 2 * H:3 * H])
            o_g = jax.nn.sigmoid(gates[:, 3 * H:4 * H])
            c_new = f_g * c + i_g * g_g
            h_new = o_g * jnp.tanh(c_new)
            return (h_new, c_new), h_new

        init = (jnp.zeros((B, H), jnp.float32), jnp.zeros((B, H), jnp.float32))
        _, x_tm = lax.scan(cell, init, x_tm)
    return x_tm[-1] @ params["fc_w"].T + params["fc_b"]


# ----------------------------------------------------------------------------
# Main
# ----------------------------------------------------------------------------
if __name__ == "__main__":
    BATCH, SEQ = 2, 8
    INPUT_DIM, HIDDEN_DIM, OUTPUT_DIM, N_LAYERS = 16, 32, 8, 2

    key = jax.random.PRNGKey(0)
    key, pkey, xkey = jax.random.split(key, 3)
    params = init_params(pkey, INPUT_DIM, HIDDEN_DIM, OUTPUT_DIM, N_LAYERS)
    x = jax.random.normal(xkey, (BATCH, SEQ, INPUT_DIM), jnp.float32)

    out = lstm_classifier_forward(params, x)
    out = jax.block_until_ready(out)

    ref = reference_forward(params, x)
    assert out.shape == (BATCH, OUTPUT_DIM), out.shape
    # Tolerance loosened vs. the pure-f32 version: matmul operands are bf16
    # (f32 accumulation), per the performance review.
    max_err = jnp.max(jnp.abs(out - ref))
    assert jnp.allclose(out, ref, atol=5e-2, rtol=5e-2), f"max abs err {max_err}"
    print("KERNEL_OK")
</pallas_src>

<mosaic_0001>
module attributes {stable_mosaic.version = 11 : i64} {
  func.func @_fused_lstm_fc_kernel(%arg0: memref<8x8x128xbf16, #tpu.memory_space<vmem>>, %arg1: memref<128x512xbf16, #tpu.memory_space<vmem>>, %arg2: memref<128x512xbf16, #tpu.memory_space<vmem>>, %arg3: memref<1x512xf32, #tpu.memory_space<vmem>>, %arg4: memref<128x512xbf16, #tpu.memory_space<vmem>>, %arg5: memref<128x512xbf16, #tpu.memory_space<vmem>>, %arg6: memref<1x512xf32, #tpu.memory_space<vmem>>, %arg7: memref<128x128xbf16, #tpu.memory_space<vmem>>, %arg8: memref<1x128xf32, #tpu.memory_space<vmem>>, %arg9: memref<8x128xf32, #tpu.memory_space<vmem>>, %arg10: memref<8x8x512xbf16, #tpu.memory_space<vmem>>, %arg11: memref<8x8x128xbf16, #tpu.memory_space<vmem>>) attributes {dimension_semantics = [], scalar_prefetch = 0 : i64, scratch_operands = 2 : i64, tpu.core_type = #tpu.core_type<tc>} {
    %c0 = arith.constant 0 : index
    %c0_0 = arith.constant 0 : index
    %0 = vector.load %arg3[%c0, %c0_0] : memref<1x512xf32, #tpu.memory_space<vmem>>, vector<1x512xf32>
    %c0_1 = arith.constant 0 : index
    %c0_2 = arith.constant 0 : index
    %c0_3 = arith.constant 0 : index
    %1 = vector.load %arg0[%c0_1, %c0_2, %c0_3] : memref<8x8x128xbf16, #tpu.memory_space<vmem>>, vector<8x8x128xbf16>
    %2 = vector.shape_cast %1 : vector<8x8x128xbf16> to vector<64x128xbf16>
    %c0_4 = arith.constant 0 : index
    %c0_5 = arith.constant 0 : index
    %3 = vector.load %arg1[%c0_4, %c0_5] : memref<128x512xbf16, #tpu.memory_space<vmem>>, vector<128x512xbf16>
    %cst = arith.constant dense<0.000000e+00> : vector<64x512xf32>
    %4 = tpu.matmul %2, %3, %cst {dimension_numbers = #tpu.dot_dimension_numbers<[1], [0], [0], [1], [0, 0, 1, 1], [], []>} : vector<64x128xbf16>, vector<128x512xbf16>, vector<64x512xf32> -> vector<64x512xf32>
    %5 = vector.broadcast %0 : vector<1x512xf32> to vector<64x512xf32>
    %6 = arith.addf %4, %5 : vector<64x512xf32>
    %7 = vector.shape_cast %6 : vector<64x512xf32> to vector<8x8x512xf32>
    %8 = arith.truncf %7 : vector<8x8x512xf32> to vector<8x8x512xbf16>
    %c0_6 = arith.constant 0 : index
    %c0_7 = arith.constant 0 : index
    %c0_8 = arith.constant 0 : index
    %9 = vector.load %arg10[%c0_6, %c0_7, %c0_8] : memref<8x8x512xbf16, #tpu.memory_space<vmem>>, vector<8x8x512xbf16>
    tpu.vector_store %arg10[%c0_6, %c0_7, %c0_8], %8 {strides = array<i32>} : memref<8x8x512xbf16, #tpu.memory_space<vmem>>, vector<8x8x512xbf16>,
    %cst_9 = arith.constant 0.000000e+00 : f32
    %10 = vector.broadcast %cst_9 : f32 to vector<8x128xf32>
    %cst_10 = arith.constant 0.000000e+00 : f32
    %11 = vector.broadcast %cst_10 : f32 to vector<8x128xf32>
    %c0_i32 = arith.constant 0 : i32
    %12 = arith.index_cast %c0_i32 : i32 to index
    %c0_11 = arith.constant 0 : index
    %c0_12 = arith.constant 0 : index
    %13 = vector.load %arg10[%12, %c0_11, %c0_12] : memref<8x8x512xbf16, #tpu.memory_space<vmem>>, vector<1x8x512xbf16>
    %14 = vector.shape_cast %13 : vector<1x8x512xbf16> to vector<8x512xbf16>
    %15 = arith.extf %14 : vector<8x512xbf16> to vector<8x512xf32>
    %16 = arith.truncf %10 : vector<8x128xf32> to vector<8x128xbf16>
    %c0_13 = arith.constant 0 : index
    %c0_14 = arith.constant 0 : index
    %17 = vector.load %arg2[%c0_13, %c0_14] : memref<128x512xbf16, #tpu.memory_space<vmem>>, vector<128x512xbf16>
    %cst_15 = arith.constant dense<0.000000e+00> : vector<8x512xf32>
    %18 = tpu.matmul %16, %17, %cst_15 {dimension_numbers = #tpu.dot_dimension_numbers<[1], [0], [0], [1], [0, 0, 1, 1], [], []>} : vector<8x128xbf16>, vector<128x512xbf16>, vector<8x512xf32> -> vector<8x512xf32>
    %19 = arith.addf %15, %18 : vector<8x512xf32>
    %20 = vector.extract_strided_slice %19 {offsets = [0, 0], sizes = [8, 128], strides = [1, 1]} : vector<8x512xf32> to vector<8x128xf32>
    %21 = arith.negf %20 : vector<8x128xf32>
    %22 = math.exp %21 : vector<8x128xf32>
    %cst_16 = arith.constant 1.000000e+00 : f32
    %23 = vector.broadcast %cst_16 : f32 to vector<8x128xf32>
    %24 = arith.addf %23, %22 : vector<8x128xf32>
    %25 = arith.divf %23, %24 : vector<8x128xf32>
    %26 = vector.extract_strided_slice %19 {offsets = [0, 128], sizes = [8, 128], strides = [1, 1]} : vector<8x512xf32> to vector<8x128xf32>
    %27 = arith.negf %26 : vector<8x128xf32>
    %28 = math.exp %27 : vector<8x128xf32>
    %cst_17 = arith.constant 1.000000e+00 : f32
    %29 = vector.broadcast %cst_17 : f32 to vector<8x128xf32>
    %30 = arith.addf %29, %28 : vector<8x128xf32>
    %31 = arith.divf %29, %30 : vector<8x128xf32>
    %32 = vector.extract_strided_slice %19 {offsets = [0, 256], sizes = [8, 128], strides = [1, 1]} : vector<8x512xf32> to vector<8x128xf32>
    %33 = math.tanh %32 : vector<8x128xf32>
    %34 = vector.extract_strided_slice %19 {offsets = [0, 384], sizes = [8, 128], strides = [1, 1]} : vector<8x512xf32> to vector<8x128xf32>
    %35 = arith.negf %34 : vector<8x128xf32>
    %36 = math.exp %35 : vector<8x128xf32>
    %cst_18 = arith.constant 1.000000e+00 : f32
    %37 = vector.broadcast %cst_18 : f32 to vector<8x128xf32>
    %38 = arith.addf %37, %36 : vector<8x128xf32>
    %39 = arith.divf %37, %38 : vector<8x128xf32>
    %40 = arith.mulf %31, %11 : vector<8x128xf32>
    %41 = arith.mulf %25, %33 : vector<8x128xf32>
    %42 = arith.addf %40, %41 : vector<8x128xf32>
    %43 = math.tanh %42 : vector<8x128xf32>
    %44 = arith.mulf %39, %43 : vector<8x128xf32>
    %45 = arith.truncf %44 : vector<8x128xf32> to vector<8x128xbf16>
    %46 = arith.index_cast %c0_i32 : i32 to index
    %c0_19 = arith.constant 0 : index
    %c0_20 = arith.constant 0 : index
    %47 = vector.load %arg11[%46, %c0_19, %c0_20] : memref<8x8x128xbf16, #tpu.memory_space<vmem>>, vector<1x8x128xbf16>
    %48 = vector.shape_cast %47 : vector<1x8x128xbf16> to vector<8x128xbf16>
    %49 = vector.shape_cast %45 : vector<8x128xbf16> to vector<1x8x128xbf16>
    tpu.vector_store %arg11[%46, %c0_19, %c0_20], %49 {strides = array<i32>} : memref<8x8x128xbf16, #tpu.memory_space<vmem>>, vector<1x8x128xbf16>,
    %c1_i32 = arith.constant 1 : i32
    %50 = arith.index_cast %c1_i32 : i32 to index
    %c0_21 = arith.constant 0 : index
    %c0_22 = arith.constant 0 : index
    %51 = vector.load %arg10[%50, %c0_21, %c0_22] : memref<8x8x512xbf16, #tpu.memory_space<vmem>>, vector<1x8x512xbf16>
    %52 = vector.shape_cast %51 : vector<1x8x512xbf16> to vector<8x512xbf16>
    %53 = arith.extf %52 : vector<8x512xbf16> to vector<8x512xf32>
    %54 = arith.truncf %44 : vector<8x128xf32> to vector<8x128xbf16>
    %c0_23 = arith.constant 0 : index
    %c0_24 = arith.constant 0 : index
    %55 = vector.load %arg2[%c0_23, %c0_24] : memref<128x512xbf16, #tpu.memory_space<vmem>>, vector<128x512xbf16>
    %cst_25 = arith.constant dense<0.000000e+00> : vector<8x512xf32>
    %56 = tpu.matmul %54, %55, %cst_25 {dimension_numbers = #tpu.dot_dimension_numbers<[1], [0], [0], [1], [0, 0, 1, 1], [], []>} : vector<8x128xbf16>, vector<128x512xbf16>, vector<8x512xf32> -> vector<8x512xf32>
    %57 = arith.addf %53, %56 : vector<8x512xf32>
    %58 = vector.extract_strided_slice %57 {offsets = [0, 0], sizes = [8, 128], strides = [1, 1]} : vector<8x512xf32> to vector<8x128xf32>
    %59 = arith.negf %58 : vector<8x128xf32>
    %60 = math.exp %59 : vector<8x128xf32>
    %cst_26 = arith.constant 1.000000e+00 : f32
    %61 = vector.broadcast %cst_26 : f32 to vector<8x128xf32>
    %62 = arith.addf %61, %60 : vector<8x128xf32>
    %63 = arith.divf %61, %62 : vector<8x128xf32>
    %64 = vector.extract_strided_slice %57 {offsets = [0, 128], sizes = [8, 128], strides = [1, 1]} : vector<8x512xf32> to vector<8x128xf32>
    %65 = arith.negf %64 : vector<8x128xf32>
    %66 = math.exp %65 : vector<8x128xf32>
    %cst_27 = arith.constant 1.000000e+00 : f32
    %67 = vector.broadcast %cst_27 : f32 to vector<8x128xf32>
    %68 = arith.addf %67, %66 : vector<8x128xf32>
    %69 = arith.divf %67, %68 : vector<8x128xf32>
    %70 = vector.extract_strided_slice %57 {offsets = [0, 256], sizes = [8, 128], strides = [1, 1]} : vector<8x512xf32> to vector<8x128xf32>
    %71 = math.tanh %70 : vector<8x128xf32>
    %72 = vector.extract_strided_slice %57 {offsets = [0, 384], sizes = [8, 128], strides = [1, 1]} : vector<8x512xf32> to vector<8x128xf32>
    %73 = arith.negf %72 : vector<8x128xf32>
    %74 = math.exp %73 : vector<8x128xf32>
    %cst_28 = arith.constant 1.000000e+00 : f32
    %75 = vector.broadcast %cst_28 : f32 to vector<8x128xf32>
    %76 = arith.addf %75, %74 : vector<8x128xf32>
    %77 = arith.divf %75, %76 : vector<8x128xf32>
    %78 = arith.mulf %69, %42 : vector<8x128xf32>
    %79 = arith.mulf %63, %71 : vector<8x128xf32>
    %80 = arith.addf %78, %79 : vector<8x128xf32>
    %81 = math.tanh %80 : vector<8x128xf32>
    %82 = arith.mulf %77, %81 : vector<8x128xf32>
    %83 = arith.truncf %82 : vector<8x128xf32> to vector<8x128xbf16>
    %84 = arith.index_cast %c1_i32 : i32 to index
    %c0_29 = arith.constant 0 : index
    %c0_30 = arith.constant 0 : index
    %85 = vector.load %arg11[%84, %c0_29, %c0_30] : memref<8x8x128xbf16, #tpu.memory_space<vmem>>, vector<1x8x128xbf16>
    %86 = vector.shape_cast %85 : vector<1x8x128xbf16> to vector<8x128xbf16>
    %87 = vector.shape_cast %83 : vector<8x128xbf16> to vector<1x8x128xbf16>
    tpu.vector_store %arg11[%84, %c0_29, %c0_30], %87 {strides = array<i32>} : memref<8x8x128xbf16, #tpu.memory_space<vmem>>, vector<1x8x128xbf16>,
    %c2_i32 = arith.constant 2 : i32
    %88 = arith.index_cast %c2_i32 : i32 to index
    %c0_31 = arith.constant 0 : index
    %c0_32 = arith.constant 0 : index
    %89 = vector.load %arg10[%88, %c0_31, %c0_32] : memref<8x8x512xbf16, #tpu.memory_space<vmem>>, vector<1x8x512xbf16>
    %90 = vector.shape_cast %89 : vector<1x8x512xbf16> to vector<8x512xbf16>
    %91 = arith.extf %90 : vector<8x512xbf16> to vector<8x512xf32>
    %92 = arith.truncf %82 : vector<8x128xf32> to vector<8x128xbf16>
    %c0_33 = arith.constant 0 : index
    %c0_34 = arith.constant 0 : index
    %93 = vector.load %arg2[%c0_33, %c0_34] : memref<128x512xbf16, #tpu.memory_space<vmem>>, vector<128x512xbf16>
    %cst_35 = arith.constant dense<0.000000e+00> : vector<8x512xf32>
    %94 = tpu.matmul %92, %93, %cst_35 {dimension_numbers = #tpu.dot_dimension_numbers<[1], [0], [0], [1], [0, 0, 1, 1], [], []>} : vector<8x128xbf16>, vector<128x512xbf16>, vector<8x512xf32> -> vector<8x512xf32>
    %95 = arith.addf %91, %94 : vector<8x512xf32>
    %96 = vector.extract_strided_slice %95 {offsets = [0, 0], sizes = [8, 128], strides = [1, 1]} : vector<8x512xf32> to vector<8x128xf32>
    %97 = arith.negf %96 : vector<8x128xf32>
    %98 = math.exp %97 : vector<8x128xf32>
    %cst_36 = arith.constant 1.000000e+00 : f32
    %99 = vector.broadcast %cst_36 : f32 to vector<8x128xf32>
    %100 = arith.addf %99, %98 : vector<8x128xf32>
    %101 = arith.divf %99, %100 : vector<8x128xf32>
    %102 = vector.extract_strided_slice %95 {offsets = [0, 128], sizes = [8, 128], strides = [1, 1]} : vector<8x512xf32> to vector<8x128xf32>
    %103 = arith.negf %102 : vector<8x128xf32>
    %104 = math.exp %103 : vector<8x128xf32>
    %cst_37 = arith.constant 1.000000e+00 : f32
    %105 = vector.broadcast %cst_37 : f32 to vector<8x128xf32>
    %106 = arith.addf %105, %104 : vector<8x128xf32>
    %107 = arith.divf %105, %106 : vector<8x128xf32>
    %108 = vector.extract_strided_slice %95 {offsets = [0, 256], sizes = [8, 128], strides = [1, 1]} : vector<8x512xf32> to vector<8x128xf32>
    %109 = math.tanh %108 : vector<8x128xf32>
    %110 = vector.extract_strided_slice %95 {offsets = [0, 384], sizes = [8, 128], strides = [1, 1]} : vector<8x512xf32> to vector<8x128xf32>
    %111 = arith.negf %110 : vector<8x128xf32>
    %112 = math.exp %111 : vector<8x128xf32>
    %cst_38 = arith.constant 1.000000e+00 : f32
    %113 = vector.broadcast %cst_38 : f32 to vector<8x128xf32>
    %114 = arith.addf %113, %112 : vector<8x128xf32>
    %115 = arith.divf %113, %114 : vector<8x128xf32>
    %116 = arith.mulf %107, %80 : vector<8x128xf32>
    %117 = arith.mulf %101, %109 : vector<8x128xf32>
    %118 = arith.addf %116, %117 : vector<8x128xf32>
    %119 = math.tanh %118 : vector<8x128xf32>
    %120 = arith.mulf %115, %119 : vector<8x128xf32>
    %121 = arith.truncf %120 : vector<8x128xf32> to vector<8x128xbf16>
    %122 = arith.index_cast %c2_i32 : i32 to index
    %c0_39 = arith.constant 0 : index
    %c0_40 = arith.constant 0 : index
    %123 = vector.load %arg11[%122, %c0_39, %c0_40] : memref<8x8x128xbf16, #tpu.memory_space<vmem>>, vector<1x8x128xbf16>
    %124 = vector.shape_cast %123 : vector<1x8x128xbf16> to vector<8x128xbf16>
    %125 = vector.shape_cast %121 : vector<8x128xbf16> to vector<1x8x128xbf16>
    tpu.vector_store %arg11[%122, %c0_39, %c0_40], %125 {strides = array<i32>} : memref<8x8x128xbf16, #tpu.memory_space<vmem>>, vector<1x8x128xbf16>,
    %c3_i32 = arith.constant 3 : i32
    %126 = arith.index_cast %c3_i32 : i32 to index
    %c0_41 = arith.constant 0 : index
    %c0_42 = arith.constant 0 : index
    %127 = vector.load %arg10[%126, %c0_41, %c0_42] : memref<8x8x512xbf16, #tpu.memory_space<vmem>>, vector<1x8x512xbf16>
    %128 = vector.shape_cast %127 : vector<1x8x512xbf16> to vector<8x512xbf16>
    %129 = arith.extf %128 : vector<8x512xbf16> to vector<8x512xf32>
    %130 = arith.truncf %120 : vector<8x128xf32> to vector<8x128xbf16>
    %c0_43 = arith.constant 0 : index
    %c0_44 = arith.constant 0 : index
    %131 = vector.load %arg2[%c0_43, %c0_44] : memref<128x512xbf16, #tpu.memory_space<vmem>>, vector<128x512xbf16>
    %cst_45 = arith.constant dense<0.000000e+00> : vector<8x512xf32>
    %132 = tpu.matmul %130, %131, %cst_45 {dimension_numbers = #tpu.dot_dimension_numbers<[1], [0], [0], [1], [0, 0, 1, 1], [], []>} : vector<8x128xbf16>, vector<128x512xbf16>, vector<8x512xf32> -> vector<8x512xf32>
    %133 = arith.addf %129, %132 : vector<8x512xf32>
    %134 = vector.extract_strided_slice %133 {offsets = [0, 0], sizes = [8, 128], strides = [1, 1]} : vector<8x512xf32> to vector<8x128xf32>
    %135 = arith.negf %134 : vector<8x128xf32>
    %136 = math.exp %135 : vector<8x128xf32>
    %cst_46 = arith.constant 1.000000e+00 : f32
    %137 = vector.broadcast %cst_46 : f32 to vector<8x128xf32>
    %138 = arith.addf %137, %136 : vector<8x128xf32>
    %139 = arith.divf %137, %138 : vector<8x128xf32>
    %140 = vector.extract_strided_slice %133 {offsets = [0, 128], sizes = [8, 128], strides = [1, 1]} : vector<8x512xf32> to vector<8x128xf32>
    %141 = arith.negf %140 : vector<8x128xf32>
    %142 = math.exp %141 : vector<8x128xf32>
    %cst_47 = arith.constant 1.000000e+00 : f32
    %143 = vector.broadcast %cst_47 : f32 to vector<8x128xf32>
    %144 = arith.addf %143, %142 : vector<8x128xf32>
    %145 = arith.divf %143, %144 : vector<8x128xf32>
    %146 = vector.extract_strided_slice %133 {offsets = [0, 256], sizes = [8, 128], strides = [1, 1]} : vector<8x512xf32> to vector<8x128xf32>
    %147 = math.tanh %146 : vector<8x128xf32>
    %148 = vector.extract_strided_slice %133 {offsets = [0, 384], sizes = [8, 128], strides = [1, 1]} : vector<8x512xf32> to vector<8x128xf32>
    %149 = arith.negf %148 : vector<8x128xf32>
    %150 = math.exp %149 : vector<8x128xf32>
    %cst_48 = arith.constant 1.000000e+00 : f32
    %151 = vector.broadcast %cst_48 : f32 to vector<8x128xf32>
    %152 = arith.addf %151, %150 : vector<8x128xf32>
    %153 = arith.divf %151, %152 : vector<8x128xf32>
    %154 = arith.mulf %145, %118 : vector<8x128xf32>
    %155 = arith.mulf %139, %147 : vector<8x128xf32>
    %156 = arith.addf %154, %155 : vector<8x128xf32>
    %157 = math.tanh %156 : vector<8x128xf32>
    %158 = arith.mulf %153, %157 : vector<8x128xf32>
    %159 = arith.truncf %158 : vector<8x128xf32> to vector<8x128xbf16>
    %160 = arith.index_cast %c3_i32 : i32 to index
    %c0_49 = arith.constant 0 : index
    %c0_50 = arith.constant 0 : index
    %161 = vector.load %arg11[%160, %c0_49, %c0_50] : memref<8x8x128xbf16, #tpu.memory_space<vmem>>, vector<1x8x128xbf16>
    %162 = vector.shape_cast %161 : vector<1x8x128xbf16> to vector<8x128xbf16>
    %163 = vector.shape_cast %159 : vector<8x128xbf16> to vector<1x8x128xbf16>
    tpu.vector_store %arg11[%160, %c0_49, %c0_50], %163 {strides = array<i32>} : memref<8x8x128xbf16, #tpu.memory_space<vmem>>, vector<1x8x128xbf16>,
    %c4_i32 = arith.constant 4 : i32
    %164 = arith.index_cast %c4_i32 : i32 to index
    %c0_51 = arith.constant 0 : index
    %c0_52 = arith.constant 0 : index
    %165 = vector.load %arg10[%164, %c0_51, %c0_52] : memref<8x8x512xbf16, #tpu.memory_space<vmem>>, vector<1x8x512xbf16>
    %166 = vector.shape_cast %165 : vector<1x8x512xbf16> to vector<8x512xbf16>
    %167 = arith.extf %166 : vector<8x512xbf16> to vector<8x512xf32>
    %168 = arith.truncf %158 : vector<8x128xf32> to vector<8x128xbf16>
    %c0_53 = arith.constant 0 : index
    %c0_54 = arith.constant 0 : index
    %169 = vector.load %arg2[%c0_53, %c0_54] : memref<128x512xbf16, #tpu.memory_space<vmem>>, vector<128x512xbf16>
    %cst_55 = arith.constant dense<0.000000e+00> : vector<8x512xf32>
    %170 = tpu.matmul %168, %169, %cst_55 {dimension_numbers = #tpu.dot_dimension_numbers<[1], [0], [0], [1], [0, 0, 1, 1], [], []>} : vector<8x128xbf16>, vector<128x512xbf16>, vector<8x512xf32> -> vector<8x512xf32>
    %171 = arith.addf %167, %170 : vector<8x512xf32>
    %172 = vector.extract_strided_slice %171 {offsets = [0, 0], sizes = [8, 128], strides = [1, 1]} : vector<8x512xf32> to vector<8x128xf32>
    %173 = arith.negf %172 : vector<8x128xf32>
    %174 = math.exp %173 : vector<8x128xf32>
    %cst_56 = arith.constant 1.000000e+00 : f32
    %175 = vector.broadcast %cst_56 : f32 to vector<8x128xf32>
    %176 = arith.addf %175, %174 : vector<8x128xf32>
    %177 = arith.divf %175, %176 : vector<8x128xf32>
    %178 = vector.extract_strided_slice %171 {offsets = [0, 128], sizes = [8, 128], strides = [1, 1]} : vector<8x512xf32> to vector<8x128xf32>
    %179 = arith.negf %178 : vector<8x128xf32>
    %180 = math.exp %179 : vector<8x128xf32>
    %cst_57 = arith.constant 1.000000e+00 : f32
    %181 = vector.broadcast %cst_57 : f32 to vector<8x128xf32>
    %182 = arith.addf %181, %180 : vector<8x128xf32>
    %183 = arith.divf %181, %182 : vector<8x128xf32>
    %184 = vector.extract_strided_slice %171 {offsets = [0, 256], sizes = [8, 128], strides = [1, 1]} : vector<8x512xf32> to vector<8x128xf32>
    %185 = math.tanh %184 : vector<8x128xf32>
    %186 = vector.extract_strided_slice %171 {offsets = [0, 384], sizes = [8, 128], strides = [1, 1]} : vector<8x512xf32> to vector<8x128xf32>
    %187 = arith.negf %186 : vector<8x128xf32>
    %188 = math.exp %187 : vector<8x128xf32>
    %cst_58 = arith.constant 1.000000e+00 : f32
    %189 = vector.broadcast %cst_58 : f32 to vector<8x128xf32>
    %190 = arith.addf %189, %188 : vector<8x128xf32>
    %191 = arith.divf %189, %190 : vector<8x128xf32>
    %192 = arith.mulf %183, %156 : vector<8x128xf32>
    %193 = arith.mulf %177, %185 : vector<8x128xf32>
    %194 = arith.addf %192, %193 : vector<8x128xf32>
    %195 = math.tanh %194 : vector<8x128xf32>
    %196 = arith.mulf %191, %195 : vector<8x128xf32>
    %197 = arith.truncf %196 : vector<8x128xf32> to vector<8x128xbf16>
    %198 = arith.index_cast %c4_i32 : i32 to index
    %c0_59 = arith.constant 0 : index
    %c0_60 = arith.constant 0 : index
    %199 = vector.load %arg11[%198, %c0_59, %c0_60] : memref<8x8x128xbf16, #tpu.memory_space<vmem>>, vector<1x8x128xbf16>
    %200 = vector.shape_cast %199 : vector<1x8x128xbf16> to vector<8x128xbf16>
    %201 = vector.shape_cast %197 : vector<8x128xbf16> to vector<1x8x128xbf16>
    tpu.vector_store %arg11[%198, %c0_59, %c0_60], %201 {strides = array<i32>} : memref<8x8x128xbf16, #tpu.memory_space<vmem>>, vector<1x8x128xbf16>,
    %c5_i32 = arith.constant 5 : i32
    %202 = arith.index_cast %c5_i32 : i32 to index
    %c0_61 = arith.constant 0 : index
    %c0_62 = arith.constant 0 : index
    %203 = vector.load %arg10[%202, %c0_61, %c0_62] : memref<8x8x512xbf16, #tpu.memory_space<vmem>>, vector<1x8x512xbf16>
    %204 = vector.shape_cast %203 : vector<1x8x512xbf16> to vector<8x512xbf16>
    %205 = arith.extf %204 : vector<8x512xbf16> to vector<8x512xf32>
    %206 = arith.truncf %196 : vector<8x128xf32> to vector<8x128xbf16>
    %c0_63 = arith.constant 0 : index
    %c0_64 = arith.constant 0 : index
    %207 = vector.load %arg2[%c0_63, %c0_64] : memref<128x512xbf16, #tpu.memory_space<vmem>>, vector<128x512xbf16>
    %cst_65 = arith.constant dense<0.000000e+00> : vector<8x512xf32>
    %208 = tpu.matmul %206, %207, %cst_65 {dimension_numbers = #tpu.dot_dimension_numbers<[1], [0], [0], [1], [0, 0, 1, 1], [], []>} : vector<8x128xbf16>, vector<128x512xbf16>, vector<8x512xf32> -> vector<8x512xf32>
    %209 = arith.addf %205, %208 : vector<8x512xf32>
    %210 = vector.extract_strided_slice %209 {offsets = [0, 0], sizes = [8, 128], strides = [1, 1]} : vector<8x512xf32> to vector<8x128xf32>
    %211 = arith.negf %210 : vector<8x128xf32>
    %212 = math.exp %211 : vector<8x128xf32>
    %cst_66 = arith.constant 1.000000e+00 : f32
    %213 = vector.broadcast %cst_66 : f32 to vector<8x128xf32>
    %214 = arith.addf %213, %212 : vector<8x128xf32>
    %215 = arith.divf %213, %214 : vector<8x128xf32>
    %216 = vector.extract_strided_slice %209 {offsets = [0, 128], sizes = [8, 128], strides = [1, 1]} : vector<8x512xf32> to vector<8x128xf32>
    %217 = arith.negf %216 : vector<8x128xf32>
    %218 = math.exp %217 : vector<8x128xf32>
    %cst_67 = arith.constant 1.000000e+00 : f32
    %219 = vector.broadcast %cst_67 : f32 to vector<8x128xf32>
    %220 = arith.addf %219, %218 : vector<8x128xf32>
    %221 = arith.divf %219, %220 : vector<8x128xf32>
    %222 = vector.extract_strided_slice %209 {offsets = [0, 256], sizes = [8, 128], strides = [1, 1]} : vector<8x512xf32> to vector<8x128xf32>
    %223 = math.tanh %222 : vector<8x128xf32>
    %224 = vector.extract_strided_slice %209 {offsets = [0, 384], sizes = [8, 128], strides = [1, 1]} : vector<8x512xf32> to vector<8x128xf32>
    %225 = arith.negf %224 : vector<8x128xf32>
    %226 = math.exp %225 : vector<8x128xf32>
    %cst_68 = arith.constant 1.000000e+00 : f32
    %227 = vector.broadcast %cst_68 : f32 to vector<8x128xf32>
    %228 = arith.addf %227, %226 : vector<8x128xf32>
    %229 = arith.divf %227, %228 : vector<8x128xf32>
    %230 = arith.mulf %221, %194 : vector<8x128xf32>
    %231 = arith.mulf %215, %223 : vector<8x128xf32>
    %232 = arith.addf %230, %231 : vector<8x128xf32>
    %233 = math.tanh %232 : vector<8x128xf32>
    %234 = arith.mulf %229, %233 : vector<8x128xf32>
    %235 = arith.truncf %234 : vector<8x128xf32> to vector<8x128xbf16>
    %236 = arith.index_cast %c5_i32 : i32 to index
    %c0_69 = arith.constant 0 : index
    %c0_70 = arith.constant 0 : index
    %237 = vector.load %arg11[%236, %c0_69, %c0_70] : memref<8x8x128xbf16, #tpu.memory_space<vmem>>, vector<1x8x128xbf16>
    %238 = vector.shape_cast %237 : vector<1x8x128xbf16> to vector<8x128xbf16>
    %239 = vector.shape_cast %235 : vector<8x128xbf16> to vector<1x8x128xbf16>
    tpu.vector_store %arg11[%236, %c0_69, %c0_70], %239 {strides = array<i32>} : memref<8x8x128xbf16, #tpu.memory_space<vmem>>, vector<1x8x128xbf16>,
    %c6_i32 = arith.constant 6 : i32
    %240 = arith.index_cast %c6_i32 : i32 to index
    %c0_71 = arith.constant 0 : index
    %c0_72 = arith.constant 0 : index
    %241 = vector.load %arg10[%240, %c0_71, %c0_72] : memref<8x8x512xbf16, #tpu.memory_space<vmem>>, vector<1x8x512xbf16>
    %242 = vector.shape_cast %241 : vector<1x8x512xbf16> to vector<8x512xbf16>
    %243 = arith.extf %242 : vector<8x512xbf16> to vector<8x512xf32>
    %244 = arith.truncf %234 : vector<8x128xf32> to vector<8x128xbf16>
    %c0_73 = arith.constant 0 : index
    %c0_74 = arith.constant 0 : index
    %245 = vector.load %arg2[%c0_73, %c0_74] : memref<128x512xbf16, #tpu.memory_space<vmem>>, vector<128x512xbf16>
    %cst_75 = arith.constant dense<0.000000e+00> : vector<8x512xf32>
    %246 = tpu.matmul %244, %245, %cst_75 {dimension_numbers = #tpu.dot_dimension_numbers<[1], [0], [0], [1], [0, 0, 1, 1], [], []>} : vector<8x128xbf16>, vector<128x512xbf16>, vector<8x512xf32> -> vector<8x512xf32>
    %247 = arith.addf %243, %246 : vector<8x512xf32>
    %248 = vector.extract_strided_slice %247 {offsets = [0, 0], sizes = [8, 128], strides = [1, 1]} : vector<8x512xf32> to vector<8x128xf32>
    %249 = arith.negf %248 : vector<8x128xf32>
    %250 = math.exp %249 : vector<8x128xf32>
    %cst_76 = arith.constant 1.000000e+00 : f32
    %251 = vector.broadcast %cst_76 : f32 to vector<8x128xf32>
    %252 = arith.addf %251, %250 : vector<8x128xf32>
    %253 = arith.divf %251, %252 : vector<8x128xf32>
    %254 = vector.extract_strided_slice %247 {offsets = [0, 128], sizes = [8, 128], strides = [1, 1]} : vector<8x512xf32> to vector<8x128xf32>
    %255 = arith.negf %254 : vector<8x128xf32>
    %256 = math.exp %255 : vector<8x128xf32>
    %cst_77 = arith.constant 1.000000e+00 : f32
    %257 = vector.broadcast %cst_77 : f32 to vector<8x128xf32>
    %258 = arith.addf %257, %256 : vector<8x128xf32>
    %259 = arith.divf %257, %258 : vector<8x128xf32>
    %260 = vector.extract_strided_slice %247 {offsets = [0, 256], sizes = [8, 128], strides = [1, 1]} : vector<8x512xf32> to vector<8x128xf32>
    %261 = math.tanh %260 : vector<8x128xf32>
    %262 = vector.extract_strided_slice %247 {offsets = [0, 384], sizes = [8, 128], strides = [1, 1]} : vector<8x512xf32> to vector<8x128xf32>
    %263 = arith.negf %262 : vector<8x128xf32>
    %264 = math.exp %263 : vector<8x128xf32>
    %cst_78 = arith.constant 1.000000e+00 : f32
    %265 = vector.broadcast %cst_78 : f32 to vector<8x128xf32>
    %266 = arith.addf %265, %264 : vector<8x128xf32>
    %267 = arith.divf %265, %266 : vector<8x128xf32>
    %268 = arith.mulf %259, %232 : vector<8x128xf32>
    %269 = arith.mulf %253, %261 : vector<8x128xf32>
    %270 = arith.addf %268, %269 : vector<8x128xf32>
    %271 = math.tanh %270 : vector<8x128xf32>
    %272 = arith.mulf %267, %271 : vector<8x128xf32>
    %273 = arith.truncf %272 : vector<8x128xf32> to vector<8x128xbf16>
    %274 = arith.index_cast %c6_i32 : i32 to index
    %c0_79 = arith.constant 0 : index
    %c0_80 = arith.constant 0 : index
    %275 = vector.load %arg11[%274, %c0_79, %c0_80] : memref<8x8x128xbf16, #tpu.memory_space<vmem>>, vector<1x8x128xbf16>
    %276 = vector.shape_cast %275 : vector<1x8x128xbf16> to vector<8x128xbf16>
    %277 = vector.shape_cast %273 : vector<8x128xbf16> to vector<1x8x128xbf16>
    tpu.vector_store %arg11[%274, %c0_79, %c0_80], %277 {strides = array<i32>} : memref<8x8x128xbf16, #tpu.memory_space<vmem>>, vector<1x8x128xbf16>,
    %c7_i32 = arith.constant 7 : i32
    %278 = arith.index_cast %c7_i32 : i32 to index
    %c0_81 = arith.constant 0 : index
    %c0_82 = arith.constant 0 : index
    %279 = vector.load %arg10[%278, %c0_81, %c0_82] : memref<8x8x512xbf16, #tpu.memory_space<vmem>>, vector<1x8x512xbf16>
    %280 = vector.shape_cast %279 : vector<1x8x512xbf16> to vector<8x512xbf16>
    %281 = arith.extf %280 : vector<8x512xbf16> to vector<8x512xf32>
    %282 = arith.truncf %272 : vector<8x128xf32> to vector<8x128xbf16>
    %c0_83 = arith.constant 0 : index
    %c0_84 = arith.constant 0 : index
    %283 = vector.load %arg2[%c0_83, %c0_84] : memref<128x512xbf16, #tpu.memory_space<vmem>>, vector<128x512xbf16>
    %cst_85 = arith.constant dense<0.000000e+00> : vector<8x512xf32>
    %284 = tpu.matmul %282, %283, %cst_85 {dimension_numbers = #tpu.dot_dimension_numbers<[1], [0], [0], [1], [0, 0, 1, 1], [], []>} : vector<8x128xbf16>, vector<128x512xbf16>, vector<8x512xf32> -> vector<8x512xf32>
    %285 = arith.addf %281, %284 : vector<8x512xf32>
    %286 = vector.extract_strided_slice %285 {offsets = [0, 0], sizes = [8, 128], strides = [1, 1]} : vector<8x512xf32> to vector<8x128xf32>
    %287 = arith.negf %286 : vector<8x128xf32>
    %288 = math.exp %287 : vector<8x128xf32>
    %cst_86 = arith.constant 1.000000e+00 : f32
    %289 = vector.broadcast %cst_86 : f32 to vector<8x128xf32>
    %290 = arith.addf %289, %288 : vector<8x128xf32>
    %291 = arith.divf %289, %290 : vector<8x128xf32>
    %292 = vector.extract_strided_slice %285 {offsets = [0, 128], sizes = [8, 128], strides = [1, 1]} : vector<8x512xf32> to vector<8x128xf32>
    %293 = arith.negf %292 : vector<8x128xf32>
    %294 = math.exp %293 : vector<8x128xf32>
    %cst_87 = arith.constant 1.000000e+00 : f32
    %295 = vector.broadcast %cst_87 : f32 to vector<8x128xf32>
    %296 = arith.addf %295, %294 : vector<8x128xf32>
    %297 = arith.divf %295, %296 : vector<8x128xf32>
    %298 = vector.extract_strided_slice %285 {offsets = [0, 256], sizes = [8, 128], strides = [1, 1]} : vector<8x512xf32> to vector<8x128xf32>
    %299 = math.tanh %298 : vector<8x128xf32>
    %300 = vector.extract_strided_slice %285 {offsets = [0, 384], sizes = [8, 128], strides = [1, 1]} : vector<8x512xf32> to vector<8x128xf32>
    %301 = arith.negf %300 : vector<8x128xf32>
    %302 = math.exp %301 : vector<8x128xf32>
    %cst_88 = arith.constant 1.000000e+00 : f32
    %303 = vector.broadcast %cst_88 : f32 to vector<8x128xf32>
    %304 = arith.addf %303, %302 : vector<8x128xf32>
    %305 = arith.divf %303, %304 : vector<8x128xf32>
    %306 = arith.mulf %297, %270 : vector<8x128xf32>
    %307 = arith.mulf %291, %299 : vector<8x128xf32>
    %308 = arith.addf %306, %307 : vector<8x128xf32>
    %309 = math.tanh %308 : vector<8x128xf32>
    %310 = arith.mulf %305, %309 : vector<8x128xf32>
    %311 = arith.truncf %310 : vector<8x128xf32> to vector<8x128xbf16>
    %312 = arith.index_cast %c7_i32 : i32 to index
    %c0_89 = arith.constant 0 : index
    %c0_90 = arith.constant 0 : index
    %313 = vector.load %arg11[%312, %c0_89, %c0_90] : memref<8x8x128xbf16, #tpu.memory_space<vmem>>, vector<1x8x128xbf16>
    %314 = vector.shape_cast %313 : vector<1x8x128xbf16> to vector<8x128xbf16>
    %315 = vector.shape_cast %311 : vector<8x128xbf16> to vector<1x8x128xbf16>
    tpu.vector_store %arg11[%312, %c0_89, %c0_90], %315 {strides = array<i32>} : memref<8x8x128xbf16, #tpu.memory_space<vmem>>, vector<1x8x128xbf16>,
    %c8_i32 = arith.constant 8 : i32
    %c0_91 = arith.constant 0 : index
    %c0_92 = arith.constant 0 : index
    %316 = vector.load %arg6[%c0_91, %c0_92] : memref<1x512xf32, #tpu.memory_space<vmem>>, vector<1x512xf32>
    %c0_93 = arith.constant 0 : index
    %c0_94 = arith.constant 0 : index
    %c0_95 = arith.constant 0 : index
    %317 = vector.load %arg11[%c0_93, %c0_94, %c0_95] : memref<8x8x128xbf16, #tpu.memory_space<vmem>>, vector<8x8x128xbf16>
    %318 = vector.shape_cast %317 : vector<8x8x128xbf16> to vector<64x128xbf16>
    %c0_96 = arith.constant 0 : index
    %c0_97 = arith.constant 0 : index
    %319 = vector.load %arg4[%c0_96, %c0_97] : memref<128x512xbf16, #tpu.memory_space<vmem>>, vector<128x512xbf16>
    %cst_98 = arith.constant dense<0.000000e+00> : vector<64x512xf32>
    %320 = tpu.matmul %318, %319, %cst_98 {dimension_numbers = #tpu.dot_dimension_numbers<[1], [0], [0], [1], [0, 0, 1, 1], [], []>} : vector<64x128xbf16>, vector<128x512xbf16>, vector<64x512xf32> -> vector<64x512xf32>
    %321 = vector.broadcast %316 : vector<1x512xf32> to vector<64x512xf32>
    %322 = arith.addf %320, %321 : vector<64x512xf32>
    %323 = vector.shape_cast %322 : vector<64x512xf32> to vector<8x8x512xf32>
    %324 = arith.truncf %323 : vector<8x8x512xf32> to vector<8x8x512xbf16>
    %c0_99 = arith.constant 0 : index
    %c0_100 = arith.constant 0 : index
    %c0_101 = arith.constant 0 : index
    %325 = vector.load %arg10[%c0_99, %c0_100, %c0_101] : memref<8x8x512xbf16, #tpu.memory_space<vmem>>, vector<8x8x512xbf16>
    tpu.vector_store %arg10[%c0_99, %c0_100, %c0_101], %324 {strides = array<i32>} : memref<8x8x512xbf16, #tpu.memory_space<vmem>>, vector<8x8x512xbf16>,
    %cst_102 = arith.constant 0.000000e+00 : f32
    %326 = vector.broadcast %cst_102 : f32 to vector<8x128xf32>
    %cst_103 = arith.constant 0.000000e+00 : f32
    %327 = vector.broadcast %cst_103 : f32 to vector<8x128xf32>
    %c0_i32_104 = arith.constant 0 : i32
    %328 = arith.index_cast %c0_i32_104 : i32 to index
    %c0_105 = arith.constant 0 : index
    %c0_106 = arith.constant 0 : index
    %329 = vector.load %arg10[%328, %c0_105, %c0_106] : memref<8x8x512xbf16, #tpu.memory_space<vmem>>, vector<1x8x512xbf16>
    %330 = vector.shape_cast %329 : vector<1x8x512xbf16> to vector<8x512xbf16>
    %331 = arith.extf %330 : vector<8x512xbf16> to vector<8x512xf32>
    %332 = arith.truncf %326 : vector<8x128xf32> to vector<8x128xbf16>
    %c0_107 = arith.constant 0 : index
    %c0_108 = arith.constant 0 : index
    %333 = vector.load %arg5[%c0_107, %c0_108] : memref<128x512xbf16, #tpu.memory_space<vmem>>, vector<128x512xbf16>
    %cst_109 = arith.constant dense<0.000000e+00> : vector<8x512xf32>
    %334 = tpu.matmul %332, %333, %cst_109 {dimension_numbers = #tpu.dot_dimension_numbers<[1], [0], [0], [1], [0, 0, 1, 1], [], []>} : vector<8x128xbf16>, vector<128x512xbf16>, vector<8x512xf32> -> vector<8x512xf32>
    %335 = arith.addf %331, %334 : vector<8x512xf32>
    %336 = vector.extract_strided_slice %335 {offsets = [0, 0], sizes = [8, 128], strides = [1, 1]} : vector<8x512xf32> to vector<8x128xf32>
    %337 = arith.negf %336 : vector<8x128xf32>
    %338 = math.exp %337 : vector<8x128xf32>
    %cst_110 = arith.constant 1.000000e+00 : f32
    %339 = vector.broadcast %cst_110 : f32 to vector<8x128xf32>
    %340 = arith.addf %339, %338 : vector<8x128xf32>
    %341 = arith.divf %339, %340 : vector<8x128xf32>
    %342 = vector.extract_strided_slice %335 {offsets = [0, 128], sizes = [8, 128], strides = [1, 1]} : vector<8x512xf32> to vector<8x128xf32>
    %343 = arith.negf %342 : vector<8x128xf32>
    %344 = math.exp %343 : vector<8x128xf32>
    %cst_111 = arith.constant 1.000000e+00 : f32
    %345 = vector.broadcast %cst_111 : f32 to vector<8x128xf32>
    %346 = arith.addf %345, %344 : vector<8x128xf32>
    %347 = arith.divf %345, %346 : vector<8x128xf32>
    %348 = vector.extract_strided_slice %335 {offsets = [0, 256], sizes = [8, 128], strides = [1, 1]} : vector<8x512xf32> to vector<8x128xf32>
    %349 = math.tanh %348 : vector<8x128xf32>
    %350 = vector.extract_strided_slice %335 {offsets = [0, 384], sizes = [8, 128], strides = [1, 1]} : vector<8x512xf32> to vector<8x128xf32>
    %351 = arith.negf %350 : vector<8x128xf32>
    %352 = math.exp %351 : vector<8x128xf32>
    %cst_112 = arith.constant 1.000000e+00 : f32
    %353 = vector.broadcast %cst_112 : f32 to vector<8x128xf32>
    %354 = arith.addf %353, %352 : vector<8x128xf32>
    %355 = arith.divf %353, %354 : vector<8x128xf32>
    %356 = arith.mulf %347, %327 : vector<8x128xf32>
    %357 = arith.mulf %341, %349 : vector<8x128xf32>
    %358 = arith.addf %356, %357 : vector<8x128xf32>
    %359 = math.tanh %358 : vector<8x128xf32>
    %360 = arith.mulf %355, %359 : vector<8x128xf32>
    %c1_i32_113 = arith.constant 1 : i32
    %361 = arith.index_cast %c1_i32_113 : i32 to index
    %c0_114 = arith.constant 0 : index
    %c0_115 = arith.constant 0 : index
    %362 = vector.load %arg10[%361, %c0_114, %c0_115] : memref<8x8x512xbf16, #tpu.memory_space<vmem>>, vector<1x8x512xbf16>
    %363 = vector.shape_cast %362 : vector<1x8x512xbf16> to vector<8x512xbf16>
    %364 = arith.extf %363 : vector<8x512xbf16> to vector<8x512xf32>
    %365 = arith.truncf %360 : vector<8x128xf32> to vector<8x128xbf16>
    %c0_116 = arith.constant 0 : index
    %c0_117 = arith.constant 0 : index
    %366 = vector.load %arg5[%c0_116, %c0_117] : memref<128x512xbf16, #tpu.memory_space<vmem>>, vector<128x512xbf16>
    %cst_118 = arith.constant dense<0.000000e+00> : vector<8x512xf32>
    %367 = tpu.matmul %365, %366, %cst_118 {dimension_numbers = #tpu.dot_dimension_numbers<[1], [0], [0], [1], [0, 0, 1, 1], [], []>} : vector<8x128xbf16>, vector<128x512xbf16>, vector<8x512xf32> -> vector<8x512xf32>
    %368 = arith.addf %364, %367 : vector<8x512xf32>
    %369 = vector.extract_strided_slice %368 {offsets = [0, 0], sizes = [8, 128], strides = [1, 1]} : vector<8x512xf32> to vector<8x128xf32>
    %370 = arith.negf %369 : vector<8x128xf32>
    %371 = math.exp %370 : vector<8x128xf32>
    %cst_119 = arith.constant 1.000000e+00 : f32
    %372 = vector.broadcast %cst_119 : f32 to vector<8x128xf32>
    %373 = arith.addf %372, %371 : vector<8x128xf32>
    %374 = arith.divf %372, %373 : vector<8x128xf32>
    %375 = vector.extract_strided_slice %368 {offsets = [0, 128], sizes = [8, 128], strides = [1, 1]} : vector<8x512xf32> to vector<8x128xf32>
    %376 = arith.negf %375 : vector<8x128xf32>
    %377 = math.exp %376 : vector<8x128xf32>
    %cst_120 = arith.constant 1.000000e+00 : f32
    %378 = vector.broadcast %cst_120 : f32 to vector<8x128xf32>
    %379 = arith.addf %378, %377 : vector<8x128xf32>
    %380 = arith.divf %378, %379 : vector<8x128xf32>
    %381 = vector.extract_strided_slice %368 {offsets = [0, 256], sizes = [8, 128], strides = [1, 1]} : vector<8x512xf32> to vector<8x128xf32>
    %382 = math.tanh %381 : vector<8x128xf32>
    %383 = vector.extract_strided_slice %368 {offsets = [0, 384], sizes = [8, 128], strides = [1, 1]} : vector<8x512xf32> to vector<8x128xf32>
    %384 = arith.negf %383 : vector<8x128xf32>
    %385 = math.exp %384 : vector<8x128xf32>
    %cst_121 = arith.constant 1.000000e+00 : f32
    %386 = vector.broadcast %cst_121 : f32 to vector<8x128xf32>
    %387 = arith.addf %386, %385 : vector<8x128xf32>
    %388 = arith.divf %386, %387 : vector<8x128xf32>
    %389 = arith.mulf %380, %358 : vector<8x128xf32>
    %390 = arith.mulf %374, %382 : vector<8x128xf32>
    %391 = arith.addf %389, %390 : vector<8x128xf32>
    %392 = math.tanh %391 : vector<8x128xf32>
    %393 = arith.mulf %388, %392 : vector<8x128xf32>
    %c2_i32_122 = arith.constant 2 : i32
    %394 = arith.index_cast %c2_i32_122 : i32 to index
    %c0_123 = arith.constant 0 : index
    %c0_124 = arith.constant 0 : index
    %395 = vector.load %arg10[%394, %c0_123, %c0_124] : memref<8x8x512xbf16, #tpu.memory_space<vmem>>, vector<1x8x512xbf16>
    %396 = vector.shape_cast %395 : vector<1x8x512xbf16> to vector<8x512xbf16>
    %397 = arith.extf %396 : vector<8x512xbf16> to vector<8x512xf32>
    %398 = arith.truncf %393 : vector<8x128xf32> to vector<8x128xbf16>
    %c0_125 = arith.constant 0 : index
    %c0_126 = arith.constant 0 : index
    %399 = vector.load %arg5[%c0_125, %c0_126] : memref<128x512xbf16, #tpu.memory_space<vmem>>, vector<128x512xbf16>
    %cst_127 = arith.constant dense<0.000000e+00> : vector<8x512xf32>
    %400 = tpu.matmul %398, %399, %cst_127 {dimension_numbers = #tpu.dot_dimension_numbers<[1], [0], [0], [1], [0, 0, 1, 1], [], []>} : vector<8x128xbf16>, vector<128x512xbf16>, vector<8x512xf32> -> vector<8x512xf32>
    %401 = arith.addf %397, %400 : vector<8x512xf32>
    %402 = vector.extract_strided_slice %401 {offsets = [0, 0], sizes = [8, 128], strides = [1, 1]} : vector<8x512xf32> to vector<8x128xf32>
    %403 = arith.negf %402 : vector<8x128xf32>
    %404 = math.exp %403 : vector<8x128xf32>
    %cst_128 = arith.constant 1.000000e+00 : f32
    %405 = vector.broadcast %cst_128 : f32 to vector<8x128xf32>
    %406 = arith.addf %405, %404 : vector<8x128xf32>
    %407 = arith.divf %405, %406 : vector<8x128xf32>
    %408 = vector.extract_strided_slice %401 {offsets = [0, 128], sizes = [8, 128], strides = [1, 1]} : vector<8x512xf32> to vector<8x128xf32>
    %409 = arith.negf %408 : vector<8x128xf32>
    %410 = math.exp %409 : vector<8x128xf32>
    %cst_129 = arith.constant 1.000000e+00 : f32
    %411 = vector.broadcast %cst_129 : f32 to vector<8x128xf32>
    %412 = arith.addf %411, %410 : vector<8x128xf32>
    %413 = arith.divf %411, %412 : vector<8x128xf32>
    %414 = vector.extract_strided_slice %401 {offsets = [0, 256], sizes = [8, 128], strides = [1, 1]} : vector<8x512xf32> to vector<8x128xf32>
    %415 = math.tanh %414 : vector<8x128xf32>
    %416 = vector.extract_strided_slice %401 {offsets = [0, 384], sizes = [8, 128], strides = [1, 1]} : vector<8x512xf32> to vector<8x128xf32>
    %417 = arith.negf %416 : vector<8x128xf32>
    %418 = math.exp %417 : vector<8x128xf32>
    %cst_130 = arith.constant 1.000000e+00 : f32
    %419 = vector.broadcast %cst_130 : f32 to vector<8x128xf32>
    %420 = arith.addf %419, %418 : vector<8x128xf32>
    %421 = arith.divf %419, %420 : vector<8x128xf32>
    %422 = arith.mulf %413, %391 : vector<8x128xf32>
    %423 = arith.mulf %407, %415 : vector<8x128xf32>
    %424 = arith.addf %422, %423 : vector<8x128xf32>
    %425 = math.tanh %424 : vector<8x128xf32>
    %426 = arith.mulf %421, %425 : vector<8x128xf32>
    %c3_i32_131 = arith.constant 3 : i32
    %427 = arith.index_cast %c3_i32_131 : i32 to index
    %c0_132 = arith.constant 0 : index
    %c0_133 = arith.constant 0 : index
    %428 = vector.load %arg10[%427, %c0_132, %c0_133] : memref<8x8x512xbf16, #tpu.memory_space<vmem>>, vector<1x8x512xbf16>
    %429 = vector.shape_cast %428 : vector<1x8x512xbf16> to vector<8x512xbf16>
    %430 = arith.extf %429 : vector<8x512xbf16> to vector<8x512xf32>
    %431 = arith.truncf %426 : vector<8x128xf32> to vector<8x128xbf16>
    %c0_134 = arith.constant 0 : index
    %c0_135 = arith.constant 0 : index
    %432 = vector.load %arg5[%c0_134, %c0_135] : memref<128x512xbf16, #tpu.memory_space<vmem>>, vector<128x512xbf16>
    %cst_136 = arith.constant dense<0.000000e+00> : vector<8x512xf32>
    %433 = tpu.matmul %431, %432, %cst_136 {dimension_numbers = #tpu.dot_dimension_numbers<[1], [0], [0], [1], [0, 0, 1, 1], [], []>} : vector<8x128xbf16>, vector<128x512xbf16>, vector<8x512xf32> -> vector<8x512xf32>
    %434 = arith.addf %430, %433 : vector<8x512xf32>
    %435 = vector.extract_strided_slice %434 {offsets = [0, 0], sizes = [8, 128], strides = [1, 1]} : vector<8x512xf32> to vector<8x128xf32>
    %436 = arith.negf %435 : vector<8x128xf32>
    %437 = math.exp %436 : vector<8x128xf32>
    %cst_137 = arith.constant 1.000000e+00 : f32
    %438 = vector.broadcast %cst_137 : f32 to vector<8x128xf32>
    %439 = arith.addf %438, %437 : vector<8x128xf32>
    %440 = arith.divf %438, %439 : vector<8x128xf32>
    %441 = vector.extract_strided_slice %434 {offsets = [0, 128], sizes = [8, 128], strides = [1, 1]} : vector<8x512xf32> to vector<8x128xf32>
    %442 = arith.negf %441 : vector<8x128xf32>
    %443 = math.exp %442 : vector<8x128xf32>
    %cst_138 = arith.constant 1.000000e+00 : f32
    %444 = vector.broadcast %cst_138 : f32 to vector<8x128xf32>
    %445 = arith.addf %444, %443 : vector<8x128xf32>
    %446 = arith.divf %444, %445 : vector<8x128xf32>
    %447 = vector.extract_strided_slice %434 {offsets = [0, 256], sizes = [8, 128], strides = [1, 1]} : vector<8x512xf32> to vector<8x128xf32>
    %448 = math.tanh %447 : vector<8x128xf32>
    %449 = vector.extract_strided_slice %434 {offsets = [0, 384], sizes = [8, 128], strides = [1, 1]} : vector<8x512xf32> to vector<8x128xf32>
    %450 = arith.negf %449 : vector<8x128xf32>
    %451 = math.exp %450 : vector<8x128xf32>
    %cst_139 = arith.constant 1.000000e+00 : f32
    %452 = vector.broadcast %cst_139 : f32 to vector<8x128xf32>
    %453 = arith.addf %452, %451 : vector<8x128xf32>
    %454 = arith.divf %452, %453 : vector<8x128xf32>
    %455 = arith.mulf %446, %424 : vector<8x128xf32>
    %456 = arith.mulf %440, %448 : vector<8x128xf32>
    %457 = arith.addf %455, %456 : vector<8x128xf32>
    %458 = math.tanh %457 : vector<8x128xf32>
    %459 = arith.mulf %454, %458 : vector<8x128xf32>
    %c4_i32_140 = arith.constant 4 : i32
    %460 = arith.index_cast %c4_i32_140 : i32 to index
    %c0_141 = arith.constant 0 : index
    %c0_142 = arith.constant 0 : index
    %461 = vector.load %arg10[%460, %c0_141, %c0_142] : memref<8x8x512xbf16, #tpu.memory_space<vmem>>, vector<1x8x512xbf16>
    %462 = vector.shape_cast %461 : vector<1x8x512xbf16> to vector<8x512xbf16>
    %463 = arith.extf %462 : vector<8x512xbf16> to vector<8x512xf32>
    %464 = arith.truncf %459 : vector<8x128xf32> to vector<8x128xbf16>
    %c0_143 = arith.constant 0 : index
    %c0_144 = arith.constant 0 : index
    %465 = vector.load %arg5[%c0_143, %c0_144] : memref<128x512xbf16, #tpu.memory_space<vmem>>, vector<128x512xbf16>
    %cst_145 = arith.constant dense<0.000000e+00> : vector<8x512xf32>
    %466 = tpu.matmul %464, %465, %cst_145 {dimension_numbers = #tpu.dot_dimension_numbers<[1], [0], [0], [1], [0, 0, 1, 1], [], []>} : vector<8x128xbf16>, vector<128x512xbf16>, vector<8x512xf32> -> vector<8x512xf32>
    %467 = arith.addf %463, %466 : vector<8x512xf32>
    %468 = vector.extract_strided_slice %467 {offsets = [0, 0], sizes = [8, 128], strides = [1, 1]} : vector<8x512xf32> to vector<8x128xf32>
    %469 = arith.negf %468 : vector<8x128xf32>
    %470 = math.exp %469 : vector<8x128xf32>
    %cst_146 = arith.constant 1.000000e+00 : f32
    %471 = vector.broadcast %cst_146 : f32 to vector<8x128xf32>
    %472 = arith.addf %471, %470 : vector<8x128xf32>
    %473 = arith.divf %471, %472 : vector<8x128xf32>
    %474 = vector.extract_strided_slice %467 {offsets = [0, 128], sizes = [8, 128], strides = [1, 1]} : vector<8x512xf32> to vector<8x128xf32>
    %475 = arith.negf %474 : vector<8x128xf32>
    %476 = math.exp %475 : vector<8x128xf32>
    %cst_147 = arith.constant 1.000000e+00 : f32
    %477 = vector.broadcast %cst_147 : f32 to vector<8x128xf32>
    %478 = arith.addf %477, %476 : vector<8x128xf32>
    %479 = arith.divf %477, %478 : vector<8x128xf32>
    %480 = vector.extract_strided_slice %467 {offsets = [0, 256], sizes = [8, 128], strides = [1, 1]} : vector<8x512xf32> to vector<8x128xf32>
    %481 = math.tanh %480 : vector<8x128xf32>
    %482 = vector.extract_strided_slice %467 {offsets = [0, 384], sizes = [8, 128], strides = [1, 1]} : vector<8x512xf32> to vector<8x128xf32>
    %483 = arith.negf %482 : vector<8x128xf32>
    %484 = math.exp %483 : vector<8x128xf32>
    %cst_148 = arith.constant 1.000000e+00 : f32
    %485 = vector.broadcast %cst_148 : f32 to vector<8x128xf32>
    %486 = arith.addf %485, %484 : vector<8x128xf32>
    %487 = arith.divf %485, %486 : vector<8x128xf32>
    %488 = arith.mulf %479, %457 : vector<8x128xf32>
    %489 = arith.mulf %473, %481 : vector<8x128xf32>
    %490 = arith.addf %488, %489 : vector<8x128xf32>
    %491 = math.tanh %490 : vector<8x128xf32>
    %492 = arith.mulf %487, %491 : vector<8x128xf32>
    %c5_i32_149 = arith.constant 5 : i32
    %493 = arith.index_cast %c5_i32_149 : i32 to index
    %c0_150 = arith.constant 0 : index
    %c0_151 = arith.constant 0 : index
    %494 = vector.load %arg10[%493, %c0_150, %c0_151] : memref<8x8x512xbf16, #tpu.memory_space<vmem>>, vector<1x8x512xbf16>
    %495 = vector.shape_cast %494 : vector<1x8x512xbf16> to vector<8x512xbf16>
    %496 = arith.extf %495 : vector<8x512xbf16> to vector<8x512xf32>
    %497 = arith.truncf %492 : vector<8x128xf32> to vector<8x128xbf16>
    %c0_152 = arith.constant 0 : index
    %c0_153 = arith.constant 0 : index
    %498 = vector.load %arg5[%c0_152, %c0_153] : memref<128x512xbf16, #tpu.memory_space<vmem>>, vector<128x512xbf16>
    %cst_154 = arith.constant dense<0.000000e+00> : vector<8x512xf32>
    %499 = tpu.matmul %497, %498, %cst_154 {dimension_numbers = #tpu.dot_dimension_numbers<[1], [0], [0], [1], [0, 0, 1, 1], [], []>} : vector<8x128xbf16>, vector<128x512xbf16>, vector<8x512xf32> -> vector<8x512xf32>
    %500 = arith.addf %496, %499 : vector<8x512xf32>
    %501 = vector.extract_strided_slice %500 {offsets = [0, 0], sizes = [8, 128], strides = [1, 1]} : vector<8x512xf32> to vector<8x128xf32>
    %502 = arith.negf %501 : vector<8x128xf32>
    %503 = math.exp %502 : vector<8x128xf32>
    %cst_155 = arith.constant 1.000000e+00 : f32
    %504 = vector.broadcast %cst_155 : f32 to vector<8x128xf32>
    %505 = arith.addf %504, %503 : vector<8x128xf32>
    %506 = arith.divf %504, %505 : vector<8x128xf32>
    %507 = vector.extract_strided_slice %500 {offsets = [0, 128], sizes = [8, 128], strides = [1, 1]} : vector<8x512xf32> to vector<8x128xf32>
    %508 = arith.negf %507 : vector<8x128xf32>
    %509 = math.exp %508 : vector<8x128xf32>
    %cst_156 = arith.constant 1.000000e+00 : f32
    %510 = vector.broadcast %cst_156 : f32 to vector<8x128xf32>
    %511 = arith.addf %510, %509 : vector<8x128xf32>
    %512 = arith.divf %510, %511 : vector<8x128xf32>
    %513 = vector.extract_strided_slice %500 {offsets = [0, 256], sizes = [8, 128], strides = [1, 1]} : vector<8x512xf32> to vector<8x128xf32>
    %514 = math.tanh %513 : vector<8x128xf32>
    %515 = vector.extract_strided_slice %500 {offsets = [0, 384], sizes = [8, 128], strides = [1, 1]} : vector<8x512xf32> to vector<8x128xf32>
    %516 = arith.negf %515 : vector<8x128xf32>
    %517 = math.exp %516 : vector<8x128xf32>
    %cst_157 = arith.constant 1.000000e+00 : f32
    %518 = vector.broadcast %cst_157 : f32 to vector<8x128xf32>
    %519 = arith.addf %518, %517 : vector<8x128xf32>
    %520 = arith.divf %518, %519 : vector<8x128xf32>
    %521 = arith.mulf %512, %490 : vector<8x128xf32>
    %522 = arith.mulf %506, %514 : vector<8x128xf32>
    %523 = arith.addf %521, %522 : vector<8x128xf32>
    %524 = math.tanh %523 : vector<8x128xf32>
    %525 = arith.mulf %520, %524 : vector<8x128xf32>
    %c6_i32_158 = arith.constant 6 : i32
    %526 = arith.index_cast %c6_i32_158 : i32 to index
    %c0_159 = arith.constant 0 : index
    %c0_160 = arith.constant 0 : index
    %527 = vector.load %arg10[%526, %c0_159, %c0_160] : memref<8x8x512xbf16, #tpu.memory_space<vmem>>, vector<1x8x512xbf16>
    %528 = vector.shape_cast %527 : vector<1x8x512xbf16> to vector<8x512xbf16>
    %529 = arith.extf %528 : vector<8x512xbf16> to vector<8x512xf32>
    %530 = arith.truncf %525 : vector<8x128xf32> to vector<8x128xbf16>
    %c0_161 = arith.constant 0 : index
    %c0_162 = arith.constant 0 : index
    %531 = vector.load %arg5[%c0_161, %c0_162] : memref<128x512xbf16, #tpu.memory_space<vmem>>, vector<128x512xbf16>
    %cst_163 = arith.constant dense<0.000000e+00> : vector<8x512xf32>
    %532 = tpu.matmul %530, %531, %cst_163 {dimension_numbers = #tpu.dot_dimension_numbers<[1], [0], [0], [1], [0, 0, 1, 1], [], []>} : vector<8x128xbf16>, vector<128x512xbf16>, vector<8x512xf32> -> vector<8x512xf32>
    %533 = arith.addf %529, %532 : vector<8x512xf32>
    %534 = vector.extract_strided_slice %533 {offsets = [0, 0], sizes = [8, 128], strides = [1, 1]} : vector<8x512xf32> to vector<8x128xf32>
    %535 = arith.negf %534 : vector<8x128xf32>
    %536 = math.exp %535 : vector<8x128xf32>
    %cst_164 = arith.constant 1.000000e+00 : f32
    %537 = vector.broadcast %cst_164 : f32 to vector<8x128xf32>
    %538 = arith.addf %537, %536 : vector<8x128xf32>
    %539 = arith.divf %537, %538 : vector<8x128xf32>
    %540 = vector.extract_strided_slice %533 {offsets = [0, 128], sizes = [8, 128], strides = [1, 1]} : vector<8x512xf32> to vector<8x128xf32>
    %541 = arith.negf %540 : vector<8x128xf32>
    %542 = math.exp %541 : vector<8x128xf32>
    %cst_165 = arith.constant 1.000000e+00 : f32
    %543 = vector.broadcast %cst_165 : f32 to vector<8x128xf32>
    %544 = arith.addf %543, %542 : vector<8x128xf32>
    %545 = arith.divf %543, %544 : vector<8x128xf32>
    %546 = vector.extract_strided_slice %533 {offsets = [0, 256], sizes = [8, 128], strides = [1, 1]} : vector<8x512xf32> to vector<8x128xf32>
    %547 = math.tanh %546 : vector<8x128xf32>
    %548 = vector.extract_strided_slice %533 {offsets = [0, 384], sizes = [8, 128], strides = [1, 1]} : vector<8x512xf32> to vector<8x128xf32>
    %549 = arith.negf %548 : vector<8x128xf32>
    %550 = math.exp %549 : vector<8x128xf32>
    %cst_166 = arith.constant 1.000000e+00 : f32
    %551 = vector.broadcast %cst_166 : f32 to vector<8x128xf32>
    %552 = arith.addf %551, %550 : vector<8x128xf32>
    %553 = arith.divf %551, %552 : vector<8x128xf32>
    %554 = arith.mulf %545, %523 : vector<8x128xf32>
    %555 = arith.mulf %539, %547 : vector<8x128xf32>
    %556 = arith.addf %554, %555 : vector<8x128xf32>
    %557 = math.tanh %556 : vector<8x128xf32>
    %558 = arith.mulf %553, %557 : vector<8x128xf32>
    %c7_i32_167 = arith.constant 7 : i32
    %559 = arith.index_cast %c7_i32_167 : i32 to index
    %c0_168 = arith.constant 0 : index
    %c0_169 = arith.constant 0 : index
    %560 = vector.load %arg10[%559, %c0_168, %c0_169] : memref<8x8x512xbf16, #tpu.memory_space<vmem>>, vector<1x8x512xbf16>
    %561 = vector.shape_cast %560 : vector<1x8x512xbf16> to vector<8x512xbf16>
    %562 = arith.extf %561 : vector<8x512xbf16> to vector<8x512xf32>
    %563 = arith.truncf %558 : vector<8x128xf32> to vector<8x128xbf16>
    %c0_170 = arith.constant 0 : index
    %c0_171 = arith.constant 0 : index
    %564 = vector.load %arg5[%c0_170, %c0_171] : memref<128x512xbf16, #tpu.memory_space<vmem>>, vector<128x512xbf16>
    %cst_172 = arith.constant dense<0.000000e+00> : vector<8x512xf32>
    %565 = tpu.matmul %563, %564, %cst_172 {dimension_numbers = #tpu.dot_dimension_numbers<[1], [0], [0], [1], [0, 0, 1, 1], [], []>} : vector<8x128xbf16>, vector<128x512xbf16>, vector<8x512xf32> -> vector<8x512xf32>
    %566 = arith.addf %562, %565 : vector<8x512xf32>
    %567 = vector.extract_strided_slice %566 {offsets = [0, 0], sizes = [8, 128], strides = [1, 1]} : vector<8x512xf32> to vector<8x128xf32>
    %568 = arith.negf %567 : vector<8x128xf32>
    %569 = math.exp %568 : vector<8x128xf32>
    %cst_173 = arith.constant 1.000000e+00 : f32
    %570 = vector.broadcast %cst_173 : f32 to vector<8x128xf32>
    %571 = arith.addf %570, %569 : vector<8x128xf32>
    %572 = arith.divf %570, %571 : vector<8x128xf32>
    %573 = vector.extract_strided_slice %566 {offsets = [0, 128], sizes = [8, 128], strides = [1, 1]} : vector<8x512xf32> to vector<8x128xf32>
    %574 = arith.negf %573 : vector<8x128xf32>
    %575 = math.exp %574 : vector<8x128xf32>
    %cst_174 = arith.constant 1.000000e+00 : f32
    %576 = vector.broadcast %cst_174 : f32 to vector<8x128xf32>
    %577 = arith.addf %576, %575 : vector<8x128xf32>
    %578 = arith.divf %576, %577 : vector<8x128xf32>
    %579 = vector.extract_strided_slice %566 {offsets = [0, 256], sizes = [8, 128], strides = [1, 1]} : vector<8x512xf32> to vector<8x128xf32>
    %580 = math.tanh %579 : vector<8x128xf32>
    %581 = vector.extract_strided_slice %566 {offsets = [0, 384], sizes = [8, 128], strides = [1, 1]} : vector<8x512xf32> to vector<8x128xf32>
    %582 = arith.negf %581 : vector<8x128xf32>
    %583 = math.exp %582 : vector<8x128xf32>
    %cst_175 = arith.constant 1.000000e+00 : f32
    %584 = vector.broadcast %cst_175 : f32 to vector<8x128xf32>
    %585 = arith.addf %584, %583 : vector<8x128xf32>
    %586 = arith.divf %584, %585 : vector<8x128xf32>
    %587 = arith.mulf %578, %556 : vector<8x128xf32>
    %588 = arith.mulf %572, %580 : vector<8x128xf32>
    %589 = arith.addf %587, %588 : vector<8x128xf32>
    %590 = math.tanh %589 : vector<8x128xf32>
    %591 = arith.mulf %586, %590 : vector<8x128xf32>
    %c8_i32_176 = arith.constant 8 : i32
    %592 = arith.truncf %591 : vector<8x128xf32> to vector<8x128xbf16>
    %c0_177 = arith.constant 0 : index
    %c0_178 = arith.constant 0 : index
    %593 = vector.load %arg7[%c0_177, %c0_178] : memref<128x128xbf16, #tpu.memory_space<vmem>>, vector<128x128xbf16>
    %cst_179 = arith.constant dense<0.000000e+00> : vector<8x128xf32>
    %594 = tpu.matmul %592, %593, %cst_179 {dimension_numbers = #tpu.dot_dimension_numbers<[1], [0], [0], [1], [0, 0, 1, 1], [], []>} : vector<8x128xbf16>, vector<128x128xbf16>, vector<8x128xf32> -> vector<8x128xf32>
    %c0_180 = arith.constant 0 : index
    %c0_181 = arith.constant 0 : index
    %595 = vector.load %arg8[%c0_180, %c0_181] : memref<1x128xf32, #tpu.memory_space<vmem>>, vector<1x128xf32>
    %596 = vector.broadcast %595 : vector<1x128xf32> to vector<8x128xf32>
    %597 = arith.addf %594, %596 : vector<8x128xf32>
    %c0_182 = arith.constant 0 : index
    %c0_183 = arith.constant 0 : index
    %598 = vector.load %arg9[%c0_182, %c0_183] : memref<8x128xf32, #tpu.memory_space<vmem>>, vector<8x128xf32>
    tpu.vector_store %arg9[%c0_182, %c0_183], %597 {strides = array<i32>} : memref<8x128xf32, #tpu.memory_space<vmem>>, vector<8x128xf32>,
    return
  }
}

</mosaic_0001>

<llo_original>
// kernel: lstm_classifier_forward.1
$region0: #{lstm_classifier_forward.1}
  #allocation0 [shape = 'u32[]', space=smem, size = 0x4, offset = 0x4, fixed_abs, tag = 'smem constant byte address 0x4 - core index']
  #allocation1 [shape = 'u32[144,128]{1,0:T(1,128)}', space=vmem, size = 0x12000, scoped, tag = 'internal scratch']
  #allocation2 [shape = 'bf16[8,8,512]{2,1,0:T(8,128)(2,1)}', space=vmem, size = 0x10000, scoped, tag = 'scratch operand']
  #allocation3 [shape = 'bf16[8,8,128]{2,1,0:T(8,128)(2,1)}', space=vmem, size = 0x4000, scoped, tag = 'scratch operand']
  %s0 = inlined_call_operand.vmem [shape: bf16[8,8,128], index: 0, kind: input, shape index: {}]
  %s1 = inlined_call_operand.vmem [shape: bf16[128,512], index: 1, kind: input, shape index: {}]
  %s2 = inlined_call_operand.vmem [shape: bf16[128,512], index: 2, kind: input, shape index: {}]
  %s3 = inlined_call_operand.vmem [shape: f32[1,512], index: 3, kind: input, shape index: {}]
  %s4 = inlined_call_operand.vmem [shape: bf16[128,512], index: 4, kind: input, shape index: {}]
  %s5 = inlined_call_operand.vmem [shape: bf16[128,512], index: 5, kind: input, shape index: {}]
  %s6 = inlined_call_operand.vmem [shape: f32[1,512], index: 6, kind: input, shape index: {}]
  %s7 = inlined_call_operand.vmem [shape: bf16[128,128], index: 7, kind: input, shape index: {}]
  %s8 = inlined_call_operand.vmem [shape: f32[1,128], index: 8, kind: input, shape index: {}]
  %s9 = inlined_call_operand.vmem [shape: f32[8,128], index: 9, kind: output, shape index: {}]
  %s10 = sld [smem:[#allocation0]]
  $region46: #{lstm_classifier_forward.1} parent=0
    _
  %s12 = ssub.s32 1, %s10
  %s13 = scalar_select 0, %s12, %s10
  // Predicated region
  $region2: #{lstm_classifier_forward.1} parent=0 // pred_check
    _
  $region3: #{lstm_classifier_forward.1} parent=0 // pred_check_branch
    %15 = sbr.rel (0) target = $region5
  $region4: #{lstm_classifier_forward.1} parent=0 // pred_region
    _
  $region5: #{lstm_classifier_forward.1} parent=0 // pred_fallthru
    _
  // Predicated region
  $region6: #{lstm_classifier_forward.1} parent=0 // pred_check
    _
  $region7: #{lstm_classifier_forward.1} parent=0 // pred_check_branch
    %17 = sbr.rel (0) target = $region9
  $region8: #{lstm_classifier_forward.1} parent=0 // pred_region
    _
  $region9: #{lstm_classifier_forward.1} parent=0 // pred_fallthru
    _
  // Predicated region
  $region10: #{lstm_classifier_forward.1} parent=0 // pred_check
    _
  $region11: #{lstm_classifier_forward.1} parent=0 // pred_check_branch
    %19 = sbr.rel (0) target = $region13
  $region12: #{lstm_classifier_forward.1} parent=0 // pred_region
    _
  $region13: #{lstm_classifier_forward.1} parent=0 // pred_fallthru
    _
  // Predicated region
  $region14: #{lstm_classifier_forward.1} parent=0 // pred_check
    _
  $region15: #{lstm_classifier_forward.1} parent=0 // pred_check_branch
    %21 = sbr.rel (0) target = $region17
  $region16: #{lstm_classifier_forward.1} parent=0 // pred_region
    _
  $region17: #{lstm_classifier_forward.1} parent=0 // pred_fallthru
    _
  // Predicated region
  $region18: #{lstm_classifier_forward.1} parent=0 // pred_check
    _
  $region19: #{lstm_classifier_forward.1} parent=0 // pred_check_branch
    %23 = sbr.rel (0) target = $region21
  $region20: #{lstm_classifier_forward.1} parent=0 // pred_region
    _
  $region21: #{lstm_classifier_forward.1} parent=0 // pred_fallthru
    _
  // Predicated region
  $region22: #{lstm_classifier_forward.1} parent=0 // pred_check
    _
  $region23: #{lstm_classifier_forward.1} parent=0 // pred_check_branch
    %25 = sbr.rel (0) target = $region25
  $region24: #{lstm_classifier_forward.1} parent=0 // pred_region
    _
  $region25: #{lstm_classifier_forward.1} parent=0 // pred_fallthru
    _
  // Predicated region
  $region26: #{lstm_classifier_forward.1} parent=0 // pred_check
    _
  $region27: #{lstm_classifier_forward.1} parent=0 // pred_check_branch
    %27 = sbr.rel (0) target = $region29
  $region28: #{lstm_classifier_forward.1} parent=0 // pred_region
    _
  $region29: #{lstm_classifier_forward.1} parent=0 // pred_fallthru
    _
  // Predicated region
  $region30: #{lstm_classifier_forward.1} parent=0 // pred_check
    _
  $region31: #{lstm_classifier_forward.1} parent=0 // pred_check_branch
    %29 = sbr.rel (0) target = $region33
  $region32: #{lstm_classifier_forward.1} parent=0 // pred_region
    _
  $region33: #{lstm_classifier_forward.1} parent=0 // pred_fallthru
    _
  // Predicated region
  $region34: #{lstm_classifier_forward.1} parent=0 // pred_check
    _
  $region35: #{lstm_classifier_forward.1} parent=0 // pred_check_branch
    %31 = sbr.rel (0) target = $region37
  $region36: #{lstm_classifier_forward.1} parent=0 // pred_region
    _
  $region37: #{lstm_classifier_forward.1} parent=0 // pred_fallthru
    _
  %v33 = vld [vmem:[%s3] sm:$0xf]
  %v34 = vld [vmem:[%s0] sm:$0xf]
  %v35 = vld [vmem:[%s0 + $0x4] sm:$0xf]
  %v36 = vld [vmem:[%s0 + $0x8] sm:$0xf]
  %v37 = vld [vmem:[%s0 + $0xc] sm:$0xf]
  %v38 = vld [vmem:[%s0 + $0x10] sm:$0xf]
  %v39 = vld [vmem:[%s0 + $0x14] sm:$0xf]
  %v40 = vld [vmem:[%s0 + $0x18] sm:$0xf]
  %v41 = vld [vmem:[%s0 + $0x1c] sm:$0xf]
  %v42 = vld [vmem:[%s1] sm:$0xff]
  %v43 = vld [vmem:[%s1 + $0x8] sm:$0xff]
  %v44 = vld [vmem:[%s1 + $0x10] sm:$0xff]
  %v45 = vld [vmem:[%s1 + $0x18] sm:$0xff]
  %v46 = vld [vmem:[%s1 + $0x20] sm:$0xff]
  %v47 = vld [vmem:[%s1 + $0x28] sm:$0xff]
  %v48 = vld [vmem:[%s1 + $0x30] sm:$0xff]
  %v49 = vld [vmem:[%s1 + $0x38] sm:$0xff]
  %v50 = vld [vmem:[%s1 + $0x40] sm:$0xff]
  %v51 = vld [vmem:[%s1 + $0x48] sm:$0xff]
  %v52 = vld [vmem:[%s1 + $0x50] sm:$0xff]
  %v53 = vld [vmem:[%s1 + $0x58] sm:$0xff]
  %v54 = vld [vmem:[%s1 + $0x60] sm:$0xff]
  %v55 = vld [vmem:[%s1 + $0x68] sm:$0xff]
  %v56 = vld [vmem:[%s1 + $0x70] sm:$0xff]
  %v57 = vld [vmem:[%s1 + $0x78] sm:$0xff]
  %v58 = vld [vmem:[%s1 + $0x80] sm:$0xff]
  %v59 = vld [vmem:[%s1 + $0x88] sm:$0xff]
  %v60 = vld [vmem:[%s1 + $0x90] sm:$0xff]
  %v61 = vld [vmem:[%s1 + $0x98] sm:$0xff]
  %v62 = vld [vmem:[%s1 + $0xa0] sm:$0xff]
  %v63 = vld [vmem:[%s1 + $0xa8] sm:$0xff]
  %v64 = vld [vmem:[%s1 + $0xb0] sm:$0xff]
  %v65 = vld [vmem:[%s1 + $0xb8] sm:$0xff]
  %v66 = vld [vmem:[%s1 + $0xc0] sm:$0xff]
  %v67 = vld [vmem:[%s1 + $0xc8] sm:$0xff]
  %v68 = vld [vmem:[%s1 + $0xd0] sm:$0xff]
  %v69 = vld [vmem:[%s1 + $0xd8] sm:$0xff]
  %v70 = vld [vmem:[%s1 + $0xe0] sm:$0xff]
  %v71 = vld [vmem:[%s1 + $0xe8] sm:$0xff]
  %v72 = vld [vmem:[%s1 + $0xf0] sm:$0xff]
  %v73 = vld [vmem:[%s1 + $0xf8] sm:$0xff]
  %v75 = vlaneseq
  %v76 = vshrl.u32 %v75, 7
  %v77 = vsub.s32 0, %v76
  %v78 = vrot.slane %v33, %v77
  %v79 = vlaneseq
  %v80 = vshrl.u32 %v79, 7
  %v81 = vsub.s32 1, %v80
  %v82 = vrot.slane %v33, %v81
  %v83 = vlaneseq
  %v84 = vshrl.u32 %v83, 7
  %v85 = vsub.s32 2, %v84
  %v86 = vrot.slane %v33, %v85
  %v87 = vlaneseq
  %v88 = vshrl.u32 %v87, 7
  %v89 = vsub.s32 3, %v88
  %v90 = vrot.slane %v33, %v89
  %v103 = vunpack.c.l.b16 %v34
  %v104 = vunpack.c.l.b16 %v35
  %v105 = vunpack.c.l.b16 %v36
  %v106 = vunpack.c.l.b16 %v37
  %v107 = vunpack.c.l.b16 %v38
  %v108 = vunpack.c.l.b16 %v39
  %v109 = vunpack.c.l.b16 %v40
  %v110 = vunpack.c.l.b16 %v41
  %v111 = vpack.c.b16 %v104, %v103
  %v112 = vpack.c.b16 %v106, %v105
  %v113 = vpack.c.b16 %v108, %v107
  %v114 = vpack.c.b16 %v110, %v109
  %v151 = vunpack.c.l.b16 %v42
  %v152 = vunpack.c.h.b16 %v42
  %v153 = vunpack.c.l.b16 %v43
  %v154 = vunpack.c.h.b16 %v43
  %v155 = vunpack.c.l.b16 %v44
  %v156 = vunpack.c.h.b16 %v44
  %v157 = vunpack.c.l.b16 %v45
  %v158 = vunpack.c.h.b16 %v45
  %v159 = vunpack.c.l.b16 %v46
  %v160 = vunpack.c.h.b16 %v46
  %v161 = vunpack.c.l.b16 %v47
  %v162 = vunpack.c.h.b16 %v47
  %v163 = vunpack.c.l.b16 %v48
  %v164 = vunpack.c.h.b16 %v48
  %v165 = vunpack.c.l.b16 %v49
  %v166 = vunpack.c.h.b16 %v49
  %v167 = vunpack.c.l.b16 %v50
  %v168 = vunpack.c.h.b16 %v50
  %v169 = vunpack.c.l.b16 %v51
  %v170 = vunpack.c.h.b16 %v51
  %v171 = vunpack.c.l.b16 %v52
  %v172 = vunpack.c.h.b16 %v52
  %v173 = vunpack.c.l.b16 %v53
  %v174 = vunpack.c.h.b16 %v53
  %v175 = vunpack.c.l.b16 %v54
  %v176 = vunpack.c.h.b16 %v54
  %v177 = vunpack.c.l.b16 %v55
  %v178 = vunpack.c.h.b16 %v55
  %v179 = vunpack.c.l.b16 %v56
  %v180 = vunpack.c.h.b16 %v56
  %v181 = vunpack.c.l.b16 %v57
  %v182 = vunpack.c.h.b16 %v57
  %v183 = vunpack.c.l.b16 %v58
  %v184 = vunpack.c.h.b16 %v58
  %v185 = vunpack.c.l.b16 %v59
  %v186 = vunpack.c.h.b16 %v59
  %v187 = vunpack.c.l.b16 %v60
  %v188 = vunpack.c.h.b16 %v60
  %v189 = vunpack.c.l.b16 %v61
  %v190 = vunpack.c.h.b16 %v61
  %v191 = vunpack.c.l.b16 %v62
  %v192 = vunpack.c.h.b16 %v62
  %v193 = vunpack.c.l.b16 %v63
  %v194 = vunpack.c.h.b16 %v63
  %v195 = vunpack.c.l.b16 %v64
  %v196 = vunpack.c.h.b16 %v64
  %v197 = vunpack.c.l.b16 %v65
  %v198 = vunpack.c.h.b16 %v65
  %v199 = vunpack.c.l.b16 %v66
  %v200 = vunpack.c.h.b16 %v66
  %v201 = vunpack.c.l.b16 %v67
  %v202 = vunpack.c.h.b16 %v67
  %v203 = vunpack.c.l.b16 %v68
  %v204 = vunpack.c.h.b16 %v68
  %v205 = vunpack.c.l.b16 %v69
  %v206 = vunpack.c.h.b16 %v69
  %v207 = vunpack.c.l.b16 %v70
  %v208 = vunpack.c.h.b16 %v70
  %v209 = vunpack.c.l.b16 %v71
  %v210 = vunpack.c.h.b16 %v71
  %v211 = vunpack.c.l.b16 %v72
  %v212 = vunpack.c.h.b16 %v72
  %v213 = vunpack.c.l.b16 %v73
  %v214 = vunpack.c.h.b16 %v73
  %v215 = vpack.c.b16 %v155, %v151
  %v216 = vpack.c.b16 %v156, %v152
  %v217 = vpack.c.b16 %v157, %v153
  %v218 = vpack.c.b16 %v158, %v154
  %v219 = vpack.c.b16 %v163, %v159
  %v220 = vpack.c.b16 %v164, %v160
  %v221 = vpack.c.b16 %v165, %v161
  %v222 = vpack.c.b16 %v166, %v162
  %v223 = vpack.c.b16 %v171, %v167
  %v224 = vpack.c.b16 %v172, %v168
  %v225 = vpack.c.b16 %v173, %v169
  %v226 = vpack.c.b16 %v174, %v170
  %v227 = vpack.c.b16 %v179, %v175
  %v228 = vpack.c.b16 %v180, %v176
  %v229 = vpack.c.b16 %v181, %v177
  %v230 = vpack.c.b16 %v182, %v178
  %v231 = vpack.c.b16 %v187, %v183
  %v232 = vpack.c.b16 %v188, %v184
  %v233 = vpack.c.b16 %v189, %v185
  %v234 = vpack.c.b16 %v190, %v186
  %v235 = vpack.c.b16 %v195, %v191
  %v236 = vpack.c.b16 %v196, %v192
  %v237 = vpack.c.b16 %v197, %v193
  %v238 = vpack.c.b16 %v198, %v194
  %v239 = vpack.c.b16 %v203, %v199
  %v240 = vpack.c.b16 %v204, %v200
  %v241 = vpack.c.b16 %v205, %v201
  %v242 = vpack.c.b16 %v206, %v202
  %v243 = vpack.c.b16 %v211, %v207
  %v244 = vpack.c.b16 %v212, %v208
  %v245 = vpack.c.b16 %v213, %v209
  %v246 = vpack.c.b16 %v214, %v210
  %279 = vmatprep.subr.bf16.mxu0 %v216
  %280 = vmatpush1.bf16.msra.mxu0 %v215
  %281 = vmatprep.subr.bf16.mxu0 %v220
  %282 = vmatpush1.bf16.msra.mxu0 %v219
  %283 = vmatprep.subr.bf16.mxu0 %v224
  %284 = vmatpush1.bf16.msra.mxu0 %v223
  %285 = vmatprep.subr.bf16.mxu0 %v228
  %286 = vmatpush1.bf16.msra.mxu0 %v227
  %287 = vmatprep.subr.bf16.mxu0 %v232
  %288 = vmatpush1.bf16.msra.mxu0 %v231
  %289 = vmatprep.subr.bf16.mxu0 %v236
  %290 = vmatpush1.bf16.msra.mxu0 %v235
  %291 = vmatprep.subr.bf16.mxu0 %v240
  %292 = vmatpush1.bf16.msra.mxu0 %v239
  %293 = vmatprep.subr.bf16.mxu0 %v244
  %294 = vmatpush1.bf16.msra.mxu0 %v243
  %295 = vmatprep.subr.bf16.mxu0 0
  %296 = vmatpush1.bf16.msra.mxu0 0
  %297 = vmatprep.subr.bf16.mxu0 0
  %298 = vmatpush1.bf16.msra.mxu0 0
  %299 = vmatprep.subr.bf16.mxu0 0
  %300 = vmatpush1.bf16.msra.mxu0 0
  %301 = vmatprep.subr.bf16.mxu0 0
  %302 = vmatpush1.bf16.msra.mxu0 0
  %303 = vmatprep.subr.bf16.mxu0 0
  %304 = vmatpush1.bf16.msra.mxu0 0
  %305 = vmatprep.subr.bf16.mxu0 0
  %306 = vmatpush1.bf16.msra.mxu0 0
  %307 = vmatprep.subr.bf16.mxu0 0
  %308 = vmatpush1.bf16.msra.mxu0 0
  %309 = vmatprep.subr.bf16.mxu0 0
  %310 = vmatpush1.bf16.msra.mxu0 0
  %311 = vmatprep.mubr.bf16.mxu0 0
  %312 = vmatmul.mubr.bf16.gmra.mrb[0].mxu0 %v111
  %v313 = vpop.f32.mrb[0].mxu0
  %v314 = vadd.f32 %v78, %v313
  %v315 = vpop.f32.mrb[0].mxu0
  %v316 = vadd.f32 %v82, %v315
  %v317 = vpop.f32.mrb[0].mxu0
  %v318 = vadd.f32 %v78, %v317
  %v319 = vpop.f32.mrb[0].mxu0
  %v320 = vadd.f32 %v82, %v319
  %321 = vmatprep.mubr.bf16.mxu0 0
  %322 = vmatmul.mubr.bf16.gmra.mrb[0].mxu0 %v112
  %v323 = vpop.f32.mrb[0].mxu0
  %v324 = vadd.f32 %v78, %v323
  %v325 = vpop.f32.mrb[0].mxu0
  %v326 = vadd.f32 %v82, %v325
  %v327 = vpop.f32.mrb[0].mxu0
  %v328 = vadd.f32 %v78, %v327
  %v329 = vpop.f32.mrb[0].mxu0
  %v330 = vadd.f32 %v82, %v329
  %331 = vmatprep.mubr.bf16.mxu0 0
  %332 = vmatmul.mubr.bf16.gmra.mrb[0].mxu0 %v113
  %v333 = vpop.f32.mrb[0].mxu0
  %v334 = vadd.f32 %v78, %v333
  %v335 = vpop.f32.mrb[0].mxu0
  %v336 = vadd.f32 %v82, %v335
  %v337 = vpop.f32.mrb[0].mxu0
  %v338 = vadd.f32 %v78, %v337
  %v339 = vpop.f32.mrb[0].mxu0
  %v340 = vadd.f32 %v82, %v339
  %341 = vmatprep.mubr.bf16.mxu0 0
  %342 = vmatmul.mubr.bf16.gmra.mrb[0].mxu0 %v114
  %v343 = vpop.f32.mrb[0].mxu0
  %v344 = vadd.f32 %v78, %v343
  %v345 = vpop.f32.mrb[0].mxu0
  %v346 = vadd.f32 %v82, %v345
  %v347 = vpop.f32.mrb[0].mxu0
  %v348 = vadd.f32 %v78, %v347
  %v349 = vpop.f32.mrb[0].mxu0
  %v350 = vadd.f32 %v82, %v349
  %351 = vdwg.mxu0
  %352 = vmatprep.subr.bf16.mxu0 %v218
  %353 = vmatpush1.bf16.msra.mxu0 %v217
  %354 = vmatprep.subr.bf16.mxu0 %v222
  %355 = vmatpush1.bf16.msra.mxu0 %v221
  %356 = vmatprep.subr.bf16.mxu0 %v226
  %357 = vmatpush1.bf16.msra.mxu0 %v225
  %358 = vmatprep.subr.bf16.mxu0 %v230
  %359 = vmatpush1.bf16.msra.mxu0 %v229
  %360 = vmatprep.subr.bf16.mxu0 %v234
  %361 = vmatpush1.bf16.msra.mxu0 %v233
  %362 = vmatprep.subr.bf16.mxu0 %v238
  %363 = vmatpush1.bf16.msra.mxu0 %v237
  %364 = vmatprep.subr.bf16.mxu0 %v242
  %365 = vmatpush1.bf16.msra.mxu0 %v241
  %366 = vmatprep.subr.bf16.mxu0 %v246
  %367 = vmatpush1.bf16.msra.mxu0 %v245
  %368 = vmatprep.subr.bf16.mxu0 0
  %369 = vmatpush1.bf16.msra.mxu0 0
  %370 = vmatprep.subr.bf16.mxu0 0
  %371 = vmatpush1.bf16.msra.mxu0 0
  %372 = vmatprep.subr.bf16.mxu0 0
  %373 = vmatpush1.bf16.msra.mxu0 0
  %374 = vmatprep.subr.bf16.mxu0 0
  %375 = vmatpush1.bf16.msra.mxu0 0
  %376 = vmatprep.subr.bf16.mxu0 0
  %377 = vmatpush1.bf16.msra.mxu0 0
  %378 = vmatprep.subr.bf16.mxu0 0
  %379 = vmatpush1.bf16.msra.mxu0 0
  %380 = vmatprep.subr.bf16.mxu0 0
  %381 = vmatpush1.bf16.msra.mxu0 0
  %382 = vmatprep.subr.bf16.mxu0 0
  %383 = vmatpush1.bf16.msra.mxu0 0
  %384 = vmatprep.mubr.bf16.mxu0 0
  %385 = vmatmul.mubr.bf16.gmra.mrb[0].mxu0 %v111
  %v386 = vpop.f32.mrb[0].mxu0
  %v387 = vadd.f32 %v86, %v386
  %v388 = vpop.f32.mrb[0].mxu0
  %v389 = vadd.f32 %v90, %v388
  %v390 = vpop.f32.mrb[0].mxu0
  %v391 = vadd.f32 %v86, %v390
  %v392 = vpop.f32.mrb[0].mxu0
  %v393 = vadd.f32 %v90, %v392
  %394 = vmatprep.mubr.bf16.mxu0 0
  %395 = vmatmul.mubr.bf16.gmra.mrb[0].mxu0 %v112
  %v396 = vpop.f32.mrb[0].mxu0
  %v397 = vadd.f32 %v86, %v396
  %v398 = vpop.f32.mrb[0].mxu0
  %v399 = vadd.f32 %v90, %v398
  %v400 = vpop.f32.mrb[0].mxu0
  %v401 = vadd.f32 %v86, %v400
  %v402 = vpop.f32.mrb[0].mxu0
  %v403 = vadd.f32 %v90, %v402
  %404 = vmatprep.mubr.bf16.mxu0 0
  %405 = vmatmul.mubr.bf16.gmra.mrb[0].mxu0 %v113
  %v406 = vpop.f32.mrb[0].mxu0
  %v407 = vadd.f32 %v86, %v406
  %v408 = vpop.f32.mrb[0].mxu0
  %v409 = vadd.f32 %v90, %v408
  %v410 = vpop.f32.mrb[0].mxu0
  %v411 = vadd.f32 %v86, %v410
  %v412 = vpop.f32.mrb[0].mxu0
  %v413 = vadd.f32 %v90, %v412
  %414 = vmatprep.mubr.bf16.mxu0 0
  %415 = vmatmul.mubr.bf16.gmra.mrb[0].mxu0 %v114
  %v416 = vpop.f32.mrb[0].mxu0
  %v417 = vadd.f32 %v86, %v416
  %v418 = vpop.f32.mrb[0].mxu0
  %v419 = vadd.f32 %v90, %v418
  %v420 = vpop.f32.mrb[0].mxu0
  %v421 = vadd.f32 %v86, %v420
  %v422 = vpop.f32.mrb[0].mxu0
  %v423 = vadd.f32 %v90, %v422
  %424 = vdwg.mxu0
  %v425 = vpack.c.bf16 %v314, %v314
  %v426 = vpack.c.bf16 %v316, %v316
  %v427 = vpack.c.bf16 %v387, %v387
  %v428 = vpack.c.bf16 %v389, %v389
  %v429 = vpack.c.bf16 %v318, %v318
  %v430 = vpack.c.bf16 %v320, %v320
  %v431 = vpack.c.bf16 %v391, %v391
  %v432 = vpack.c.bf16 %v393, %v393
  %v433 = vpack.c.bf16 %v324, %v324
  %v434 = vpack.c.bf16 %v326, %v326
  %v435 = vpack.c.bf16 %v397, %v397
  %v436 = vpack.c.bf16 %v399, %v399
  %v437 = vpack.c.bf16 %v328, %v328
  %v438 = vpack.c.bf16 %v330, %v330
  %v439 = vpack.c.bf16 %v401, %v401
  %v440 = vpack.c.bf16 %v403, %v403
  %v441 = vpack.c.bf16 %v334, %v334
  %v442 = vpack.c.bf16 %v336, %v336
  %v443 = vpack.c.bf16 %v407, %v407
  %v444 = vpack.c.bf16 %v409, %v409
  %v445 = vpack.c.bf16 %v338, %v338
  %v446 = vpack.c.bf16 %v340, %v340
  %v447 = vpack.c.bf16 %v411, %v411
  %v448 = vpack.c.bf16 %v413, %v413
  %v449 = vpack.c.bf16 %v344, %v344
  %v450 = vpack.c.bf16 %v346, %v346
  %v451 = vpack.c.bf16 %v417, %v417
  %v452 = vpack.c.bf16 %v419, %v419
  %v453 = vpack.c.bf16 %v348, %v348
  %v454 = vpack.c.bf16 %v350, %v350
  %v455 = vpack.c.bf16 %v421, %v421
  %v456 = vpack.c.bf16 %v423, %v423
  %v489 = vunpack.c.l.b16 %v425
  %v490 = vunpack.c.l.b16 %v426
  %v491 = vunpack.c.l.b16 %v427
  %v492 = vunpack.c.l.b16 %v428
  %v493 = vunpack.c.l.b16 %v429
  %v494 = vunpack.c.l.b16 %v430
  %v495 = vunpack.c.l.b16 %v431
  %v496 = vunpack.c.l.b16 %v432
  %v497 = vunpack.c.l.b16 %v433
  %v498 = vunpack.c.l.b16 %v434
  %v499 = vunpack.c.l.b16 %v435
  %v500 = vunpack.c.l.b16 %v436
  %v501 = vunpack.c.l.b16 %v437
  %v502 = vunpack.c.l.b16 %v438
  %v503 = vunpack.c.l.b16 %v439
  %v504 = vunpack.c.l.b16 %v440
  %v505 = vunpack.c.l.b16 %v441
  %v506 = vunpack.c.l.b16 %v442
  %v507 = vunpack.c.l.b16 %v443
  %v508 = vunpack.c.l.b16 %v444
  %v509 = vunpack.c.l.b16 %v445
  %v510 = vunpack.c.l.b16 %v446
  %v511 = vunpack.c.l.b16 %v447
  %v512 = vunpack.c.l.b16 %v448
  %v513 = vunpack.c.l.b16 %v449
  %v514 = vunpack.c.l.b16 %v450
  %v515 = vunpack.c.l.b16 %v451
  %v516 = vunpack.c.l.b16 %v452
  %v517 = vunpack.c.l.b16 %v453
  %v518 = vunpack.c.l.b16 %v454
  %v519 = vunpack.c.l.b16 %v455
  %v520 = vunpack.c.l.b16 %v456
  %v521 = vpack.c.b16 %v490, %v489
  %v522 = vpack.c.b16 %v492, %v491
  %v523 = vpack.c.b16 %v494, %v493
  %v524 = vpack.c.b16 %v496, %v495
  %v525 = vpack.c.b16 %v498, %v497
  %v526 = vpack.c.b16 %v500, %v499
  %v527 = vpack.c.b16 %v502, %v501
  %v528 = vpack.c.b16 %v504, %v503
  %v529 = vpack.c.b16 %v506, %v505
  %v530 = vpack.c.b16 %v508, %v507
  %v531 = vpack.c.b16 %v510, %v509
  %v532 = vpack.c.b16 %v512, %v511
  %v533 = vpack.c.b16 %v514, %v513
  %v534 = vpack.c.b16 %v516, %v515
  %v535 = vpack.c.b16 %v518, %v517
  %v536 = vpack.c.b16 %v520, %v519
  %553 = vst [vmem:[#allocation2] sm:$0xff] %v521
  %554 = vst [vmem:[#allocation2 + $0x8] sm:$0xff] %v522
  %555 = vst [vmem:[#allocation2 + $0x10] sm:$0xff] %v523
  %556 = vst [vmem:[#allocation2 + $0x18] sm:$0xff] %v524
  %557 = vst [vmem:[#allocation2 + $0x20] sm:$0xff] %v525
  %558 = vst [vmem:[#allocation2 + $0x28] sm:$0xff] %v526
  %559 = vst [vmem:[#allocation2 + $0x30] sm:$0xff] %v527
  %560 = vst [vmem:[#allocation2 + $0x38] sm:$0xff] %v528
  %561 = vst [vmem:[#allocation2 + $0x40] sm:$0xff] %v529
  %562 = vst [vmem:[#allocation2 + $0x48] sm:$0xff] %v530
  %563 = vst [vmem:[#allocation2 + $0x50] sm:$0xff] %v531
  %564 = vst [vmem:[#allocation2 + $0x58] sm:$0xff] %v532
  %565 = vst [vmem:[#allocation2 + $0x60] sm:$0xff] %v533
  %566 = vst [vmem:[#allocation2 + $0x68] sm:$0xff] %v534
  %567 = vst [vmem:[#allocation2 + $0x70] sm:$0xff] %v535
  %568 = vst [vmem:[#allocation2 + $0x78] sm:$0xff] %v536
  %v569 = vld [vmem:[#allocation2] sm:$0xff]
  %v570 = vld [vmem:[#allocation2 + $0x8] sm:$0xff]
  %v571 = vunpack.c.l.bf16 %v569
  %v572 = vunpack.c.h.bf16 %v569
  %v573 = vunpack.c.l.bf16 %v570
  %v574 = vunpack.c.h.bf16 %v570
  %v575 = vld [vmem:[%s2] sm:$0xff]
  %v576 = vld [vmem:[%s2 + $0x8] sm:$0xff]
  %v577 = vld [vmem:[%s2 + $0x10] sm:$0xff]
  %v578 = vld [vmem:[%s2 + $0x18] sm:$0xff]
  %v579 = vld [vmem:[%s2 + $0x20] sm:$0xff]
  %v580 = vld [vmem:[%s2 + $0x28] sm:$0xff]
  %v581 = vld [vmem:[%s2 + $0x30] sm:$0xff]
  %v582 = vld [vmem:[%s2 + $0x38] sm:$0xff]
  %v583 = vld [vmem:[%s2 + $0x40] sm:$0xff]
  %v584 = vld [vmem:[%s2 + $0x48] sm:$0xff]
  %v585 = vld [vmem:[%s2 + $0x50] sm:$0xff]
  %v586 = vld [vmem:[%s2 + $0x58] sm:$0xff]
  %v587 = vld [vmem:[%s2 + $0x60] sm:$0xff]
  %v588 = vld [vmem:[%s2 + $0x68] sm:$0xff]
  %v589 = vld [vmem:[%s2 + $0x70] sm:$0xff]
  %v590 = vld [vmem:[%s2 + $0x78] sm:$0xff]
  %v591 = vld [vmem:[%s2 + $0x80] sm:$0xff]
  %v592 = vld [vmem:[%s2 + $0x88] sm:$0xff]
  %v593 = vld [vmem:[%s2 + $0x90] sm:$0xff]
  %v594 = vld [vmem:[%s2 + $0x98] sm:$0xff]
  %v595 = vld [vmem:[%s2 + $0xa0] sm:$0xff]
  %v596 = vld [vmem:[%s2 + $0xa8] sm:$0xff]
  %v597 = vld [vmem:[%s2 + $0xb0] sm:$0xff]
  %v598 = vld [vmem:[%s2 + $0xb8] sm:$0xff]
  %v599 = vld [vmem:[%s2 + $0xc0] sm:$0xff]
  %v600 = vld [vmem:[%s2 + $0xc8] sm:$0xff]
  %v601 = vld [vmem:[%s2 + $0xd0] sm:$0xff]
  %v602 = vld [vmem:[%s2 + $0xd8] sm:$0xff]
  %v603 = vld [vmem:[%s2 + $0xe0] sm:$0xff]
  %v604 = vld [vmem:[%s2 + $0xe8] sm:$0xff]
  %v605 = vld [vmem:[%s2 + $0xf0] sm:$0xff]
  %v606 = vld [vmem:[%s2 + $0xf8] sm:$0xff]
  %v639 = vunpack.c.l.b16 %v575
  %v640 = vunpack.c.h.b16 %v575
  %v641 = vunpack.c.l.b16 %v576
  %v642 = vunpack.c.h.b16 %v576
  %v643 = vunpack.c.l.b16 %v577
  %v644 = vunpack.c.h.b16 %v577
  %v645 = vunpack.c.l.b16 %v578
  %v646 = vunpack.c.h.b16 %v578
  %v647 = vunpack.c.l.b16 %v579
  %v648 = vunpack.c.h.b16 %v579
  %v649 = vunpack.c.l.b16 %v580
  %v650 = vunpack.c.h.b16 %v580
  %v651 = vunpack.c.l.b16 %v581
  %v652 = vunpack.c.h.b16 %v581
  %v653 = vunpack.c.l.b16 %v582
  %v654 = vunpack.c.h.b16 %v582
  %v655 = vunpack.c.l.b16 %v583
  %v656 = vunpack.c.h.b16 %v583
  %v657 = vunpack.c.l.b16 %v584
  %v658 = vunpack.c.h.b16 %v584
  %v659 = vunpack.c.l.b16 %v585
  %v660 = vunpack.c.h.b16 %v585
  %v661 = vunpack.c.l.b16 %v586
  %v662 = vunpack.c.h.b16 %v586
  %v663 = vunpack.c.l.b16 %v587
  %v664 = vunpack.c.h.b16 %v587
  %v665 = vunpack.c.l.b16 %v588
  %v666 = vunpack.c.h.b16 %v588
  %v667 = vunpack.c.l.b16 %v589
  %v668 = vunpack.c.h.b16 %v589
  %v669 = vunpack.c.l.b16 %v590
  %v670 = vunpack.c.h.b16 %v590
  %v671 = vunpack.c.l.b16 %v591
  %v672 = vunpack.c.h.b16 %v591
  %v673 = vunpack.c.l.b16 %v592
  %v674 = vunpack.c.h.b16 %v592
  %v675 = vunpack.c.l.b16 %v593
  %v676 = vunpack.c.h.b16 %v593
  %v677 = vunpack.c.l.b16 %v594
  %v678 = vunpack.c.h.b16 %v594
  %v679 = vunpack.c.l.b16 %v595
  %v680 = vunpack.c.h.b16 %v595
  %v681 = vunpack.c.l.b16 %v596
  %v682 = vunpack.c.h.b16 %v596
  %v683 = vunpack.c.l.b16 %v597
  %v684 = vunpack.c.h.b16 %v597
  %v685 = vunpack.c.l.b16 %v598
  %v686 = vunpack.c.h.b16 %v598
  %v687 = vunpack.c.l.b16 %v599
  %v688 = vunpack.c.h.b16 %v599
  %v689 = vunpack.c.l.b16 %v600
  %v690 = vunpack.c.h.b16 %v600
  %v691 = vunpack.c.l.b16 %v601
  %v692 = vunpack.c.h.b16 %v601
  %v693 = vunpack.c.l.b16 %v602
  %v694 = vunpack.c.h.b16 %v602
  %v695 = vunpack.c.l.b16 %v603
  %v696 = vunpack.c.h.b16 %v603
  %v697 = vunpack.c.l.b16 %v604
  %v698 = vunpack.c.h.b16 %v604
  %v699 = vunpack.c.l.b16 %v605
  %v700 = vunpack.c.h.b16 %v605
  %v701 = vunpack.c.l.b16 %v606
  %v702 = vunpack.c.h.b16 %v606
  %v703 = vpack.c.b16 %v643, %v639
  %v704 = vpack.c.b16 %v644, %v640
  %v705 = vpack.c.b16 %v645, %v641
  %v706 = vpack.c.b16 %v646, %v642
  %v707 = vpack.c.b16 %v651, %v647
  %v708 = vpack.c.b16 %v652, %v648
  %v709 = vpack.c.b16 %v653, %v649
  %v710 = vpack.c.b16 %v654, %v650
  %v711 = vpack.c.b16 %v659, %v655
  %v712 = vpack.c.b16 %v660, %v656
  %v713 = vpack.c.b16 %v661, %v657
  %v714 = vpack.c.b16 %v662, %v658
  %v715 = vpack.c.b16 %v667, %v663
  %v716 = vpack.c.b16 %v668, %v664
  %v717 = vpack.c.b16 %v669, %v665
  %v718 = vpack.c.b16 %v670, %v666
  %v719 = vpack.c.b16 %v675, %v671
  %v720 = vpack.c.b16 %v676, %v672
  %v721 = vpack.c.b16 %v677, %v673
  %v722 = vpack.c.b16 %v678, %v674
  %v723 = vpack.c.b16 %v683, %v679
  %v724 = vpack.c.b16 %v684, %v680
  %v725 = vpack.c.b16 %v685, %v681
  %v726 = vpack.c.b16 %v686, %v682
  %v727 = vpack.c.b16 %v691, %v687
  %v728 = vpack.c.b16 %v692, %v688
  %v729 = vpack.c.b16 %v693, %v689
  %v730 = vpack.c.b16 %v694, %v690
  %v731 = vpack.c.b16 %v699, %v695
  %v732 = vpack.c.b16 %v700, %v696
  %v733 = vpack.c.b16 %v701, %v697
  %v734 = vpack.c.b16 %v702, %v698
  %767 = vmatprep.subr.bf16.mxu0 %v704
  %768 = vmatpush1.bf16.msra.mxu0 %v703
  %769 = vmatprep.subr.bf16.mxu0 %v708
  %770 = vmatpush1.bf16.msra.mxu0 %v707
  %771 = vmatprep.subr.bf16.mxu0 %v712
  %772 = vmatpush1.bf16.msra.mxu0 %v711
  %773 = vmatprep.subr.bf16.mxu0 %v716
  %774 = vmatpush1.bf16.msra.mxu0 %v715
  %775 = vmatprep.subr.bf16.mxu0 %v720
  %776 = vmatpush1.bf16.msra.mxu0 %v719
  %777 = vmatprep.subr.bf16.mxu0 %v724
  %778 = vmatpush1.bf16.msra.mxu0 %v723
  %779 = vmatprep.subr.bf16.mxu0 %v728
  %780 = vmatpush1.bf16.msra.mxu0 %v727
  %781 = vmatprep.subr.bf16.mxu0 %v732
  %782 = vmatpush1.bf16.msra.mxu0 %v731
  %783 = vmatprep.subr.bf16.mxu0 0
  %784 = vmatpush1.bf16.msra.mxu0 0
  %785 = vmatprep.subr.bf16.mxu0 0
  %786 = vmatpush1.bf16.msra.mxu0 0
  %787 = vmatprep.subr.bf16.mxu0 0
  %788 = vmatpush1.bf16.msra.mxu0 0
  %789 = vmatprep.subr.bf16.mxu0 0
  %790 = vmatpush1.bf16.msra.mxu0 0
  %791 = vmatprep.subr.bf16.mxu0 0
  %792 = vmatpush1.bf16.msra.mxu0 0
  %793 = vmatprep.subr.bf16.mxu0 0
  %794 = vmatpush1.bf16.msra.mxu0 0
  %795 = vmatprep.subr.bf16.mxu0 0
  %796 = vmatpush1.bf16.msra.mxu0 0
  %797 = vmatprep.subr.bf16.mxu0 0
  %798 = vmatpush1.bf16.msra.mxu0 0
  %799 = vmatprep.mubr.bf16.mxu0 0
  %800 = vmatmul.mubr.bf16.gmra.mrb[0].mxu0 0
  %v801 = vpop.f32.mrb[0].mxu0
  %v802 = vadd.f32 0.0, %v801
  %v803 = vpop.f32.mrb[0].mxu0
  %v804 = vadd.f32 0.0, %v803
  %v805 = vpop.f32.mrb[0].mxu0
  %v806 = vpop.f32.mrb[0].mxu0
  %807 = vdwg.mxu0
  %808 = vmatprep.subr.bf16.mxu0 %v706
  %809 = vmatpush1.bf16.msra.mxu0 %v705
  %810 = vmatprep.subr.bf16.mxu0 %v710
  %811 = vmatpush1.bf16.msra.mxu0 %v709
  %812 = vmatprep.subr.bf16.mxu0 %v714
  %813 = vmatpush1.bf16.msra.mxu0 %v713
  %814 = vmatprep.subr.bf16.mxu0 %v718
  %815 = vmatpush1.bf16.msra.mxu0 %v717
  %816 = vmatprep.subr.bf16.mxu0 %v722
  %817 = vmatpush1.bf16.msra.mxu0 %v721
  %818 = vmatprep.subr.bf16.mxu0 %v726
  %819 = vmatpush1.bf16.msra.mxu0 %v725
  %820 = vmatprep.subr.bf16.mxu0 %v730
  %821 = vmatpush1.bf16.msra.mxu0 %v729
  %822 = vmatprep.subr.bf16.mxu0 %v734
  %823 = vmatpush1.bf16.msra.mxu0 %v733
  %824 = vmatprep.subr.bf16.mxu0 0
  %825 = vmatpush1.bf16.msra.mxu0 0
  %826 = vmatprep.subr.bf16.mxu0 0
  %827 = vmatpush1.bf16.msra.mxu0 0
  %828 = vmatprep.subr.bf16.mxu0 0
  %829 = vmatpush1.bf16.msra.mxu0 0
  %830 = vmatprep.subr.bf16.mxu0 0
  %831 = vmatpush1.bf16.msra.mxu0 0
  %832 = vmatprep.subr.bf16.mxu0 0
  %833 = vmatpush1.bf16.msra.mxu0 0
  %834 = vmatprep.subr.bf16.mxu0 0
  %835 = vmatpush1.bf16.msra.mxu0 0
  %836 = vmatprep.subr.bf16.mxu0 0
  %837 = vmatpush1.bf16.msra.mxu0 0
  %838 = vmatprep.subr.bf16.mxu0 0
  %839 = vmatpush1.bf16.msra.mxu0 0
  %840 = vmatprep.mubr.bf16.mxu0 0
  %841 = vmatmul.mubr.bf16.gmra.mrb[0].mxu0 0
  %v842 = vpop.f32.mrb[0].mxu0
  %v843 = vadd.f32 0.0, %v842
  %v844 = vpop.f32.mrb[0].mxu0
  %v845 = vadd.f32 0.0, %v844
  %v846 = vpop.f32.mrb[0].mxu0
  %v847 = vpop.f32.mrb[0].mxu0
  %848 = vdwg.mxu0
  %v849 = vadd.f32 %v571, %v802
  %v850 = vadd.f32 %v572, %v804
  %v851 = vadd.f32 %v573, %v843
  %v852 = vadd.f32 %v574, %v845
  %v853 = vxor.u32 %v849, 2147483648
  %v854 = vmul.f32 %v853, 1.442695
  %v855 = vpow.pop %v854
  %v856 = vadd.f32 %v855, 1.0
  %v857 = vrcp.pop %v856
  %v858 = vmul.f32 1.0, %v857
  %v859 = vxor.u32 %v850, 2147483648
  %v860 = vmul.f32 %v859, 1.442695
  %v861 = vpow.pop %v860
  %v862 = vadd.f32 %v861, 1.0
  %v863 = vrcp.pop %v862
  %v864 = vmul.f32 1.0, %v863
  %v865 = vtanh.pop %v851
  %v866 = vxor.u32 %v852, 2147483648
  %v867 = vmul.f32 %v866, 1.442695
  %v868 = vpow.pop %v867
  %v869 = vadd.f32 %v868, 1.0
  %v870 = vrcp.pop %v869
  %v871 = vmul.f32 1.0, %v870
  %v872 = vmul.f32 %v864, 0.0
  %v873 = vmul.f32 %v858, %v865
  %v874 = vadd.f32 %v872, %v873
  %v875 = vtanh.pop %v874
  %v876 = vmul.f32 %v871, %v875
  %v877 = vpack.c.bf16 %v876, %v876
  %878 = vst [vmem:[#allocation3] sm:$0xf] %v877
  %s879 = scalar_lea.vmem [#allocation2], 16
  %v880 = vld [vmem:[%s879] sm:$0xff]
  %v881 = vld [vmem:[%s879 + $0x8] sm:$0xff]
  %v882 = vunpack.c.l.bf16 %v880
  %v883 = vunpack.c.h.bf16 %v880
  %v884 = vunpack.c.l.bf16 %v881
  %v885 = vunpack.c.h.bf16 %v881
  %v886 = vld [vmem:[%s2] sm:$0xff]
  %v887 = vld [vmem:[%s2 + $0x8] sm:$0xff]
  %v888 = vld [vmem:[%s2 + $0x10] sm:$0xff]
  %v889 = vld [vmem:[%s2 + $0x18] sm:$0xff]
  %v890 = vld [vmem:[%s2 + $0x20] sm:$0xff]
  %v891 = vld [vmem:[%s2 + $0x28] sm:$0xff]
  %v892 = vld [vmem:[%s2 + $0x30] sm:$0xff]
  %v893 = vld [vmem:[%s2 + $0x38] sm:$0xff]
  %v894 = vld [vmem:[%s2 + $0x40] sm:$0xff]
  %v895 = vld [vmem:[%s2 + $0x48] sm:$0xff]
  %v896 = vld [vmem:[%s2 + $0x50] sm:$0xff]
  %v897 = vld [vmem:[%s2 + $0x58] sm:$0xff]
  %v898 = vld [vmem:[%s2 + $0x60] sm:$0xff]
  %v899 = vld [vmem:[%s2 + $0x68] sm:$0xff]
  %v900 = vld [vmem:[%s2 + $0x70] sm:$0xff]
  %v901 = vld [vmem:[%s2 + $0x78] sm:$0xff]
  %v902 = vld [vmem:[%s2 + $0x80] sm:$0xff]
  %v903 = vld [vmem:[%s2 + $0x88] sm:$0xff]
  %v904 = vld [vmem:[%s2 + $0x90] sm:$0xff]
  %v905 = vld [vmem:[%s2 + $0x98] sm:$0xff]
  %v906 = vld [vmem:[%s2 + $0xa0] sm:$0xff]
  %v907 = vld [vmem:[%s2 + $0xa8] sm:$0xff]
  %v908 = vld [vmem:[%s2 + $0xb0] sm:$0xff]
  %v909 = vld [vmem:[%s2 + $0xb8] sm:$0xff]
  %v910 = vld [vmem:[%s2 + $0xc0] sm:$0xff]
  %v911 = vld [vmem:[%s2 + $0xc8] sm:$0xff]
  %v912 = vld [vmem:[%s2 + $0xd0] sm:$0xff]
  %v913 = vld [vmem:[%s2 + $0xd8] sm:$0xff]
  %v914 = vld [vmem:[%s2 + $0xe0] sm:$0xff]
  %v915 = vld [vmem:[%s2 + $0xe8] sm:$0xff]
  %v916 = vld [vmem:[%s2 + $0xf0] sm:$0xff]
  %v917 = vld [vmem:[%s2 + $0xf8] sm:$0xff]
  %v950 = vunpack.c.l.b16 %v886
  %v951 = vunpack.c.h.b16 %v886
  %v952 = vunpack.c.l.b16 %v887
  %v953 = vunpack.c.h.b16 %v887
  %v954 = vunpack.c.l.b16 %v888
  %v955 = vunpack.c.h.b16 %v888
  %v956 = vunpack.c.l.b16 %v889
  %v957 = vunpack.c.h.b16 %v889
  %v958 = vunpack.c.l.b16 %v890
  %v959 = vunpack.c.h.b16 %v890
  %v960 = vunpack.c.l.b16 %v891
  %v961 = vunpack.c.h.b16 %v891
  %v962 = vunpack.c.l.b16 %v892
  %v963 = vunpack.c.h.b16 %v892
  %v964 = vunpack.c.l.b16 %v893
  %v965 = vunpack.c.h.b16 %v893
  %v966 = vunpack.c.l.b16 %v894
  %v967 = vunpack.c.h.b16 %v894
  %v968 = vunpack.c.l.b16 %v895
  %v969 = vunpack.c.h.b16 %v895
  %v970 = vunpack.c.l.b16 %v896
  %v971 = vunpack.c.h.b16 %v896
  %v972 = vunpack.c.l.b16 %v897
  %v973 = vunpack.c.h.b16 %v897
  %v974 = vunpack.c.l.b16 %v898
  %v975 = vunpack.c.h.b16 %v898
  %v976 = vunpack.c.l.b16 %v899
  %v977 = vunpack.c.h.b16 %v899
  %v978 = vunpack.c.l.b16 %v900
  %v979 = vunpack.c.h.b16 %v900
  %v980 = vunpack.c.l.b16 %v901
  %v981 = vunpack.c.h.b16 %v901
  %v982 = vunpack.c.l.b16 %v902
  %v983 = vunpack.c.h.b16 %v902
  %v984 = vunpack.c.l.b16 %v903
  %v985 = vunpack.c.h.b16 %v903
  %v986 = vunpack.c.l.b16 %v904
  %v987 = vunpack.c.h.b16 %v904
  %v988 = vunpack.c.l.b16 %v905
  %v989 = vunpack.c.h.b16 %v905
  %v990 = vunpack.c.l.b16 %v906
  %v991 = vunpack.c.h.b16 %v906
  %v992 = vunpack.c.l.b16 %v907
  %v993 = vunpack.c.h.b16 %v907
  %v994 = vunpack.c.l.b16 %v908
  %v995 = vunpack.c.h.b16 %v908
  %v996 = vunpack.c.l.b16 %v909
  %v997 = vunpack.c.h.b16 %v909
  %v998 = vunpack.c.l.b16 %v910
  %v999 = vunpack.c.h.b16 %v910
  %v1000 = vunpack.c.l.b16 %v911
  %v1001 = vunpack.c.h.b16 %v911
  %v1002 = vunpack.c.l.b16 %v912
  %v1003 = vunpack.c.h.b16 %v912
  %v1004 = vunpack.c.l.b16 %v913
  %v1005 = vunpack.c.h.b16 %v913
  %v1006 = vunpack.c.l.b16 %v914
  %v1007 = vunpack.c.h.b16 %v914
  %v1008 = vunpack.c.l.b16 %v915
  %v1009 = vunpack.c.h.b16 %v915
  %v1010 = vunpack.c.l.b16 %v916
  %v1011 = vunpack.c.h.b16 %v916
  %v1012 = vunpack.c.l.b16 %v917
  %v1013 = vunpack.c.h.b16 %v917
  %v1014 = vpack.c.b16 %v954, %v950
  %v1015 = vpack.c.b16 %v955, %v951
  %v1016 = vpack.c.b16 %v956, %v952
  %v1017 = vpack.c.b16 %v957, %v953
  %v1018 = vpack.c.b16 %v962, %v958
  %v1019 = vpack.c.b16 %v963, %v959
  %v1020 = vpack.c.b16 %v964, %v960
  %v1021 = vpack.c.b16 %v965, %v961
  %v1022 = vpack.c.b16 %v970, %v966
  %v1023 = vpack.c.b16 %v971, %v967
  %v1024 = vpack.c.b16 %v972, %v968
  %v1025 = vpack.c.b16 %v973, %v969
  %v1026 = vpack.c.b16 %v978, %v974
  %v1027 = vpack.c.b16 %v979, %v975
  %v1028 = vpack.c.b16 %v980, %v976
  %v1029 = vpack.c.b16 %v981, %v977
  %v1030 = vpack.c.b16 %v986, %v982
  %v1031 = vpack.c.b16 %v987, %v983
  %v1032 = vpack.c.b16 %v988, %v984
  %v1033 = vpack.c.b16 %v989, %v985
  %v1034 = vpack.c.b16 %v994, %v990
  %v1035 = vpack.c.b16 %v995, %v991
  %v1036 = vpack.c.b16 %v996, %v992
  %v1037 = vpack.c.b16 %v997, %v993
  %v1038 = vpack.c.b16 %v1002, %v998
  %v1039 = vpack.c.b16 %v1003, %v999
  %v1040 = vpack.c.b16 %v1004, %v1000
  %v1041 = vpack.c.b16 %v1005, %v1001
  %v1042 = vpack.c.b16 %v1010, %v1006
  %v1043 = vpack.c.b16 %v1011, %v1007
  %v1044 = vpack.c.b16 %v1012, %v1008
  %v1045 = vpack.c.b16 %v1013, %v1009
  %1078 = vmatprep.subr.bf16.mxu0 %v1015
  %1079 = vmatpush1.bf16.msra.mxu0 %v1014
  %1080 = vmatprep.subr.bf16.mxu0 %v1019
  %1081 = vmatpush1.bf16.msra.mxu0 %v1018
  %1082 = vmatprep.subr.bf16.mxu0 %v1023
  %1083 = vmatpush1.bf16.msra.mxu0 %v1022
  %1084 = vmatprep.subr.bf16.mxu0 %v1027
  %1085 = vmatpush1.bf16.msra.mxu0 %v1026
  %1086 = vmatprep.subr.bf16.mxu0 %v1031
  %1087 = vmatpush1.bf16.msra.mxu0 %v1030
  %1088 = vmatprep.subr.bf16.mxu0 %v1035
  %1089 = vmatpush1.bf16.msra.mxu0 %v1034
  %1090 = vmatprep.subr.bf16.mxu0 %v1039
  %1091 = vmatpush1.bf16.msra.mxu0 %v1038
  %1092 = vmatprep.subr.bf16.mxu0 %v1043
  %1093 = vmatpush1.bf16.msra.mxu0 %v1042
  %1094 = vmatprep.subr.bf16.mxu0 0
  %1095 = vmatpush1.bf16.msra.mxu0 0
  %1096 = vmatprep.subr.bf16.mxu0 0
  %1097 = vmatpush1.bf16.msra.mxu0 0
  %1098 = vmatprep.subr.bf16.mxu0 0
  %1099 = vmatpush1.bf16.msra.mxu0 0
  %1100 = vmatprep.subr.bf16.mxu0 0
  %1101 = vmatpush1.bf16.msra.mxu0 0
  %1102 = vmatprep.subr.bf16.mxu0 0
  %1103 = vmatpush1.bf16.msra.mxu0 0
  %1104 = vmatprep.subr.bf16.mxu0 0
  %1105 = vmatpush1.bf16.msra.mxu0 0
  %1106 = vmatprep.subr.bf16.mxu0 0
  %1107 = vmatpush1.bf16.msra.mxu0 0
  %1108 = vmatprep.subr.bf16.mxu0 0
  %1109 = vmatpush1.bf16.msra.mxu0 0
  %1110 = vmatprep.mubr.bf16.mxu0 0
  %1111 = vmatmul.mubr.bf16.gmra.mrb[0].mxu0 %v877
  %v1112 = vpop.f32.mrb[0].mxu0
  %v1113 = vadd.f32 0.0, %v1112
  %v1114 = vpop.f32.mrb[0].mxu0
  %v1115 = vadd.f32 0.0, %v1114
  %v1116 = vpop.f32.mrb[0].mxu0
  %v1117 = vpop.f32.mrb[0].mxu0
  %1118 = vdwg.mxu0
  %1119 = vmatprep.subr.bf16.mxu0 %v1017
  %1120 = vmatpush1.bf16.msra.mxu0 %v1016
  %1121 = vmatprep.subr.bf16.mxu0 %v1021
  %1122 = vmatpush1.bf16.msra.mxu0 %v1020
  %1123 = vmatprep.subr.bf16.mxu0 %v1025
  %1124 = vmatpush1.bf16.msra.mxu0 %v1024
  %1125 = vmatprep.subr.bf16.mxu0 %v1029
  %1126 = vmatpush1.bf16.msra.mxu0 %v1028
  %1127 = vmatprep.subr.bf16.mxu0 %v1033
  %1128 = vmatpush1.bf16.msra.mxu0 %v1032
  %1129 = vmatprep.subr.bf16.mxu0 %v1037
  %1130 = vmatpush1.bf16.msra.mxu0 %v1036
  %1131 = vmatprep.subr.bf16.mxu0 %v1041
  %1132 = vmatpush1.bf16.msra.mxu0 %v1040
  %1133 = vmatprep.subr.bf16.mxu0 %v1045
  %1134 = vmatpush1.bf16.msra.mxu0 %v1044
  %1135 = vmatprep.subr.bf16.mxu0 0
  %1136 = vmatpush1.bf16.msra.mxu0 0
  %1137 = vmatprep.subr.bf16.mxu0 0
  %1138 = vmatpush1.bf16.msra.mxu0 0
  %1139 = vmatprep.subr.bf16.mxu0 0
  %1140 = vmatpush1.bf16.msra.mxu0 0
  %1141 = vmatprep.subr.bf16.mxu0 0
  %1142 = vmatpush1.bf16.msra.mxu0 0
  %1143 = vmatprep.subr.bf16.mxu0 0
  %1144 = vmatpush1.bf16.msra.mxu0 0
  %1145 = vmatprep.subr.bf16.mxu0 0
  %1146 = vmatpush1.bf16.msra.mxu0 0
  %1147 = vmatprep.subr.bf16.mxu0 0
  %1148 = vmatpush1.bf16.msra.mxu0 0
  %1149 = vmatprep.subr.bf16.mxu0 0
  %1150 = vmatpush1.bf16.msra.mxu0 0
  %1151 = vmatprep.mubr.bf16.mxu0 0
  %1152 = vmatmul.mubr.bf16.gmra.mrb[0].mxu0 %v877
  %v1153 = vpop.f32.mrb[0].mxu0
  %v1154 = vadd.f32 0.0, %v1153
  %v1155 = vpop.f32.mrb[0].mxu0
  %v1156 = vadd.f32 0.0, %v1155
  %v1157 = vpop.f32.mrb[0].mxu0
  %v1158 = vpop.f32.mrb[0].mxu0
  %1159 = vdwg.mxu0
  %v1160 = vadd.f32 %v882, %v1113
  %v1161 = vadd.f32 %v883, %v1115
  %v1162 = vadd.f32 %v884, %v1154
  %v1163 = vadd.f32 %v885, %v1156
  %v1164 = vxor.u32 %v1160, 2147483648
  %v1165 = vmul.f32 %v1164, 1.442695
  %v1166 = vpow.pop %v1165
  %v1167 = vadd.f32 %v1166, 1.0
  %v1168 = vrcp.pop %v1167
  %v1169 = vmul.f32 1.0, %v1168
  %v1170 = vxor.u32 %v1161, 2147483648
  %v1171 = vmul.f32 %v1170, 1.442695
  %v1172 = vpow.pop %v1171
  %v1173 = vadd.f32 %v1172, 1.0
  %v1174 = vrcp.pop %v1173
  %v1175 = vmul.f32 1.0, %v1174
  %v1176 = vtanh.pop %v1162
  %v1177 = vxor.u32 %v1163, 2147483648
  %v1178 = vmul.f32 %v1177, 1.442695
  %v1179 = vpow.pop %v1178
  %v1180 = vadd.f32 %v1179, 1.0
  %v1181 = vrcp.pop %v1180
  %v1182 = vmul.f32 1.0, %v1181
  %v1183 = vmul.f32 %v1175, %v874
  %v1184 = vmul.f32 %v1169, %v1176
  %v1185 = vadd.f32 %v1183, %v1184
  %v1186 = vtanh.pop %v1185
  %v1187 = vmul.f32 %v1182, %v1186
  %v1188 = vpack.c.bf16 %v1187, %v1187
  %s1189 = scalar_lea.vmem [#allocation3], 4
  %1190 = vst [vmem:[%s1189] sm:$0xf] %v1188
  %s1191 = scalar_lea.vmem [#allocation2], 32
  %v1192 = vld [vmem:[%s1191] sm:$0xff]
  %v1193 = vld [vmem:[%s1191 + $0x8] sm:$0xff]
  %v1194 = vunpack.c.l.bf16 %v1192
  %v1195 = vunpack.c.h.bf16 %v1192
  %v1196 = vunpack.c.l.bf16 %v1193
  %v1197 = vunpack.c.h.bf16 %v1193
  %v1198 = vld [vmem:[%s2] sm:$0xff]
  %v1199 = vld [vmem:[%s2 + $0x8] sm:$0xff]
  %v1200 = vld [vmem:[%s2 + $0x10] sm:$0xff]
  %v1201 = vld [vmem:[%s2 + $0x18] sm:$0xff]
  %v1202 = vld [vmem:[%s2 + $0x20] sm:$0xff]
  %v1203 = vld [vmem:[%s2 + $0x28] sm:$0xff]
  %v1204 = vld [vmem:[%s2 + $0x30] sm:$0xff]
  %v1205 = vld [vmem:[%s2 + $0x38] sm:$0xff]
  %v1206 = vld [vmem:[%s2 + $0x40] sm:$0xff]
  %v1207 = vld [vmem:[%s2 + $0x48] sm:$0xff]
  %v1208 = vld [vmem:[%s2 + $0x50] sm:$0xff]
  %v1209 = vld [vmem:[%s2 + $0x58] sm:$0xff]
  %v1210 = vld [vmem:[%s2 + $0x60] sm:$0xff]
  %v1211 = vld [vmem:[%s2 + $0x68] sm:$0xff]
  %v1212 = vld [vmem:[%s2 + $0x70] sm:$0xff]
  %v1213 = vld [vmem:[%s2 + $0x78] sm:$0xff]
  %v1214 = vld [vmem:[%s2 + $0x80] sm:$0xff]
  %v1215 = vld [vmem:[%s2 + $0x88] sm:$0xff]
  %v1216 = vld [vmem:[%s2 + $0x90] sm:$0xff]
  %v1217 = vld [vmem:[%s2 + $0x98] sm:$0xff]
  %v1218 = vld [vmem:[%s2 + $0xa0] sm:$0xff]
  %v1219 = vld [vmem:[%s2 + $0xa8] sm:$0xff]
  %v1220 = vld [vmem:[%s2 + $0xb0] sm:$0xff]
  %v1221 = vld [vmem:[%s2 + $0xb8] sm:$0xff]
  %v1222 = vld [vmem:[%s2 + $0xc0] sm:$0xff]
  %v1223 = vld [vmem:[%s2 + $0xc8] sm:$0xff]
  %v1224 = vld [vmem:[%s2 + $0xd0] sm:$0xff]
  %v1225 = vld [vmem:[%s2 + $0xd8] sm:$0xff]
  %v1226 = vld [vmem:[%s2 + $0xe0] sm:$0xff]
  %v1227 = vld [vmem:[%s2 + $0xe8] sm:$0xff]
  %v1228 = vld [vmem:[%s2 + $0xf0] sm:$0xff]
  %v1229 = vld [vmem:[%s2 + $0xf8] sm:$0xff]
  %v1262 = vunpack.c.l.b16 %v1198
  %v1263 = vunpack.c.h.b16 %v1198
  %v1264 = vunpack.c.l.b16 %v1199
  %v1265 = vunpack.c.h.b16 %v1199
  %v1266 = vunpack.c.l.b16 %v1200
  %v1267 = vunpack.c.h.b16 %v1200
  %v1268 = vunpack.c.l.b16 %v1201
  %v1269 = vunpack.c.h.b16 %v1201
  %v1270 = vunpack.c.l.b16 %v1202
  %v1271 = vunpack.c.h.b16 %v1202
  %v1272 = vunpack.c.l.b16 %v1203
  %v1273 = vunpack.c.h.b16 %v1203
  %v1274 = vunpack.c.l.b16 %v1204
  %v1275 = vunpack.c.h.b16 %v1204
  %v1276 = vunpack.c.l.b16 %v1205
  %v1277 = vunpack.c.h.b16 %v1205
  %v1278 = vunpack.c.l.b16 %v1206
  %v1279 = vunpack.c.h.b16 %v1206
  %v1280 = vunpack.c.l.b16 %v1207
  %v1281 = vunpack.c.h.b16 %v1207
  %v1282 = vunpack.c.l.b16 %v1208
  %v1283 = vunpack.c.h.b16 %v1208
  %v1284 = vunpack.c.l.b16 %v1209
  %v1285 = vunpack.c.h.b16 %v1209
  %v1286 = vunpack.c.l.b16 %v1210
  %v1287 = vunpack.c.h.b16 %v1210
  %v1288 = vunpack.c.l.b16 %v1211
  %v1289 = vunpack.c.h.b16 %v1211
  %v1290 = vunpack.c.l.b16 %v1212
  %v1291 = vunpack.c.h.b16 %v1212
  %v1292 = vunpack.c.l.b16 %v1213
  %v1293 = vunpack.c.h.b16 %v1213
  %v1294 = vunpack.c.l.b16 %v1214
  %v1295 = vunpack.c.h.b16 %v1214
  %v1296 = vunpack.c.l.b16 %v1215
  %v1297 = vunpack.c.h.b16 %v1215
  %v1298 = vunpack.c.l.b16 %v1216
  %v1299 = vunpack.c.h.b16 %v1216
  %v1300 = vunpack.c.l.b16 %v1217
  %v1301 = vunpack.c.h.b16 %v1217
  %v1302 = vunpack.c.l.b16 %v1218
  %v1303 = vunpack.c.h.b16 %v1218
  %v1304 = vunpack.c.l.b16 %v1219
  %v1305 = vunpack.c.h.b16 %v1219
  %v1306 = vunpack.c.l.b16 %v1220
  %v1307 = vunpack.c.h.b16 %v1220
  %v1308 = vunpack.c.l.b16 %v1221
  %v1309 = vunpack.c.h.b16 %v1221
  %v1310 = vunpack.c.l.b16 %v1222
  %v1311 = vunpack.c.h.b16 %v1222
  %v1312 = vunpack.c.l.b16 %v1223
  %v1313 = vunpack.c.h.b16 %v1223
  %v1314 = vunpack.c.l.b16 %v1224
  %v1315 = vunpack.c.h.b16 %v1224
  %v1316 = vunpack.c.l.b16 %v1225
  %v1317 = vunpack.c.h.b16 %v1225
  %v1318 = vunpack.c.l.b16 %v1226
  %v1319 = vunpack.c.h.b16 %v1226
  %v1320 = vunpack.c.l.b16 %v1227
  %v1321 = vunpack.c.h.b16 %v1227
  %v1322 = vunpack.c.l.b16 %v1228
  %v1323 = vunpack.c.h.b16 %v1228
  %v1324 = vunpack.c.l.b16 %v1229
  %v1325 = vunpack.c.h.b16 %v1229
  %v1326 = vpack.c.b16 %v1266, %v1262
  %v1327 = vpack.c.b16 %v1267, %v1263
  %v1328 = vpack.c.b16 %v1268, %v1264
  %v1329 = vpack.c.b16 %v1269, %v1265
  %v1330 = vpack.c.b16 %v1274, %v1270
  %v1331 = vpack.c.b16 %v1275, %v1271
  %v1332 = vpack.c.b16 %v1276, %v1272
  %v1333 = vpack.c.b16 %v1277, %v1273
  %v1334 = vpack.c.b16 %v1282, %v1278
  %v1335 = vpack.c.b16 %v1283, %v1279
  %v1336 = vpack.c.b16 %v1284, %v1280
  %v1337 = vpack.c.b16 %v1285, %v1281
  %v1338 = vpack.c.b16 %v1290, %v1286
  %v1339 = vpack.c.b16 %v1291, %v1287
  %v1340 = vpack.c.b16 %v1292, %v1288
  %v1341 = vpack.c.b16 %v1293, %v1289
  %v1342 = vpack.c.b16 %v1298, %v1294
  %v1343 = vpack.c.b16 %v1299, %v1295
  %v1344 = vpack.c.b16 %v1300, %v1296
  %v1345 = vpack.c.b16 %v1301, %v1297
  %v1346 = vpack.c.b16 %v1306, %v1302
  %v1347 = vpack.c.b16 %v1307, %v1303
  %v1348 = vpack.c.b16 %v1308, %v1304
  %v1349 = vpack.c.b16 %v1309, %v1305
  %v1350 = vpack.c.b16 %v1314, %v1310
  %v1351 = vpack.c.b16 %v1315, %v1311
  %v1352 = vpack.c.b16 %v1316, %v1312
  %v1353 = vpack.c.b16 %v1317, %v1313
  %v1354 = vpack.c.b16 %v1322, %v1318
  %v1355 = vpack.c.b16 %v1323, %v1319
  %v1356 = vpack.c.b16 %v1324, %v1320
  %v1357 = vpack.c.b16 %v1325, %v1321
  %1390 = vmatprep.subr.bf16.mxu0 %v1327
  %1391 = vmatpush1.bf16.msra.mxu0 %v1326
  %1392 = vmatprep.subr.bf16.mxu0 %v1331
  %1393 = vmatpush1.bf16.msra.mxu0 %v1330
  %1394 = vmatprep.subr.bf16.mxu0 %v1335
  %1395 = vmatpush1.bf16.msra.mxu0 %v1334
  %1396 = vmatprep.subr.bf16.mxu0 %v1339
  %1397 = vmatpush1.bf16.msra.mxu0 %v1338
  %1398 = vmatprep.subr.bf16.mxu0 %v1343
  %1399 = vmatpush1.bf16.msra.mxu0 %v1342
  %1400 = vmatprep.subr.bf16.mxu0 %v1347
  %1401 = vmatpush1.bf16.msra.mxu0 %v1346
  %1402 = vmatprep.subr.bf16.mxu0 %v1351
  %1403 = vmatpush1.bf16.msra.mxu0 %v1350
  %1404 = vmatprep.subr.bf16.mxu0 %v1355
  %1405 = vmatpush1.bf16.msra.mxu0 %v1354
  %1406 = vmatprep.subr.bf16.mxu0 0
  %1407 = vmatpush1.bf16.msra.mxu0 0
  %1408 = vmatprep.subr.bf16.mxu0 0
  %1409 = vmatpush1.bf16.msra.mxu0 0
  %1410 = vmatprep.subr.bf16.mxu0 0
  %1411 = vmatpush1.bf16.msra.mxu0 0
  %1412 = vmatprep.subr.bf16.mxu0 0
  %1413 = vmatpush1.bf16.msra.mxu0 0
  %1414 = vmatprep.subr.bf16.mxu0 0
  %1415 = vmatpush1.bf16.msra.mxu0 0
  %1416 = vmatprep.subr.bf16.mxu0 0
  %1417 = vmatpush1.bf16.msra.mxu0 0
  %1418 = vmatprep.subr.bf16.mxu0 0
  %1419 = vmatpush1.bf16.msra.mxu0 0
  %1420 = vmatprep.subr.bf16.mxu0 0
  %1421 = vmatpush1.bf16.msra.mxu0 0
  %1422 = vmatprep.mubr.bf16.mxu0 0
  %1423 = vmatmul.mubr.bf16.gmra.mrb[0].mxu0 %v1188
  %v1424 = vpop.f32.mrb[0].mxu0
  %v1425 = vadd.f32 0.0, %v1424
  %v1426 = vpop.f32.mrb[0].mxu0
  %v1427 = vadd.f32 0.0, %v1426
  %v1428 = vpop.f32.mrb[0].mxu0
  %v1429 = vpop.f32.mrb[0].mxu0
  %1430 = vdwg.mxu0
  %1431 = vmatprep.subr.bf16.mxu0 %v1329
  %1432 = vmatpush1.bf16.msra.mxu0 %v1328
  %1433 = vmatprep.subr.bf16.mxu0 %v1333
  %1434 = vmatpush1.bf16.msra.mxu0 %v1332
  %1435 = vmatprep.subr.bf16.mxu0 %v1337
  %1436 = vmatpush1.bf16.msra.mxu0 %v1336
  %1437 = vmatprep.subr.bf16.mxu0 %v1341
  %1438 = vmatpush1.bf16.msra.mxu0 %v1340
  %1439 = vmatprep.subr.bf16.mxu0 %v1345
  %1440 = vmatpush1.bf16.msra.mxu0 %v1344
  %1441 = vmatprep.subr.bf16.mxu0 %v1349
  %1442 = vmatpush1.bf16.msra.mxu0 %v1348
  %1443 = vmatprep.subr.bf16.mxu0 %v1353
  %1444 = vmatpush1.bf16.msra.mxu0 %v1352
  %1445 = vmatprep.subr.bf16.mxu0 %v1357
  %1446 = vmatpush1.bf16.msra.mxu0 %v1356
  %1447 = vmatprep.subr.bf16.mxu0 0
  %1448 = vmatpush1.bf16.msra.mxu0 0
  %1449 = vmatprep.subr.bf16.mxu0 0
  %1450 = vmatpush1.bf16.msra.mxu0 0
  %1451 = vmatprep.subr.bf16.mxu0 0
  %1452 = vmatpush1.bf16.msra.mxu0 0
  %1453 = vmatprep.subr.bf16.mxu0 0
  %1454 = vmatpush1.bf16.msra.mxu0 0
  %1455 = vmatprep.subr.bf16.mxu0 0
  %1456 = vmatpush1.bf16.msra.mxu0 0
  %1457 = vmatprep.subr.bf16.mxu0 0
  %1458 = vmatpush1.bf16.msra.mxu0 0
  %1459 = vmatprep.subr.bf16.mxu0 0
  %1460 = vmatpush1.bf16.msra.mxu0 0
  %1461 = vmatprep.subr.bf16.mxu0 0
  %1462 = vmatpush1.bf16.msra.mxu0 0
  %1463 = vmatprep.mubr.bf16.mxu0 0
  %1464 = vmatmul.mubr.bf16.gmra.mrb[0].mxu0 %v1188
  %v1465 = vpop.f32.mrb[0].mxu0
  %v1466 = vadd.f32 0.0, %v1465
  %v1467 = vpop.f32.mrb[0].mxu0
  %v1468 = vadd.f32 0.0, %v1467
  %v1469 = vpop.f32.mrb[0].mxu0
  %v1470 = vpop.f32.mrb[0].mxu0
  %1471 = vdwg.mxu0
  %v1472 = vadd.f32 %v1194, %v1425
  %v1473 = vadd.f32 %v1195, %v1427
  %v1474 = vadd.f32 %v1196, %v1466
  %v1475 = vadd.f32 %v1197, %v1468
  %v1476 = vxor.u32 %v1472, 2147483648
  %v1477 = vmul.f32 %v1476, 1.442695
  %v1478 = vpow.pop %v1477
  %v1479 = vadd.f32 %v1478, 1.0
  %v1480 = vrcp.pop %v1479
  %v1481 = vmul.f32 1.0, %v1480
  %v1482 = vxor.u32 %v1473, 2147483648
  %v1483 = vmul.f32 %v1482, 1.442695
  %v1484 = vpow.pop %v1483
  %v1485 = vadd.f32 %v1484, 1.0
  %v1486 = vrcp.pop %v1485
  %v1487 = vmul.f32 1.0, %v1486
  %v1488 = vtanh.pop %v1474
  %v1489 = vxor.u32 %v1475, 2147483648
  %v1490 = vmul.f32 %v1489, 1.442695
  %v1491 = vpow.pop %v1490
  %v1492 = vadd.f32 %v1491, 1.0
  %v1493 = vrcp.pop %v1492
  %v1494 = vmul.f32 1.0, %v1493
  %v1495 = vmul.f32 %v1487, %v1185
  %v1496 = vmul.f32 %v1481, %v1488
  %v1497 = vadd.f32 %v1495, %v1496
  %v1498 = vtanh.pop %v1497
  %v1499 = vmul.f32 %v1494, %v1498
  %v1500 = vpack.c.bf16 %v1499, %v1499
  %s1501 = scalar_lea.vmem [#allocation3], 8
  %1502 = vst [vmem:[%s1501] sm:$0xf] %v1500
  %s1503 = scalar_lea.vmem [#allocation2], 48
  %v1504 = vld [vmem:[%s1503] sm:$0xff]
  %v1505 = vld [vmem:[%s1503 + $0x8] sm:$0xff]
  %v1506 = vunpack.c.l.bf16 %v1504
  %v1507 = vunpack.c.h.bf16 %v1504
  %v1508 = vunpack.c.l.bf16 %v1505
  %v1509 = vunpack.c.h.bf16 %v1505
  %v1510 = vld [vmem:[%s2] sm:$0xff]
  %v1511 = vld [vmem:[%s2 + $0x8] sm:$0xff]
  %v1512 = vld [vmem:[%s2 + $0x10] sm:$0xff]
  %v1513 = vld [vmem:[%s2 + $0x18] sm:$0xff]
  %v1514 = vld [vmem:[%s2 + $0x20] sm:$0xff]
  %v1515 = vld [vmem:[%s2 + $0x28] sm:$0xff]
  %v1516 = vld [vmem:[%s2 + $0x30] sm:$0xff]
  %v1517 = vld [vmem:[%s2 + $0x38] sm:$0xff]
  %v1518 = vld [vmem:[%s2 + $0x40] sm:$0xff]
  %v1519 = vld [vmem:[%s2 + $0x48] sm:$0xff]
  %v1520 = vld [vmem:[%s2 + $0x50] sm:$0xff]
  %v1521 = vld [vmem:[%s2 + $0x58] sm:$0xff]
  %v1522 = vld [vmem:[%s2 + $0x60] sm:$0xff]
  %v1523 = vld [vmem:[%s2 + $0x68] sm:$0xff]
  %v1524 = vld [vmem:[%s2 + $0x70] sm:$0xff]
  %v1525 = vld [vmem:[%s2 + $0x78] sm:$0xff]
  %v1526 = vld [vmem:[%s2 + $0x80] sm:$0xff]
  %v1527 = vld [vmem:[%s2 + $0x88] sm:$0xff]
  %v1528 = vld [vmem:[%s2 + $0x90] sm:$0xff]
  %v1529 = vld [vmem:[%s2 + $0x98] sm:$0xff]
  %v1530 = vld [vmem:[%s2 + $0xa0] sm:$0xff]
  %v1531 = vld [vmem:[%s2 + $0xa8] sm:$0xff]
  %v1532 = vld [vmem:[%s2 + $0xb0] sm:$0xff]
  %v1533 = vld [vmem:[%s2 + $0xb8] sm:$0xff]
  %v1534 = vld [vmem:[%s2 + $0xc0] sm:$0xff]
  %v1535 = vld [vmem:[%s2 + $0xc8] sm:$0xff]
  %v1536 = vld [vmem:[%s2 + $0xd0] sm:$0xff]
  %v1537 = vld [vmem:[%s2 + $0xd8] sm:$0xff]
  %v1538 = vld [vmem:[%s2 + $0xe0] sm:$0xff]
  %v1539 = vld [vmem:[%s2 + $0xe8] sm:$0xff]
  %v1540 = vld [vmem:[%s2 + $0xf0] sm:$0xff]
  %v1541 = vld [vmem:[%s2 + $0xf8] sm:$0xff]
  %v1574 = vunpack.c.l.b16 %v1510
  %v1575 = vunpack.c.h.b16 %v1510
  %v1576 = vunpack.c.l.b16 %v1511
  %v1577 = vunpack.c.h.b16 %v1511
  %v1578 = vunpack.c.l.b16 %v1512
  %v1579 = vunpack.c.h.b16 %v1512
  %v1580 = vunpack.c.l.b16 %v1513
  %v1581 = vunpack.c.h.b16 %v1513
  %v1582 = vunpack.c.l.b16 %v1514
  %v1583 = vunpack.c.h.b16 %v1514
  %v1584 = vunpack.c.l.b16 %v1515
  %v1585 = vunpack.c.h.b16 %v1515
  %v1586 = vunpack.c.l.b16 %v1516
  %v1587 = vunpack.c.h.b16 %v1516
  %v1588 = vunpack.c.l.b16 %v1517
  %v1589 = vunpack.c.h.b16 %v1517
  %v1590 = vunpack.c.l.b16 %v1518
  %v1591 = vunpack.c.h.b16 %v1518
  %v1592 = vunpack.c.l.b16 %v1519
  %v1593 = vunpack.c.h.b16 %v1519
  %v1594 = vunpack.c.l.b16 %v1520
  %v1595 = vunpack.c.h.b16 %v1520
  %v1596 = vunpack.c.l.b16 %v1521
  %v1597 = vunpack.c.h.b16 %v1521
  %v1598 = vunpack.c.l.b16 %v1522
  %v1599 = vunpack.c.h.b16 %v1522
  %v1600 = vunpack.c.l.b16 %v1523
  %v1601 = vunpack.c.h.b16 %v1523
  %v1602 = vunpack.c.l.b16 %v1524
  %v1603 = vunpack.c.h.b16 %v1524
  %v1604 = vunpack.c.l.b16 %v1525
  %v1605 = vunpack.c.h.b16 %v1525
  %v1606 = vunpack.c.l.b16 %v1526
  %v1607 = vunpack.c.h.b16 %v1526
  %v1608 = vunpack.c.l.b16 %v1527
  %v1609 = vunpack.c.h.b16 %v1527
  %v1610 = vunpack.c.l.b16 %v1528
  %v1611 = vunpack.c.h.b16 %v1528
  %v1612 = vunpack.c.l.b16 %v1529
  %v1613 = vunpack.c.h.b16 %v1529
  %v1614 = vunpack.c.l.b16 %v1530
  %v1615 = vunpack.c.h.b16 %v1530
  %v1616 = vunpack.c.l.b16 %v1531
  %v1617 = vunpack.c.h.b16 %v1531
  %v1618 = vunpack.c.l.b16 %v1532
  %v1619 = vunpack.c.h.b16 %v1532
  %v1620 = vunpack.c.l.b16 %v1533
  %v1621 = vunpack.c.h.b16 %v1533
  %v1622 = vunpack.c.l.b16 %v1534
  %v1623 = vunpack.c.h.b16 %v1534
  %v1624 = vunpack.c.l.b16 %v1535
  %v1625 = vunpack.c.h.b16 %v1535
  %v1626 = vunpack.c.l.b16 %v1536
  %v1627 = vunpack.c.h.b16 %v1536
  %v1628 = vunpack.c.l.b16 %v1537
  %v1629 = vunpack.c.h.b16 %v1537
  %v1630 = vunpack.c.l.b16 %v1538
  %v1631 = vunpack.c.h.b16 %v1538
  %v1632 = vunpack.c.l.b16 %v1539
  %v1633 = vunpack.c.h.b16 %v1539
  %v1634 = vunpack.c.l.b16 %v1540
  %v1635 = vunpack.c.h.b16 %v1540
  %v1636 = vunpack.c.l.b16 %v1541
  %v1637 = vunpack.c.h.b16 %v1541
  %v1638 = vpack.c.b16 %v1578, %v1574
  %v1639 = vpack.c.b16 %v1579, %v1575
  %v1640 = vpack.c.b16 %v1580, %v1576
  %v1641 = vpack.c.b16 %v1581, %v1577
  %v1642 = vpack.c.b16 %v1586, %v1582
  %v1643 = vpack.c.b16 %v1587, %v1583
  %v1644 = vpack.c.b16 %v1588, %v1584
  %v1645 = vpack.c.b16 %v1589, %v1585
  %v1646 = vpack.c.b16 %v1594, %v1590
  %v1647 = vpack.c.b16 %v1595, %v1591
  %v1648 = vpack.c.b16 %v1596, %v1592
  %v1649 = vpack.c.b16 %v1597, %v1593
  %v1650 = vpack.c.b16 %v1602, %v1598
  %v1651 = vpack.c.b16 %v1603, %v1599
  %v1652 = vpack.c.b16 %v1604, %v1600
  %v1653 = vpack.c.b16 %v1605, %v1601
  %v1654 = vpack.c.b16 %v1610, %v1606
  %v1655 = vpack.c.b16 %v1611, %v1607
  %v1656 = vpack.c.b16 %v1612, %v1608
  %v1657 = vpack.c.b16 %v1613, %v1609
  %v1658 = vpack.c.b16 %v1618, %v1614
  %v1659 = vpack.c.b16 %v1619, %v1615
  %v1660 = vpack.c.b16 %v1620, %v1616
  %v1661 = vpack.c.b16 %v1621, %v1617
  %v1662 = vpack.c.b16 %v1626, %v1622
  %v1663 = vpack.c.b16 %v1627, %v1623
  %v1664 = vpack.c.b16 %v1628, %v1624
  %v1665 = vpack.c.b16 %v1629, %v1625
  %v1666 = vpack.c.b16 %v1634, %v1630
  %v1667 = vpack.c.b16 %v1635, %v1631
  %v1668 = vpack.c.b16 %v1636, %v1632
  %v1669 = vpack.c.b16 %v1637, %v1633
  %1702 = vmatprep.subr.bf16.mxu0 %v1639
  %1703 = vmatpush1.bf16.msra.mxu0 %v1638
  %1704 = vmatprep.subr.bf16.mxu0 %v1643
  %1705 = vmatpush1.bf16.msra.mxu0 %v1642
  %1706 = vmatprep.subr.bf16.mxu0 %v1647
  %1707 = vmatpush1.bf16.msra.mxu0 %v1646
  %1708 = vmatprep.subr.bf16.mxu0 %v1651
  %1709 = vmatpush1.bf16.msra.mxu0 %v1650
  %1710 = vmatprep.subr.bf16.mxu0 %v1655
  %1711 = vmatpush1.bf16.msra.mxu0 %v1654
  %1712 = vmatprep.subr.bf16.mxu0 %v1659
  %1713 = vmatpush1.bf16.msra.mxu0 %v1658
  %1714 = vmatprep.subr.bf16.mxu0 %v1663
  %1715 = vmatpush1.bf16.msra.mxu0 %v1662
  %1716 = vmatprep.subr.bf16.mxu0 %v1667
  %1717 = vmatpush1.bf16.msra.mxu0 %v1666
  %1718 = vmatprep.subr.bf16.mxu0 0
  %1719 = vmatpush1.bf16.msra.mxu0 0
  %1720 = vmatprep.subr.bf16.mxu0 0
  %1721 = vmatpush1.bf16.msra.mxu0 0
  %1722 = vmatprep.subr.bf16.mxu0 0
  %1723 = vmatpush1.bf16.msra.mxu0 0
  %1724 = vmatprep.subr.bf16.mxu0 0
  %1725 = vmatpush1.bf16.msra.mxu0 0
  %1726 = vmatprep.subr.bf16.mxu0 0
  %1727 = vmatpush1.bf16.msra.mxu0 0
  %1728 = vmatprep.subr.bf16.mxu0 0
  %1729 = vmatpush1.bf16.msra.mxu0 0
  %1730 = vmatprep.subr.bf16.mxu0 0
  %1731 = vmatpush1.bf16.msra.mxu0 0
  %1732 = vmatprep.subr.bf16.mxu0 0
  %1733 = vmatpush1.bf16.msra.mxu0 0
  %1734 = vmatprep.mubr.bf16.mxu0 0
  %1735 = vmatmul.mubr.bf16.gmra.mrb[0].mxu0 %v1500
  %v1736 = vpop.f32.mrb[0].mxu0
  %v1737 = vadd.f32 0.0, %v1736
  %v1738 = vpop.f32.mrb[0].mxu0
  %v1739 = vadd.f32 0.0, %v1738
  %v1740 = vpop.f32.mrb[0].mxu0
  %v1741 = vpop.f32.mrb[0].mxu0
  %1742 = vdwg.mxu0
  %1743 = vmatprep.subr.bf16.mxu0 %v1641
  %1744 = vmatpush1.bf16.msra.mxu0 %v1640
  %1745 = vmatprep.subr.bf16.mxu0 %v1645
  %1746 = vmatpush1.bf16.msra.mxu0 %v1644
  %1747 = vmatprep.subr.bf16.mxu0 %v1649
  %1748 = vmatpush1.bf16.msra.mxu0 %v1648
  %1749 = vmatprep.subr.bf16.mxu0 %v1653
  %1750 = vmatpush1.bf16.msra.mxu0 %v1652
  %1751 = vmatprep.subr.bf16.mxu0 %v1657
  %1752 = vmatpush1.bf16.msra.mxu0 %v1656
  %1753 = vmatprep.subr.bf16.mxu0 %v1661
  %1754 = vmatpush1.bf16.msra.mxu0 %v1660
  %1755 = vmatprep.subr.bf16.mxu0 %v1665
  %1756 = vmatpush1.bf16.msra.mxu0 %v1664
  %1757 = vmatprep.subr.bf16.mxu0 %v1669
  %1758 = vmatpush1.bf16.msra.mxu0 %v1668
  %1759 = vmatprep.subr.bf16.mxu0 0
  %1760 = vmatpush1.bf16.msra.mxu0 0
  %1761 = vmatprep.subr.bf16.mxu0 0
  %1762 = vmatpush1.bf16.msra.mxu0 0
  %1763 = vmatprep.subr.bf16.mxu0 0
  %1764 = vmatpush1.bf16.msra.mxu0 0
  %1765 = vmatprep.subr.bf16.mxu0 0
  %1766 = vmatpush1.bf16.msra.mxu0 0
  %1767 = vmatprep.subr.bf16.mxu0 0
  %1768 = vmatpush1.bf16.msra.mxu0 0
  %1769 = vmatprep.subr.bf16.mxu0 0
  %1770 = vmatpush1.bf16.msra.mxu0 0
  %1771 = vmatprep.subr.bf16.mxu0 0
  %1772 = vmatpush1.bf16.msra.mxu0 0
  %1773 = vmatprep.subr.bf16.mxu0 0
  %1774 = vmatpush1.bf16.msra.mxu0 0
  %1775 = vmatprep.mubr.bf16.mxu0 0
  %1776 = vmatmul.mubr.bf16.gmra.mrb[0].mxu0 %v1500
  %v1777 = vpop.f32.mrb[0].mxu0
  %v1778 = vadd.f32 0.0, %v1777
  %v1779 = vpop.f32.mrb[0].mxu0
  %v1780 = vadd.f32 0.0, %v1779
  %v1781 = vpop.f32.mrb[0].mxu0
  %v1782 = vpop.f32.mrb[0].mxu0
  %1783 = vdwg.mxu0
  %v1784 = vadd.f32 %v1506, %v1737
  %v1785 = vadd.f32 %v1507, %v1739
  %v1786 = vadd.f32 %v1508, %v1778
  %v1787 = vadd.f32 %v1509, %v1780
  %v1788 = vxor.u32 %v1784, 2147483648
  %v1789 = vmul.f32 %v1788, 1.442695
  %v1790 = vpow.pop %v1789
  %v1791 = vadd.f32 %v1790, 1.0
  %v1792 = vrcp.pop %v1791
  %v1793 = vmul.f32 1.0, %v1792
  %v1794 = vxor.u32 %v1785, 2147483648
  %v1795 = vmul.f32 %v1794, 1.442695
  %v1796 = vpow.pop %v1795
  %v1797 = vadd.f32 %v1796, 1.0
  %v1798 = vrcp.pop %v1797
  %v1799 = vmul.f32 1.0, %v1798
  %v1800 = vtanh.pop %v1786
  %v1801 = vxor.u32 %v1787, 2147483648
  %v1802 = vmul.f32 %v1801, 1.442695
  %v1803 = vpow.pop %v1802
  %v1804 = vadd.f32 %v1803, 1.0
  %v1805 = vrcp.pop %v1804
  %v1806 = vmul.f32 1.0, %v1805
  %v1807 = vmul.f32 %v1799, %v1497
  %v1808 = vmul.f32 %v1793, %v1800
  %v1809 = vadd.f32 %v1807, %v1808
  %v1810 = vtanh.pop %v1809
  %v1811 = vmul.f32 %v1806, %v1810
  %v1812 = vpack.c.bf16 %v1811, %v1811
  %s1813 = scalar_lea.vmem [#allocation3], 12
  %1814 = vst [vmem:[%s1813] sm:$0xf] %v1812
  %s1815 = scalar_lea.vmem [#allocation2], 64
  %v1816 = vld [vmem:[%s1815] sm:$0xff]
  %v1817 = vld [vmem:[%s1815 + $0x8] sm:$0xff]
  %v1818 = vunpack.c.l.bf16 %v1816
  %v1819 = vunpack.c.h.bf16 %v1816
  %v1820 = vunpack.c.l.bf16 %v1817
  %v1821 = vunpack.c.h.bf16 %v1817
  %v1822 = vld [vmem:[%s2] sm:$0xff]
  %v1823 = vld [vmem:[%s2 + $0x8] sm:$0xff]
  %v1824 = vld [vmem:[%s2 + $0x10] sm:$0xff]
  %v1825 = vld [vmem:[%s2 + $0x18] sm:$0xff]
  %v1826 = vld [vmem:[%s2 + $0x20] sm:$0xff]
  %v1827 = vld [vmem:[%s2 + $0x28] sm:$0xff]
  %v1828 = vld [vmem:[%s2 + $0x30] sm:$0xff]
  %v1829 = vld [vmem:[%s2 + $0x38] sm:$0xff]
  %v1830 = vld [vmem:[%s2 + $0x40] sm:$0xff]
  %v1831 = vld [vmem:[%s2 + $0x48] sm:$0xff]
  %v1832 = vld [vmem:[%s2 + $0x50] sm:$0xff]
  %v1833 = vld [vmem:[%s2 + $0x58] sm:$0xff]
  %v1834 = vld [vmem:[%s2 + $0x60] sm:$0xff]
  %v1835 = vld [vmem:[%s2 + $0x68] sm:$0xff]
  %v1836 = vld [vmem:[%s2 + $0x70] sm:$0xff]
  %v1837 = vld [vmem:[%s2 + $0x78] sm:$0xff]
  %v1838 = vld [vmem:[%s2 + $0x80] sm:$0xff]
  %v1839 = vld [vmem:[%s2 + $0x88] sm:$0xff]
  %v1840 = vld [vmem:[%s2 + $0x90] sm:$0xff]
  %v1841 = vld [vmem:[%s2 + $0x98] sm:$0xff]
  %v1842 = vld [vmem:[%s2 + $0xa0] sm:$0xff]
  %v1843 = vld [vmem:[%s2 + $0xa8] sm:$0xff]
  %v1844 = vld [vmem:[%s2 + $0xb0] sm:$0xff]
  %v1845 = vld [vmem:[%s2 + $0xb8] sm:$0xff]
  %v1846 = vld [vmem:[%s2 + $0xc0] sm:$0xff]
  %v1847 = vld [vmem:[%s2 + $0xc8] sm:$0xff]
  %v1848 = vld [vmem:[%s2 + $0xd0] sm:$0xff]
  %v1849 = vld [vmem:[%s2 + $0xd8] sm:$0xff]
  %v1850 = vld [vmem:[%s2 + $0xe0] sm:$0xff]
  %v1851 = vld [vmem:[%s2 + $0xe8] sm:$0xff]
  %v1852 = vld [vmem:[%s2 + $0xf0] sm:$0xff]
  %v1853 = vld [vmem:[%s2 + $0xf8] sm:$0xff]
  %v1886 = vunpack.c.l.b16 %v1822
  %v1887 = vunpack.c.h.b16 %v1822
  %v1888 = vunpack.c.l.b16 %v1823
  %v1889 = vunpack.c.h.b16 %v1823
  %v1890 = vunpack.c.l.b16 %v1824
  %v1891 = vunpack.c.h.b16 %v1824
  %v1892 = vunpack.c.l.b16 %v1825
  %v1893 = vunpack.c.h.b16 %v1825
  %v1894 = vunpack.c.l.b16 %v1826
  %v1895 = vunpack.c.h.b16 %v1826
  %v1896 = vunpack.c.l.b16 %v1827
  %v1897 = vunpack.c.h.b16 %v1827
  %v1898 = vunpack.c.l.b16 %v1828
  %v1899 = vunpack.c.h.b16 %v1828
  %v1900 = vunpack.c.l.b16 %v1829
  %v1901 = vunpack.c.h.b16 %v1829
  %v1902 = vunpack.c.l.b16 %v1830
  %v1903 = vunpack.c.h.b16 %v1830
  %v1904 = vunpack.c.l.b16 %v1831
  %v1905 = vunpack.c.h.b16 %v1831
  %v1906 = vunpack.c.l.b16 %v1832
  %v1907 = vunpack.c.h.b16 %v1832
  %v1908 = vunpack.c.l.b16 %v1833
  %v1909 = vunpack.c.h.b16 %v1833
  %v1910 = vunpack.c.l.b16 %v1834
  %v1911 = vunpack.c.h.b16 %v1834
  %v1912 = vunpack.c.l.b16 %v1835
  %v1913 = vunpack.c.h.b16 %v1835
  %v1914 = vunpack.c.l.b16 %v1836
  %v1915 = vunpack.c.h.b16 %v1836
  %v1916 = vunpack.c.l.b16 %v1837
  %v1917 = vunpack.c.h.b16 %v1837
  %v1918 = vunpack.c.l.b16 %v1838
  %v1919 = vunpack.c.h.b16 %v1838
  %v1920 = vunpack.c.l.b16 %v1839
  %v1921 = vunpack.c.h.b16 %v1839
  %v1922 = vunpack.c.l.b16 %v1840
  %v1923 = vunpack.c.h.b16 %v1840
  %v1924 = vunpack.c.l.b16 %v1841
  %v1925 = vunpack.c.h.b16 %v1841
  %v1926 = vunpack.c.l.b16 %v1842
  %v1927 = vunpack.c.h.b16 %v1842
  %v1928 = vunpack.c.l.b16 %v1843
  %v1929 = vunpack.c.h.b16 %v1843
  %v1930 = vunpack.c.l.b16 %v1844
  %v1931 = vunpack.c.h.b16 %v1844
  %v1932 = vunpack.c.l.b16 %v1845
  %v1933 = vunpack.c.h.b16 %v1845
  %v1934 = vunpack.c.l.b16 %v1846
  %v1935 = vunpack.c.h.b16 %v1846
  %v1936 = vunpack.c.l.b16 %v1847
  %v1937 = vunpack.c.h.b16 %v1847
  %v1938 = vunpack.c.l.b16 %v1848
  %v1939 = vunpack.c.h.b16 %v1848
  %v1940 = vunpack.c.l.b16 %v1849
  %v1941 = vunpack.c.h.b16 %v1849
  %v1942 = vunpack.c.l.b16 %v1850
  %v1943 = vunpack.c.h.b16 %v1850
  %v1944 = vunpack.c.l.b16 %v1851
  %v1945 = vunpack.c.h.b16 %v1851
  %v1946 = vunpack.c.l.b16 %v1852
  %v1947 = vunpack.c.h.b16 %v1852
  %v1948 = vunpack.c.l.b16 %v1853
  %v1949 = vunpack.c.h.b16 %v1853
  %v1950 = vpack.c.b16 %v1890, %v1886
  %v1951 = vpack.c.b16 %v1891, %v1887
  %v1952 = vpack.c.b16 %v1892, %v1888
  %v1953 = vpack.c.b16 %v1893, %v1889
  %v1954 = vpack.c.b16 %v1898, %v1894
  %v1955 = vpack.c.b16 %v1899, %v1895
  %v1956 = vpack.c.b16 %v1900, %v1896
  %v1957 = vpack.c.b16 %v1901, %v1897
  %v1958 = vpack.c.b16 %v1906, %v1902
  %v1959 = vpack.c.b16 %v1907, %v1903
  %v1960 = vpack.c.b16 %v1908, %v1904
  %v1961 = vpack.c.b16 %v1909, %v1905
  %v1962 = vpack.c.b16 %v1914, %v1910
  %v1963 = vpack.c.b16 %v1915, %v1911
  %v1964 = vpack.c.b16 %v1916, %v1912
  %v1965 = vpack.c.b16 %v1917, %v1913
  %v1966 = vpack.c.b16 %v1922, %v1918
  %v1967 = vpack.c.b16 %v1923, %v1919
  %v1968 = vpack.c.b16 %v1924, %v1920
  %v1969 = vpack.c.b16 %v1925, %v1921
  %v1970 = vpack.c.b16 %v1930, %v1926
  %v1971 = vpack.c.b16 %v1931, %v1927
  %v1972 = vpack.c.b16 %v1932, %v1928
  %v1973 = vpack.c.b16 %v1933, %v1929
  %v1974 = vpack.c.b16 %v1938, %v1934
  %v1975 = vpack.c.b16 %v1939, %v1935
  %v1976 = vpack.c.b16 %v1940, %v1936
  %v1977 = vpack.c.b16 %v1941, %v1937
  %v1978 = vpack.c.b16 %v1946, %v1942
  %v1979 = vpack.c.b16 %v1947, %v1943
  %v1980 = vpack.c.b16 %v1948, %v1944
  %v1981 = vpack.c.b16 %v1949, %v1945
  %2014 = vmatprep.subr.bf16.mxu0 %v1951
  %2015 = vmatpush1.bf16.msra.mxu0 %v1950
  %2016 = vmatprep.subr.bf16.mxu0 %v1955
  %2017 = vmatpush1.bf16.msra.mxu0 %v1954
  %2018 = vmatprep.subr.bf16.mxu0 %v1959
  %2019 = vmatpush1.bf16.msra.mxu0 %v1958
  %2020 = vmatprep.subr.bf16.mxu0 %v1963
  %2021 = vmatpush1.bf16.msra.mxu0 %v1962
  %2022 = vmatprep.subr.bf16.mxu0 %v1967
  %2023 = vmatpush1.bf16.msra.mxu0 %v1966
  %2024 = vmatprep.subr.bf16.mxu0 %v1971
  %2025 = vmatpush1.bf16.msra.mxu0 %v1970
  %2026 = vmatprep.subr.bf16.mxu0 %v1975
  %2027 = vmatpush1.bf16.msra.mxu0 %v1974
  %2028 = vmatprep.subr.bf16.mxu0 %v1979
  %2029 = vmatpush1.bf16.msra.mxu0 %v1978
  %2030 = vmatprep.subr.bf16.mxu0 0
  %2031 = vmatpush1.bf16.msra.mxu0 0
  %2032 = vmatprep.subr.bf16.mxu0 0
  %2033 = vmatpush1.bf16.msra.mxu0 0
  %2034 = vmatprep.subr.bf16.mxu0 0
  %2035 = vmatpush1.bf16.msra.mxu0 0
  %2036 = vmatprep.subr.bf16.mxu0 0
  %2037 = vmatpush1.bf16.msra.mxu0 0
  %2038 = vmatprep.subr.bf16.mxu0 0
  %2039 = vmatpush1.bf16.msra.mxu0 0
  %2040 = vmatprep.subr.bf16.mxu0 0
  %2041 = vmatpush1.bf16.msra.mxu0 0
  %2042 = vmatprep.subr.bf16.mxu0 0
  %2043 = vmatpush1.bf16.msra.mxu0 0
  %2044 = vmatprep.subr.bf16.mxu0 0
  %2045 = vmatpush1.bf16.msra.mxu0 0
  %2046 = vmatprep.mubr.bf16.mxu0 0
  %2047 = vmatmul.mubr.bf16.gmra.mrb[0].mxu0 %v1812
  %v2048 = vpop.f32.mrb[0].mxu0
  %v2049 = vadd.f32 0.0, %v2048
  %v2050 = vpop.f32.mrb[0].mxu0
  %v2051 = vadd.f32 0.0, %v2050
  %v2052 = vpop.f32.mrb[0].mxu0
  %v2053 = vpop.f32.mrb[0].mxu0
  %2054 = vdwg.mxu0
  %2055 = vmatprep.subr.bf16.mxu0 %v1953
  %2056 = vmatpush1.bf16.msra.mxu0 %v1952
  %2057 = vmatprep.subr.bf16.mxu0 %v1957
  %2058 = vmatpush1.bf16.msra.mxu0 %v1956
  %2059 = vmatprep.subr.bf16.mxu0 %v1961
  %2060 = vmatpush1.bf16.msra.mxu0 %v1960
  %2061 = vmatprep.subr.bf16.mxu0 %v1965
  %2062 = vmatpush1.bf16.msra.mxu0 %v1964
  %2063 = vmatprep.subr.bf16.mxu0 %v1969
  %2064 = vmatpush1.bf16.msra.mxu0 %v1968
  %2065 = vmatprep.subr.bf16.mxu0 %v1973
  %2066 = vmatpush1.bf16.msra.mxu0 %v1972
  %2067 = vmatprep.subr.bf16.mxu0 %v1977
  %2068 = vmatpush1.bf16.msra.mxu0 %v1976
  %2069 = vmatprep.subr.bf16.mxu0 %v1981
  %2070 = vmatpush1.bf16.msra.mxu0 %v1980
  %2071 = vmatprep.subr.bf16.mxu0 0
  %2072 = vmatpush1.bf16.msra.mxu0 0
  %2073 = vmatprep.subr.bf16.mxu0 0
  %2074 = vmatpush1.bf16.msra.mxu0 0
  %2075 = vmatprep.subr.bf16.mxu0 0
  %2076 = vmatpush1.bf16.msra.mxu0 0
  %2077 = vmatprep.subr.bf16.mxu0 0
  %2078 = vmatpush1.bf16.msra.mxu0 0
  %2079 = vmatprep.subr.bf16.mxu0 0
  %2080 = vmatpush1.bf16.msra.mxu0 0
  %2081 = vmatprep.subr.bf16.mxu0 0
  %2082 = vmatpush1.bf16.msra.mxu0 0
  %2083 = vmatprep.subr.bf16.mxu0 0
  %2084 = vmatpush1.bf16.msra.mxu0 0
  %2085 = vmatprep.subr.bf16.mxu0 0
  %2086 = vmatpush1.bf16.msra.mxu0 0
  %2087 = vmatprep.mubr.bf16.mxu0 0
  %2088 = vmatmul.mubr.bf16.gmra.mrb[0].mxu0 %v1812
  %v2089 = vpop.f32.mrb[0].mxu0
  %v2090 = vadd.f32 0.0, %v2089
  %v2091 = vpop.f32.mrb[0].mxu0
  %v2092 = vadd.f32 0.0, %v2091
  %v2093 = vpop.f32.mrb[0].mxu0
  %v2094 = vpop.f32.mrb[0].mxu0
  %2095 = vdwg.mxu0
  %v2096 = vadd.f32 %v1818, %v2049
  %v2097 = vadd.f32 %v1819, %v2051
  %v2098 = vadd.f32 %v1820, %v2090
  %v2099 = vadd.f32 %v1821, %v2092
  %v2100 = vxor.u32 %v2096, 2147483648
  %v2101 = vmul.f32 %v2100, 1.442695
  %v2102 = vpow.pop %v2101
  %v2103 = vadd.f32 %v2102, 1.0
  %v2104 = vrcp.pop %v2103
  %v2105 = vmul.f32 1.0, %v2104
  %v2106 = vxor.u32 %v2097, 2147483648
  %v2107 = vmul.f32 %v2106, 1.442695
  %v2108 = vpow.pop %v2107
  %v2109 = vadd.f32 %v2108, 1.0
  %v2110 = vrcp.pop %v2109
  %v2111 = vmul.f32 1.0, %v2110
  %v2112 = vtanh.pop %v2098
  %v2113 = vxor.u32 %v2099, 2147483648
  %v2114 = vmul.f32 %v2113, 1.442695
  %v2115 = vpow.pop %v2114
  %v2116 = vadd.f32 %v2115, 1.0
  %v2117 = vrcp.pop %v2116
  %v2118 = vmul.f32 1.0, %v2117
  %v2119 = vmul.f32 %v2111, %v1809
  %v2120 = vmul.f32 %v2105, %v2112
  %v2121 = vadd.f32 %v2119, %v2120
  %v2122 = vtanh.pop %v2121
  %v2123 = vmul.f32 %v2118, %v2122
  %v2124 = vpack.c.bf16 %v2123, %v2123
  %s2125 = scalar_lea.vmem [#allocation3], 16
  %2126 = vst [vmem:[%s2125] sm:$0xf] %v2124
  %s2127 = scalar_lea.vmem [#allocation2], 80
  %v2128 = vld [vmem:[%s2127] sm:$0xff]
  %v2129 = vld [vmem:[%s2127 + $0x8] sm:$0xff]
  %v2130 = vunpack.c.l.bf16 %v2128
  %v2131 = vunpack.c.h.bf16 %v2128
  %v2132 = vunpack.c.l.bf16 %v2129
  %v2133 = vunpack.c.h.bf16 %v2129
  %v2134 = vld [vmem:[%s2] sm:$0xff]
  %v2135 = vld [vmem:[%s2 + $0x8] sm:$0xff]
  %v2136 = vld [vmem:[%s2 + $0x10] sm:$0xff]
  %v2137 = vld [vmem:[%s2 + $0x18] sm:$0xff]
  %v2138 = vld [vmem:[%s2 + $0x20] sm:$0xff]
  %v2139 = vld [vmem:[%s2 + $0x28] sm:$0xff]
  %v2140 = vld [vmem:[%s2 + $0x30] sm:$0xff]
  %v2141 = vld [vmem:[%s2 + $0x38] sm:$0xff]
  %v2142 = vld [vmem:[%s2 + $0x40] sm:$0xff]
  %v2143 = vld [vmem:[%s2 + $0x48] sm:$0xff]
  %v2144 = vld [vmem:[%s2 + $0x50] sm:$0xff]
  %v2145 = vld [vmem:[%s2 + $0x58] sm:$0xff]
  %v2146 = vld [vmem:[%s2 + $0x60] sm:$0xff]
  %v2147 = vld [vmem:[%s2 + $0x68] sm:$0xff]
  %v2148 = vld [vmem:[%s2 + $0x70] sm:$0xff]
  %v2149 = vld [vmem:[%s2 + $0x78] sm:$0xff]
  %v2150 = vld [vmem:[%s2 + $0x80] sm:$0xff]
  %v2151 = vld [vmem:[%s2 + $0x88] sm:$0xff]
  %v2152 = vld [vmem:[%s2 + $0x90] sm:$0xff]
  %v2153 = vld [vmem:[%s2 + $0x98] sm:$0xff]
  %v2154 = vld [vmem:[%s2 + $0xa0] sm:$0xff]
  %v2155 = vld [vmem:[%s2 + $0xa8] sm:$0xff]
  %v2156 = vld [vmem:[%s2 + $0xb0] sm:$0xff]
  %v2157 = vld [vmem:[%s2 + $0xb8] sm:$0xff]
  %v2158 = vld [vmem:[%s2 + $0xc0] sm:$0xff]
  %v2159 = vld [vmem:[%s2 + $0xc8] sm:$0xff]
  %v2160 = vld [vmem:[%s2 + $0xd0] sm:$0xff]
  %v2161 = vld [vmem:[%s2 + $0xd8] sm:$0xff]
  %v2162 = vld [vmem:[%s2 + $0xe0] sm:$0xff]
  %v2163 = vld [vmem:[%s2 + $0xe8] sm:$0xff]
  %v2164 = vld [vmem:[%s2 + $0xf0] sm:$0xff]
  %v2165 = vld [vmem:[%s2 + $0xf8] sm:$0xff]
  %v2198 = vunpack.c.l.b16 %v2134
  %v2199 = vunpack.c.h.b16 %v2134
  %v2200 = vunpack.c.l.b16 %v2135
  %v2201 = vunpack.c.h.b16 %v2135
  %v2202 = vunpack.c.l.b16 %v2136
  %v2203 = vunpack.c.h.b16 %v2136
  %v2204 = vunpack.c.l.b16 %v2137
  %v2205 = vunpack.c.h.b16 %v2137
  %v2206 = vunpack.c.l.b16 %v2138
  %v2207 = vunpack.c.h.b16 %v2138
  %v2208 = vunpack.c.l.b16 %v2139
  %v2209 = vunpack.c.h.b16 %v2139
  %v2210 = vunpack.c.l.b16 %v2140
  %v2211 = vunpack.c.h.b16 %v2140
  %v2212 = vunpack.c.l.b16 %v2141
  %v2213 = vunpack.c.h.b16 %v2141
  %v2214 = vunpack.c.l.b16 %v2142
  %v2215 = vunpack.c.h.b16 %v2142
  %v2216 = vunpack.c.l.b16 %v2143
  %v2217 = vunpack.c.h.b16 %v2143
  %v2218 = vunpack.c.l.b16 %v2144
  %v2219 = vunpack.c.h.b16 %v2144
  %v2220 = vunpack.c.l.b16 %v2145
  %v2221 = vunpack.c.h.b16 %v2145
  %v2222 = vunpack.c.l.b16 %v2146
  %v2223 = vunpack.c.h.b16 %v2146
  %v2224 = vunpack.c.l.b16 %v2147
  %v2225 = vunpack.c.h.b16 %v2147
  %v2226 = vunpack.c.l.b16 %v2148
  %v2227 = vunpack.c.h.b16 %v2148
  %v2228 = vunpack.c.l.b16 %v2149
  %v2229 = vunpack.c.h.b16 %v2149
  %v2230 = vunpack.c.l.b16 %v2150
  %v2231 = vunpack.c.h.b16 %v2150
  %v2232 = vunpack.c.l.b16 %v2151
  %v2233 = vunpack.c.h.b16 %v2151
  %v2234 = vunpack.c.l.b16 %v2152
  %v2235 = vunpack.c.h.b16 %v2152
  %v2236 = vunpack.c.l.b16 %v2153
  %v2237 = vunpack.c.h.b16 %v2153
  %v2238 = vunpack.c.l.b16 %v2154
  %v2239 = vunpack.c.h.b16 %v2154
  %v2240 = vunpack.c.l.b16 %v2155
  %v2241 = vunpack.c.h.b16 %v2155
  %v2242 = vunpack.c.l.b16 %v2156
  %v2243 = vunpack.c.h.b16 %v2156
  %v2244 = vunpack.c.l.b16 %v2157
  %v2245 = vunpack.c.h.b16 %v2157
  %v2246 = vunpack.c.l.b16 %v2158
  %v2247 = vunpack.c.h.b16 %v2158
  %v2248 = vunpack.c.l.b16 %v2159
  %v2249 = vunpack.c.h.b16 %v2159
  %v2250 = vunpack.c.l.b16 %v2160
  %v2251 = vunpack.c.h.b16 %v2160
  %v2252 = vunpack.c.l.b16 %v2161
  %v2253 = vunpack.c.h.b16 %v2161
  %v2254 = vunpack.c.l.b16 %v2162
  %v2255 = vunpack.c.h.b16 %v2162
  %v2256 = vunpack.c.l.b16 %v2163
  %v2257 = vunpack.c.h.b16 %v2163
  %v2258 = vunpack.c.l.b16 %v2164
  %v2259 = vunpack.c.h.b16 %v2164
  %v2260 = vunpack.c.l.b16 %v2165
  %v2261 = vunpack.c.h.b16 %v2165
  %v2262 = vpack.c.b16 %v2202, %v2198
  %v2263 = vpack.c.b16 %v2203, %v2199
  %v2264 = vpack.c.b16 %v2204, %v2200
  %v2265 = vpack.c.b16 %v2205, %v2201
  %v2266 = vpack.c.b16 %v2210, %v2206
  %v2267 = vpack.c.b16 %v2211, %v2207
  %v2268 = vpack.c.b16 %v2212, %v2208
  %v2269 = vpack.c.b16 %v2213, %v2209
  %v2270 = vpack.c.b16 %v2218, %v2214
  %v2271 = vpack.c.b16 %v2219, %v2215
  %v2272 = vpack.c.b16 %v2220, %v2216
  %v2273 = vpack.c.b16 %v2221, %v2217
  %v2274 = vpack.c.b16 %v2226, %v2222
  %v2275 = vpack.c.b16 %v2227, %v2223
  %v2276 = vpack.c.b16 %v2228, %v2224
  %v2277 = vpack.c.b16 %v2229, %v2225
  %v2278 = vpack.c.b16 %v2234, %v2230
  %v2279 = vpack.c.b16 %v2235, %v2231
  %v2280 = vpack.c.b16 %v2236, %v2232
  %v2281 = vpack.c.b16 %v2237, %v2233
  %v2282 = vpack.c.b16 %v2242, %v2238
  %v2283 = vpack.c.b16 %v2243, %v2239
  %v2284 = vpack.c.b16 %v2244, %v2240
  %v2285 = vpack.c.b16 %v2245, %v2241
  %v2286 = vpack.c.b16 %v2250, %v2246
  %v2287 = vpack.c.b16 %v2251, %v2247
  %v2288 = vpack.c.b16 %v2252, %v2248
  %v2289 = vpack.c.b16 %v2253, %v2249
  %v2290 = vpack.c.b16 %v2258, %v2254
  %v2291 = vpack.c.b16 %v2259, %v2255
  %v2292 = vpack.c.b16 %v2260, %v2256
  %v2293 = vpack.c.b16 %v2261, %v2257
  %2326 = vmatprep.subr.bf16.mxu0 %v2263
  %2327 = vmatpush1.bf16.msra.mxu0 %v2262
  %2328 = vmatprep.subr.bf16.mxu0 %v2267
  %2329 = vmatpush1.bf16.msra.mxu0 %v2266
  %2330 = vmatprep.subr.bf16.mxu0 %v2271
  %2331 = vmatpush1.bf16.msra.mxu0 %v2270
  %2332 = vmatprep.subr.bf16.mxu0 %v2275
  %2333 = vmatpush1.bf16.msra.mxu0 %v2274
  %2334 = vmatprep.subr.bf16.mxu0 %v2279
  %2335 = vmatpush1.bf16.msra.mxu0 %v2278
  %2336 = vmatprep.subr.bf16.mxu0 %v2283
  %2337 = vmatpush1.bf16.msra.mxu0 %v2282
  %2338 = vmatprep.subr.bf16.mxu0 %v2287
  %2339 = vmatpush1.bf16.msra.mxu0 %v2286
  %2340 = vmatprep.subr.bf16.mxu0 %v2291
  %2341 = vmatpush1.bf16.msra.mxu0 %v2290
  %2342 = vmatprep.subr.bf16.mxu0 0
  %2343 = vmatpush1.bf16.msra.mxu0 0
  %2344 = vmatprep.subr.bf16.mxu0 0
  %2345 = vmatpush1.bf16.msra.mxu0 0
  %2346 = vmatprep.subr.bf16.mxu0 0
  %2347 = vmatpush1.bf16.msra.mxu0 0
  %2348 = vmatprep.subr.bf16.mxu0 0
  %2349 = vmatpush1.bf16.msra.mxu0 0
  %2350 = vmatprep.subr.bf16.mxu0 0
  %2351 = vmatpush1.bf16.msra.mxu0 0
  %2352 = vmatprep.subr.bf16.mxu0 0
  %2353 = vmatpush1.bf16.msra.mxu0 0
  %2354 = vmatprep.subr.bf16.mxu0 0
  %2355 = vmatpush1.bf16.msra.mxu0 0
  %2356 = vmatprep.subr.bf16.mxu0 0
  %2357 = vmatpush1.bf16.msra.mxu0 0
  %2358 = vmatprep.mubr.bf16.mxu0 0
  %2359 = vmatmul.mubr.bf16.gmra.mrb[0].mxu0 %v2124
  %v2360 = vpop.f32.mrb[0].mxu0
  %v2361 = vadd.f32 0.0, %v2360
  %v2362 = vpop.f32.mrb[0].mxu0
  %v2363 = vadd.f32 0.0, %v2362
  %v2364 = vpop.f32.mrb[0].mxu0
  %v2365 = vpop.f32.mrb[0].mxu0
  %2366 = vdwg.mxu0
  %2367 = vmatprep.subr.bf16.mxu0 %v2265
  %2368 = vmatpush1.bf16.msra.mxu0 %v2264
  %2369 = vmatprep.subr.bf16.mxu0 %v2269
  %2370 = vmatpush1.bf16.msra.mxu0 %v2268
  %2371 = vmatprep.subr.bf16.mxu0 %v2273
  %2372 = vmatpush1.bf16.msra.mxu0 %v2272
  %2373 = vmatprep.subr.bf16.mxu0 %v2277
  %2374 = vmatpush1.bf16.msra.mxu0 %v2276
  %2375 = vmatprep.subr.bf16.mxu0 %v2281
  %2376 = vmatpush1.bf16.msra.mxu0 %v2280
  %2377 = vmatprep.subr.bf16.mxu0 %v2285
  %2378 = vmatpush1.bf16.msra.mxu0 %v2284
  %2379 = vmatprep.subr.bf16.mxu0 %v2289
  %2380 = vmatpush1.bf16.msra.mxu0 %v2288
  %2381 = vmatprep.subr.bf16.mxu0 %v2293
  %2382 = vmatpush1.bf16.msra.mxu0 %v2292
  %2383 = vmatprep.subr.bf16.mxu0 0
  %2384 = vmatpush1.bf16.msra.mxu0 0
  %2385 = vmatprep.subr.bf16.mxu0 0
  %2386 = vmatpush1.bf16.msra.mxu0 0
  %2387 = vmatprep.subr.bf16.mxu0 0
  %2388 = vmatpush1.bf16.msra.mxu0 0
  %2389 = vmatprep.subr.bf16.mxu0 0
  %2390 = vmatpush1.bf16.msra.mxu0 0
  %2391 = vmatprep.subr.bf16.mxu0 0
  %2392 = vmatpush1.bf16.msra.mxu0 0
  %2393 = vmatprep.subr.bf16.mxu0 0
  %2394 = vmatpush1.bf16.msra.mxu0 0
  %2395 = vmatprep.subr.bf16.mxu0 0
  %2396 = vmatpush1.bf16.msra.mxu0 0
  %2397 = vmatprep.subr.bf16.mxu0 0
  %2398 = vmatpush1.bf16.msra.mxu0 0
  %2399 = vmatprep.mubr.bf16.mxu0 0
  %2400 = vmatmul.mubr.bf16.gmra.mrb[0].mxu0 %v2124
  %v2401 = vpop.f32.mrb[0].mxu0
  %v2402 = vadd.f32 0.0, %v2401
  %v2403 = vpop.f32.mrb[0].mxu0
  %v2404 = vadd.f32 0.0, %v2403
  %v2405 = vpop.f32.mrb[0].mxu0
  %v2406 = vpop.f32.mrb[0].mxu0
  %2407 = vdwg.mxu0
  %v2408 = vadd.f32 %v2130, %v2361
  %v2409 = vadd.f32 %v2131, %v2363
  %v2410 = vadd.f32 %v2132, %v2402
  %v2411 = vadd.f32 %v2133, %v2404
  %v2412 = vxor.u32 %v2408, 2147483648
  %v2413 = vmul.f32 %v2412, 1.442695
  %v2414 = vpow.pop %v2413
  %v2415 = vadd.f32 %v2414, 1.0
  %v2416 = vrcp.pop %v2415
  %v2417 = vmul.f32 1.0, %v2416
  %v2418 = vxor.u32 %v2409, 2147483648
  %v2419 = vmul.f32 %v2418, 1.442695
  %v2420 = vpow.pop %v2419
  %v2421 = vadd.f32 %v2420, 1.0
  %v2422 = vrcp.pop %v2421
  %v2423 = vmul.f32 1.0, %v2422
  %v2424 = vtanh.pop %v2410
  %v2425 = vxor.u32 %v2411, 2147483648
  %v2426 = vmul.f32 %v2425, 1.442695
  %v2427 = vpow.pop %v2426
  %v2428 = vadd.f32 %v2427, 1.0
  %v2429 = vrcp.pop %v2428
  %v2430 = vmul.f32 1.0, %v2429
  %v2431 = vmul.f32 %v2423, %v2121
  %v2432 = vmul.f32 %v2417, %v2424
  %v2433 = vadd.f32 %v2431, %v2432
  %v2434 = vtanh.pop %v2433
  %v2435 = vmul.f32 %v2430, %v2434
  %v2436 = vpack.c.bf16 %v2435, %v2435
  %s2437 = scalar_lea.vmem [#allocation3], 20
  %2438 = vst [vmem:[%s2437] sm:$0xf] %v2436
  %s2439 = scalar_lea.vmem [#allocation2], 96
  %v2440 = vld [vmem:[%s2439] sm:$0xff]
  %v2441 = vld [vmem:[%s2439 + $0x8] sm:$0xff]
  %v2442 = vunpack.c.l.bf16 %v2440
  %v2443 = vunpack.c.h.bf16 %v2440
  %v2444 = vunpack.c.l.bf16 %v2441
  %v2445 = vunpack.c.h.bf16 %v2441
  %v2446 = vld [vmem:[%s2] sm:$0xff]
  %v2447 = vld [vmem:[%s2 + $0x8] sm:$0xff]
  %v2448 = vld [vmem:[%s2 + $0x10] sm:$0xff]
  %v2449 = vld [vmem:[%s2 + $0x18] sm:$0xff]
  %v2450 = vld [vmem:[%s2 + $0x20] sm:$0xff]
  %v2451 = vld [vmem:[%s2 + $0x28] sm:$0xff]
  %v2452 = vld [vmem:[%s2 + $0x30] sm:$0xff]
  %v2453 = vld [vmem:[%s2 + $0x38] sm:$0xff]
  %v2454 = vld [vmem:[%s2 + $0x40] sm:$0xff]
  %v2455 = vld [vmem:[%s2 + $0x48] sm:$0xff]
  %v2456 = vld [vmem:[%s2 + $0x50] sm:$0xff]
  %v2457 = vld [vmem:[%s2 + $0x58] sm:$0xff]
  %v2458 = vld [vmem:[%s2 + $0x60] sm:$0xff]
  %v2459 = vld [vmem:[%s2 + $0x68] sm:$0xff]
  %v2460 = vld [vmem:[%s2 + $0x70] sm:$0xff]
  %v2461 = vld [vmem:[%s2 + $0x78] sm:$0xff]
  %v2462 = vld [vmem:[%s2 + $0x80] sm:$0xff]
  %v2463 = vld [vmem:[%s2 + $0x88] sm:$0xff]
  %v2464 = vld [vmem:[%s2 + $0x90] sm:$0xff]
  %v2465 = vld [vmem:[%s2 + $0x98] sm:$0xff]
  %v2466 = vld [vmem:[%s2 + $0xa0] sm:$0xff]
  %v2467 = vld [vmem:[%s2 + $0xa8] sm:$0xff]
  %v2468 = vld [vmem:[%s2 + $0xb0] sm:$0xff]
  %v2469 = vld [vmem:[%s2 + $0xb8] sm:$0xff]
  %v2470 = vld [vmem:[%s2 + $0xc0] sm:$0xff]
  %v2471 = vld [vmem:[%s2 + $0xc8] sm:$0xff]
  %v2472 = vld [vmem:[%s2 + $0xd0] sm:$0xff]
  %v2473 = vld [vmem:[%s2 + $0xd8] sm:$0xff]
  %v2474 = vld [vmem:[%s2 + $0xe0] sm:$0xff]
  %v2475 = vld [vmem:[%s2 + $0xe8] sm:$0xff]
  %v2476 = vld [vmem:[%s2 + $0xf0] sm:$0xff]
  %v2477 = vld [vmem:[%s2 + $0xf8] sm:$0xff]
  %v2510 = vunpack.c.l.b16 %v2446
  %v2511 = vunpack.c.h.b16 %v2446
  %v2512 = vunpack.c.l.b16 %v2447
  %v2513 = vunpack.c.h.b16 %v2447
  %v2514 = vunpack.c.l.b16 %v2448
  %v2515 = vunpack.c.h.b16 %v2448
  %v2516 = vunpack.c.l.b16 %v2449
  %v2517 = vunpack.c.h.b16 %v2449
  %v2518 = vunpack.c.l.b16 %v2450
  %v2519 = vunpack.c.h.b16 %v2450
  %v2520 = vunpack.c.l.b16 %v2451
  %v2521 = vunpack.c.h.b16 %v2451
  %v2522 = vunpack.c.l.b16 %v2452
  %v2523 = vunpack.c.h.b16 %v2452
  %v2524 = vunpack.c.l.b16 %v2453
  %v2525 = vunpack.c.h.b16 %v2453
  %v2526 = vunpack.c.l.b16 %v2454
  %v2527 = vunpack.c.h.b16 %v2454
  %v2528 = vunpack.c.l.b16 %v2455
  %v2529 = vunpack.c.h.b16 %v2455
  %v2530 = vunpack.c.l.b16 %v2456
  %v2531 = vunpack.c.h.b16 %v2456
  %v2532 = vunpack.c.l.b16 %v2457
  %v2533 = vunpack.c.h.b16 %v2457
  %v2534 = vunpack.c.l.b16 %v2458
  %v2535 = vunpack.c.h.b16 %v2458
  %v2536 = vunpack.c.l.b16 %v2459
  %v2537 = vunpack.c.h.b16 %v2459
  %v2538 = vunpack.c.l.b16 %v2460
  %v2539 = vunpack.c.h.b16 %v2460
  %v2540 = vunpack.c.l.b16 %v2461
  %v2541 = vunpack.c.h.b16 %v2461
  %v2542 = vunpack.c.l.b16 %v2462
  %v2543 = vunpack.c.h.b16 %v2462
  %v2544 = vunpack.c.l.b16 %v2463
  %v2545 = vunpack.c.h.b16 %v2463
  %v2546 = vunpack.c.l.b16 %v2464
  %v2547 = vunpack.c.h.b16 %v2464
  %v2548 = vunpack.c.l.b16 %v2465
  %v2549 = vunpack.c.h.b16 %v2465
  %v2550 = vunpack.c.l.b16 %v2466
  %v2551 = vunpack.c.h.b16 %v2466
  %v2552 = vunpack.c.l.b16 %v2467
  %v2553 = vunpack.c.h.b16 %v2467
  %v2554 = vunpack.c.l.b16 %v2468
  %v2555 = vunpack.c.h.b16 %v2468
  %v2556 = vunpack.c.l.b16 %v2469
  %v2557 = vunpack.c.h.b16 %v2469
  %v2558 = vunpack.c.l.b16 %v2470
  %v2559 = vunpack.c.h.b16 %v2470
  %v2560 = vunpack.c.l.b16 %v2471
  %v2561 = vunpack.c.h.b16 %v2471
  %v2562 = vunpack.c.l.b16 %v2472
  %v2563 = vunpack.c.h.b16 %v2472
  %v2564 = vunpack.c.l.b16 %v2473
  %v2565 = vunpack.c.h.b16 %v2473
  %v2566 = vunpack.c.l.b16 %v2474
  %v2567 = vunpack.c.h.b16 %v2474
  %v2568 = vunpack.c.l.b16 %v2475
  %v2569 = vunpack.c.h.b16 %v2475
  %v2570 = vunpack.c.l.b16 %v2476
  %v2571 = vunpack.c.h.b16 %v2476
  %v2572 = vunpack.c.l.b16 %v2477
  %v2573 = vunpack.c.h.b16 %v2477
  %v2574 = vpack.c.b16 %v2514, %v2510
  %v2575 = vpack.c.b16 %v2515, %v2511
  %v2576 = vpack.c.b16 %v2516, %v2512
  %v2577 = vpack.c.b16 %v2517, %v2513
  %v2578 = vpack.c.b16 %v2522, %v2518
  %v2579 = vpack.c.b16 %v2523, %v2519
  %v2580 = vpack.c.b16 %v2524, %v2520
  %v2581 = vpack.c.b16 %v2525, %v2521
  %v2582 = vpack.c.b16 %v2530, %v2526
  %v2583 = vpack.c.b16 %v2531, %v2527
  %v2584 = vpack.c.b16 %v2532, %v2528
  %v2585 = vpack.c.b16 %v2533, %v2529
  %v2586 = vpack.c.b16 %v2538, %v2534
  %v2587 = vpack.c.b16 %v2539, %v2535
  %v2588 = vpack.c.b16 %v2540, %v2536
  %v2589 = vpack.c.b16 %v2541, %v2537
  %v2590 = vpack.c.b16 %v2546, %v2542
  %v2591 = vpack.c.b16 %v2547, %v2543
  %v2592 = vpack.c.b16 %v2548, %v2544
  %v2593 = vpack.c.b16 %v2549, %v2545
  %v2594 = vpack.c.b16 %v2554, %v2550
  %v2595 = vpack.c.b16 %v2555, %v2551
  %v2596 = vpack.c.b16 %v2556, %v2552
  %v2597 = vpack.c.b16 %v2557, %v2553
  %v2598 = vpack.c.b16 %v2562, %v2558
  %v2599 = vpack.c.b16 %v2563, %v2559
  %v2600 = vpack.c.b16 %v2564, %v2560
  %v2601 = vpack.c.b16 %v2565, %v2561
  %v2602 = vpack.c.b16 %v2570, %v2566
  %v2603 = vpack.c.b16 %v2571, %v2567
  %v2604 = vpack.c.b16 %v2572, %v2568
  %v2605 = vpack.c.b16 %v2573, %v2569
  %2638 = vmatprep.subr.bf16.mxu0 %v2575
  %2639 = vmatpush1.bf16.msra.mxu0 %v2574
  %2640 = vmatprep.subr.bf16.mxu0 %v2579
  %2641 = vmatpush1.bf16.msra.mxu0 %v2578
  %2642 = vmatprep.subr.bf16.mxu0 %v2583
  %2643 = vmatpush1.bf16.msra.mxu0 %v2582
  %2644 = vmatprep.subr.bf16.mxu0 %v2587
  %2645 = vmatpush1.bf16.msra.mxu0 %v2586
  %2646 = vmatprep.subr.bf16.mxu0 %v2591
  %2647 = vmatpush1.bf16.msra.mxu0 %v2590
  %2648 = vmatprep.subr.bf16.mxu0 %v2595
  %2649 = vmatpush1.bf16.msra.mxu0 %v2594
  %2650 = vmatprep.subr.bf16.mxu0 %v2599
  %2651 = vmatpush1.bf16.msra.mxu0 %v2598
  %2652 = vmatprep.subr.bf16.mxu0 %v2603
  %2653 = vmatpush1.bf16.msra.mxu0 %v2602
  %2654 = vmatprep.subr.bf16.mxu0 0
  %2655 = vmatpush1.bf16.msra.mxu0 0
  %2656 = vmatprep.subr.bf16.mxu0 0
  %2657 = vmatpush1.bf16.msra.mxu0 0
  %2658 = vmatprep.subr.bf16.mxu0 0
  %2659 = vmatpush1.bf16.msra.mxu0 0
  %2660 = vmatprep.subr.bf16.mxu0 0
  %2661 = vmatpush1.bf16.msra.mxu0 0
  %2662 = vmatprep.subr.bf16.mxu0 0
  %2663 = vmatpush1.bf16.msra.mxu0 0
  %2664 = vmatprep.subr.bf16.mxu0 0
  %2665 = vmatpush1.bf16.msra.mxu0 0
  %2666 = vmatprep.subr.bf16.mxu0 0
  %2667 = vmatpush1.bf16.msra.mxu0 0
  %2668 = vmatprep.subr.bf16.mxu0 0
  %2669 = vmatpush1.bf16.msra.mxu0 0
  %2670 = vmatprep.mubr.bf16.mxu0 0
  %2671 = vmatmul.mubr.bf16.gmra.mrb[0].mxu0 %v2436
  %v2672 = vpop.f32.mrb[0].mxu0
  %v2673 = vadd.f32 0.0, %v2672
  %v2674 = vpop.f32.mrb[0].mxu0
  %v2675 = vadd.f32 0.0, %v2674
  %v2676 = vpop.f32.mrb[0].mxu0
  %v2677 = vpop.f32.mrb[0].mxu0
  %2678 = vdwg.mxu0
  %2679 = vmatprep.subr.bf16.mxu0 %v2577
  %2680 = vmatpush1.bf16.msra.mxu0 %v2576
  %2681 = vmatprep.subr.bf16.mxu0 %v2581
  %2682 = vmatpush1.bf16.msra.mxu0 %v2580
  %2683 = vmatprep.subr.bf16.mxu0 %v2585
  %2684 = vmatpush1.bf16.msra.mxu0 %v2584
  %2685 = vmatprep.subr.bf16.mxu0 %v2589
  %2686 = vmatpush1.bf16.msra.mxu0 %v2588
  %2687 = vmatprep.subr.bf16.mxu0 %v2593
  %2688 = vmatpush1.bf16.msra.mxu0 %v2592
  %2689 = vmatprep.subr.bf16.mxu0 %v2597
  %2690 = vmatpush1.bf16.msra.mxu0 %v2596
  %2691 = vmatprep.subr.bf16.mxu0 %v2601
  %2692 = vmatpush1.bf16.msra.mxu0 %v2600
  %2693 = vmatprep.subr.bf16.mxu0 %v2605
  %2694 = vmatpush1.bf16.msra.mxu0 %v2604
  %2695 = vmatprep.subr.bf16.mxu0 0
  %2696 = vmatpush1.bf16.msra.mxu0 0
  %2697 = vmatprep.subr.bf16.mxu0 0
  %2698 = vmatpush1.bf16.msra.mxu0 0
  %2699 = vmatprep.subr.bf16.mxu0 0
  %2700 = vmatpush1.bf16.msra.mxu0 0
  %2701 = vmatprep.subr.bf16.mxu0 0
  %2702 = vmatpush1.bf16.msra.mxu0 0
  %2703 = vmatprep.subr.bf16.mxu0 0
  %2704 = vmatpush1.bf16.msra.mxu0 0
  %2705 = vmatprep.subr.bf16.mxu0 0
  %2706 = vmatpush1.bf16.msra.mxu0 0
  %2707 = vmatprep.subr.bf16.mxu0 0
  %2708 = vmatpush1.bf16.msra.mxu0 0
  %2709 = vmatprep.subr.bf16.mxu0 0
  %2710 = vmatpush1.bf16.msra.mxu0 0
  %2711 = vmatprep.mubr.bf16.mxu0 0
  %2712 = vmatmul.mubr.bf16.gmra.mrb[0].mxu0 %v2436
  %v2713 = vpop.f32.mrb[0].mxu0
  %v2714 = vadd.f32 0.0, %v2713
  %v2715 = vpop.f32.mrb[0].mxu0
  %v2716 = vadd.f32 0.0, %v2715
  %v2717 = vpop.f32.mrb[0].mxu0
  %v2718 = vpop.f32.mrb[0].mxu0
  %2719 = vdwg.mxu0
  %v2720 = vadd.f32 %v2442, %v2673
  %v2721 = vadd.f32 %v2443, %v2675
  %v2722 = vadd.f32 %v2444, %v2714
  %v2723 = vadd.f32 %v2445, %v2716
  %v2724 = vxor.u32 %v2720, 2147483648
  %v2725 = vmul.f32 %v2724, 1.442695
  %v2726 = vpow.pop %v2725
  %v2727 = vadd.f32 %v2726, 1.0
  %v2728 = vrcp.pop %v2727
  %v2729 = vmul.f32 1.0, %v2728
  %v2730 = vxor.u32 %v2721, 2147483648
  %v2731 = vmul.f32 %v2730, 1.442695
  %v2732 = vpow.pop %v2731
  %v2733 = vadd.f32 %v2732, 1.0
  %v2734 = vrcp.pop %v2733
  %v2735 = vmul.f32 1.0, %v2734
  %v2736 = vtanh.pop %v2722
  %v2737 = vxor.u32 %v2723, 2147483648
  %v2738 = vmul.f32 %v2737, 1.442695
  %v2739 = vpow.pop %v2738
  %v2740 = vadd.f32 %v2739, 1.0
  %v2741 = vrcp.pop %v2740
  %v2742 = vmul.f32 1.0, %v2741
  %v2743 = vmul.f32 %v2735, %v2433
  %v2744 = vmul.f32 %v2729, %v2736
  %v2745 = vadd.f32 %v2743, %v2744
  %v2746 = vtanh.pop %v2745
  %v2747 = vmul.f32 %v2742, %v2746
  %v2748 = vpack.c.bf16 %v2747, %v2747
  %s2749 = scalar_lea.vmem [#allocation3], 24
  %2750 = vst [vmem:[%s2749] sm:$0xf] %v2748
  %s2751 = scalar_lea.vmem [#allocation2], 112
  %v2752 = vld [vmem:[%s2751] sm:$0xff]
  %v2753 = vld [vmem:[%s2751 + $0x8] sm:$0xff]
  %v2754 = vunpack.c.l.bf16 %v2752
  %v2755 = vunpack.c.h.bf16 %v2752
  %v2756 = vunpack.c.l.bf16 %v2753
  %v2757 = vunpack.c.h.bf16 %v2753
  %v2758 = vld [vmem:[%s2] sm:$0xff]
  %v2759 = vld [vmem:[%s2 + $0x8] sm:$0xff]
  %v2760 = vld [vmem:[%s2 + $0x10] sm:$0xff]
  %v2761 = vld [vmem:[%s2 + $0x18] sm:$0xff]
  %v2762 = vld [vmem:[%s2 + $0x20] sm:$0xff]
  %v2763 = vld [vmem:[%s2 + $0x28] sm:$0xff]
  %v2764 = vld [vmem:[%s2 + $0x30] sm:$0xff]
  %v2765 = vld [vmem:[%s2 + $0x38] sm:$0xff]
  %v2766 = vld [vmem:[%s2 + $0x40] sm:$0xff]
  %v2767 = vld [vmem:[%s2 + $0x48] sm:$0xff]
  %v2768 = vld [vmem:[%s2 + $0x50] sm:$0xff]
  %v2769 = vld [vmem:[%s2 + $0x58] sm:$0xff]
  %v2770 = vld [vmem:[%s2 + $0x60] sm:$0xff]
  %v2771 = vld [vmem:[%s2 + $0x68] sm:$0xff]
  %v2772 = vld [vmem:[%s2 + $0x70] sm:$0xff]
  %v2773 = vld [vmem:[%s2 + $0x78] sm:$0xff]
  %v2774 = vld [vmem:[%s2 + $0x80] sm:$0xff]
  %v2775 = vld [vmem:[%s2 + $0x88] sm:$0xff]
  %v2776 = vld [vmem:[%s2 + $0x90] sm:$0xff]
  %v2777 = vld [vmem:[%s2 + $0x98] sm:$0xff]
  %v2778 = vld [vmem:[%s2 + $0xa0] sm:$0xff]
  %v2779 = vld [vmem:[%s2 + $0xa8] sm:$0xff]
  %v2780 = vld [vmem:[%s2 + $0xb0] sm:$0xff]
  %v2781 = vld [vmem:[%s2 + $0xb8] sm:$0xff]
  %v2782 = vld [vmem:[%s2 + $0xc0] sm:$0xff]
  %v2783 = vld [vmem:[%s2 + $0xc8] sm:$0xff]
  %v2784 = vld [vmem:[%s2 + $0xd0] sm:$0xff]
  %v2785 = vld [vmem:[%s2 + $0xd8] sm:$0xff]
  %v2786 = vld [vmem:[%s2 + $0xe0] sm:$0xff]
  %v2787 = vld [vmem:[%s2 + $0xe8] sm:$0xff]
  %v2788 = vld [vmem:[%s2 + $0xf0] sm:$0xff]
  %v2789 = vld [vmem:[%s2 + $0xf8] sm:$0xff]
  %v2822 = vunpack.c.l.b16 %v2758
  %v2823 = vunpack.c.h.b16 %v2758
  %v2824 = vunpack.c.l.b16 %v2759
  %v2825 = vunpack.c.h.b16 %v2759
  %v2826 = vunpack.c.l.b16 %v2760
  %v2827 = vunpack.c.h.b16 %v2760
  %v2828 = vunpack.c.l.b16 %v2761
  %v2829 = vunpack.c.h.b16 %v2761
  %v2830 = vunpack.c.l.b16 %v2762
  %v2831 = vunpack.c.h.b16 %v2762
  %v2832 = vunpack.c.l.b16 %v2763
  %v2833 = vunpack.c.h.b16 %v2763
  %v2834 = vunpack.c.l.b16 %v2764
  %v2835 = vunpack.c.h.b16 %v2764
  %v2836 = vunpack.c.l.b16 %v2765
  %v2837 = vunpack.c.h.b16 %v2765
  %v2838 = vunpack.c.l.b16 %v2766
  %v2839 = vunpack.c.h.b16 %v2766
  %v2840 = vunpack.c.l.b16 %v2767
  %v2841 = vunpack.c.h.b16 %v2767
  %v2842 = vunpack.c.l.b16 %v2768
  %v2843 = vunpack.c.h.b16 %v2768
  %v2844 = vunpack.c.l.b16 %v2769
  %v2845 = vunpack.c.h.b16 %v2769
  %v2846 = vunpack.c.l.b16 %v2770
  %v2847 = vunpack.c.h.b16 %v2770
  %v2848 = vunpack.c.l.b16 %v2771
  %v2849 = vunpack.c.h.b16 %v2771
  %v2850 = vunpack.c.l.b16 %v2772
  %v2851 = vunpack.c.h.b16 %v2772
  %v2852 = vunpack.c.l.b16 %v2773
  %v2853 = vunpack.c.h.b16 %v2773
  %v2854 = vunpack.c.l.b16 %v2774
  %v2855 = vunpack.c.h.b16 %v2774
  %v2856 = vunpack.c.l.b16 %v2775
  %v2857 = vunpack.c.h.b16 %v2775
  %v2858 = vunpack.c.l.b16 %v2776
  %v2859 = vunpack.c.h.b16 %v2776
  %v2860 = vunpack.c.l.b16 %v2777
  %v2861 = vunpack.c.h.b16 %v2777
  %v2862 = vunpack.c.l.b16 %v2778
  %v2863 = vunpack.c.h.b16 %v2778
  %v2864 = vunpack.c.l.b16 %v2779
  %v2865 = vunpack.c.h.b16 %v2779
  %v2866 = vunpack.c.l.b16 %v2780
  %v2867 = vunpack.c.h.b16 %v2780
  %v2868 = vunpack.c.l.b16 %v2781
  %v2869 = vunpack.c.h.b16 %v2781
  %v2870 = vunpack.c.l.b16 %v2782
  %v2871 = vunpack.c.h.b16 %v2782
  %v2872 = vunpack.c.l.b16 %v2783
  %v2873 = vunpack.c.h.b16 %v2783
  %v2874 = vunpack.c.l.b16 %v2784
  %v2875 = vunpack.c.h.b16 %v2784
  %v2876 = vunpack.c.l.b16 %v2785
  %v2877 = vunpack.c.h.b16 %v2785
  %v2878 = vunpack.c.l.b16 %v2786
  %v2879 = vunpack.c.h.b16 %v2786
  %v2880 = vunpack.c.l.b16 %v2787
  %v2881 = vunpack.c.h.b16 %v2787
  %v2882 = vunpack.c.l.b16 %v2788
  %v2883 = vunpack.c.h.b16 %v2788
  %v2884 = vunpack.c.l.b16 %v2789
  %v2885 = vunpack.c.h.b16 %v2789
  %v2886 = vpack.c.b16 %v2826, %v2822
  %v2887 = vpack.c.b16 %v2827, %v2823
  %v2888 = vpack.c.b16 %v2828, %v2824
  %v2889 = vpack.c.b16 %v2829, %v2825
  %v2890 = vpack.c.b16 %v2834, %v2830
  %v2891 = vpack.c.b16 %v2835, %v2831
  %v2892 = vpack.c.b16 %v2836, %v2832
  %v2893 = vpack.c.b16 %v2837, %v2833
  %v2894 = vpack.c.b16 %v2842, %v2838
  %v2895 = vpack.c.b16 %v2843, %v2839
  %v2896 = vpack.c.b16 %v2844, %v2840
  %v2897 = vpack.c.b16 %v2845, %v2841
  %v2898 = vpack.c.b16 %v2850, %v2846
  %v2899 = vpack.c.b16 %v2851, %v2847
  %v2900 = vpack.c.b16 %v2852, %v2848
  %v2901 = vpack.c.b16 %v2853, %v2849
  %v2902 = vpack.c.b16 %v2858, %v2854
  %v2903 = vpack.c.b16 %v2859, %v2855
  %v2904 = vpack.c.b16 %v2860, %v2856
  %v2905 = vpack.c.b16 %v2861, %v2857
  %v2906 = vpack.c.b16 %v2866, %v2862
  %v2907 = vpack.c.b16 %v2867, %v2863
  %v2908 = vpack.c.b16 %v2868, %v2864
  %v2909 = vpack.c.b16 %v2869, %v2865
  %v2910 = vpack.c.b16 %v2874, %v2870
  %v2911 = vpack.c.b16 %v2875, %v2871
  %v2912 = vpack.c.b16 %v2876, %v2872
  %v2913 = vpack.c.b16 %v2877, %v2873
  %v2914 = vpack.c.b16 %v2882, %v2878
  %v2915 = vpack.c.b16 %v2883, %v2879
  %v2916 = vpack.c.b16 %v2884, %v2880
  %v2917 = vpack.c.b16 %v2885, %v2881
  %2950 = vmatprep.subr.bf16.mxu0 %v2887
  %2951 = vmatpush1.bf16.msra.mxu0 %v2886
  %2952 = vmatprep.subr.bf16.mxu0 %v2891
  %2953 = vmatpush1.bf16.msra.mxu0 %v2890
  %2954 = vmatprep.subr.bf16.mxu0 %v2895
  %2955 = vmatpush1.bf16.msra.mxu0 %v2894
  %2956 = vmatprep.subr.bf16.mxu0 %v2899
  %2957 = vmatpush1.bf16.msra.mxu0 %v2898
  %2958 = vmatprep.subr.bf16.mxu0 %v2903
  %2959 = vmatpush1.bf16.msra.mxu0 %v2902
  %2960 = vmatprep.subr.bf16.mxu0 %v2907
  %2961 = vmatpush1.bf16.msra.mxu0 %v2906
  %2962 = vmatprep.subr.bf16.mxu0 %v2911
  %2963 = vmatpush1.bf16.msra.mxu0 %v2910
  %2964 = vmatprep.subr.bf16.mxu0 %v2915
  %2965 = vmatpush1.bf16.msra.mxu0 %v2914
  %2966 = vmatprep.subr.bf16.mxu0 0
  %2967 = vmatpush1.bf16.msra.mxu0 0
  %2968 = vmatprep.subr.bf16.mxu0 0
  %2969 = vmatpush1.bf16.msra.mxu0 0
  %2970 = vmatprep.subr.bf16.mxu0 0
  %2971 = vmatpush1.bf16.msra.mxu0 0
  %2972 = vmatprep.subr.bf16.mxu0 0
  %2973 = vmatpush1.bf16.msra.mxu0 0
  %2974 = vmatprep.subr.bf16.mxu0 0
  %2975 = vmatpush1.bf16.msra.mxu0 0
  %2976 = vmatprep.subr.bf16.mxu0 0
  %2977 = vmatpush1.bf16.msra.mxu0 0
  %2978 = vmatprep.subr.bf16.mxu0 0
  %2979 = vmatpush1.bf16.msra.mxu0 0
  %2980 = vmatprep.subr.bf16.mxu0 0
  %2981 = vmatpush1.bf16.msra.mxu0 0
  %2982 = vmatprep.mubr.bf16.mxu0 0
  %2983 = vmatmul.mubr.bf16.gmra.mrb[0].mxu0 %v2748
  %v2984 = vpop.f32.mrb[0].mxu0
  %v2985 = vadd.f32 0.0, %v2984
  %v2986 = vpop.f32.mrb[0].mxu0
  %v2987 = vadd.f32 0.0, %v2986
  %v2988 = vpop.f32.mrb[0].mxu0
  %v2989 = vpop.f32.mrb[0].mxu0
  %2990 = vdwg.mxu0
  %2991 = vmatprep.subr.bf16.mxu0 %v2889
  %2992 = vmatpush1.bf16.msra.mxu0 %v2888
  %2993 = vmatprep.subr.bf16.mxu0 %v2893
  %2994 = vmatpush1.bf16.msra.mxu0 %v2892
  %2995 = vmatprep.subr.bf16.mxu0 %v2897
  %2996 = vmatpush1.bf16.msra.mxu0 %v2896
  %2997 = vmatprep.subr.bf16.mxu0 %v2901
  %2998 = vmatpush1.bf16.msra.mxu0 %v2900
  %2999 = vmatprep.subr.bf16.mxu0 %v2905
  %3000 = vmatpush1.bf16.msra.mxu0 %v2904
  %3001 = vmatprep.subr.bf16.mxu0 %v2909
  %3002 = vmatpush1.bf16.msra.mxu0 %v2908
  %3003 = vmatprep.subr.bf16.mxu0 %v2913
  %3004 = vmatpush1.bf16.msra.mxu0 %v2912
  %3005 = vmatprep.subr.bf16.mxu0 %v2917
  %3006 = vmatpush1.bf16.msra.mxu0 %v2916
  %3007 = vmatprep.subr.bf16.mxu0 0
  %3008 = vmatpush1.bf16.msra.mxu0 0
  %3009 = vmatprep.subr.bf16.mxu0 0
  %3010 = vmatpush1.bf16.msra.mxu0 0
  %3011 = vmatprep.subr.bf16.mxu0 0
  %3012 = vmatpush1.bf16.msra.mxu0 0
  %3013 = vmatprep.subr.bf16.mxu0 0
  %3014 = vmatpush1.bf16.msra.mxu0 0
  %3015 = vmatprep.subr.bf16.mxu0 0
  %3016 = vmatpush1.bf16.msra.mxu0 0
  %3017 = vmatprep.subr.bf16.mxu0 0
  %3018 = vmatpush1.bf16.msra.mxu0 0
  %3019 = vmatprep.subr.bf16.mxu0 0
  %3020 = vmatpush1.bf16.msra.mxu0 0
  %3021 = vmatprep.subr.bf16.mxu0 0
  %3022 = vmatpush1.bf16.msra.mxu0 0
  %3023 = vmatprep.mubr.bf16.mxu0 0
  %3024 = vmatmul.mubr.bf16.gmra.mrb[0].mxu0 %v2748
  %v3025 = vpop.f32.mrb[0].mxu0
  %v3026 = vadd.f32 0.0, %v3025
  %v3027 = vpop.f32.mrb[0].mxu0
  %v3028 = vadd.f32 0.0, %v3027
  %v3029 = vpop.f32.mrb[0].mxu0
  %v3030 = vpop.f32.mrb[0].mxu0
  %3031 = vdwg.mxu0
  %v3032 = vadd.f32 %v2754, %v2985
  %v3033 = vadd.f32 %v2755, %v2987
  %v3034 = vadd.f32 %v2756, %v3026
  %v3035 = vadd.f32 %v2757, %v3028
  %v3036 = vxor.u32 %v3032, 2147483648
  %v3037 = vmul.f32 %v3036, 1.442695
  %v3038 = vpow.pop %v3037
  %v3039 = vadd.f32 %v3038, 1.0
  %v3040 = vrcp.pop %v3039
  %v3041 = vmul.f32 1.0, %v3040
  %v3042 = vxor.u32 %v3033, 2147483648
  %v3043 = vmul.f32 %v3042, 1.442695
  %v3044 = vpow.pop %v3043
  %v3045 = vadd.f32 %v3044, 1.0
  %v3046 = vrcp.pop %v3045
  %v3047 = vmul.f32 1.0, %v3046
  %v3048 = vtanh.pop %v3034
  %v3049 = vxor.u32 %v3035, 2147483648
  %v3050 = vmul.f32 %v3049, 1.442695
  %v3051 = vpow.pop %v3050
  %v3052 = vadd.f32 %v3051, 1.0
  %v3053 = vrcp.pop %v3052
  %v3054 = vmul.f32 1.0, %v3053
  %v3055 = vmul.f32 %v3047, %v2745
  %v3056 = vmul.f32 %v3041, %v3048
  %v3057 = vadd.f32 %v3055, %v3056
  %v3058 = vtanh.pop %v3057
  %v3059 = vmul.f32 %v3054, %v3058
  %v3060 = vpack.c.bf16 %v3059, %v3059
  %s3061 = scalar_lea.vmem [#allocation3], 28
  %3062 = vst [vmem:[%s3061] sm:$0xf] %v3060
  %v3063 = vld [vmem:[%s6] sm:$0xf]
  %v3064 = vld [vmem:[#allocation3] sm:$0xf]
  %v3065 = vld [vmem:[#allocation3 + $0x4] sm:$0xf]
  %v3066 = vld [vmem:[#allocation3 + $0x8] sm:$0xf]
  %v3067 = vld [vmem:[#allocation3 + $0xc] sm:$0xf]
  %v3068 = vld [vmem:[#allocation3 + $0x10] sm:$0xf]
  %v3069 = vld [vmem:[#allocation3 + $0x14] sm:$0xf]
  %v3070 = vld [vmem:[#allocation3 + $0x18] sm:$0xf]
  %v3071 = vld [vmem:[#allocation3 + $0x1c] sm:$0xf]
  %v3072 = vld [vmem:[%s4] sm:$0xff]
  %v3073 = vld [vmem:[%s4 + $0x8] sm:$0xff]
  %v3074 = vld [vmem:[%s4 + $0x10] sm:$0xff]
  %v3075 = vld [vmem:[%s4 + $0x18] sm:$0xff]
  %v3076 = vld [vmem:[%s4 + $0x20] sm:$0xff]
  %v3077 = vld [vmem:[%s4 + $0x28] sm:$0xff]
  %v3078 = vld [vmem:[%s4 + $0x30] sm:$0xff]
  %v3079 = vld [vmem:[%s4 + $0x38] sm:$0xff]
  %v3080 = vld [vmem:[%s4 + $0x40] sm:$0xff]
  %v3081 = vld [vmem:[%s4 + $0x48] sm:$0xff]
  %v3082 = vld [vmem:[%s4 + $0x50] sm:$0xff]
  %v3083 = vld [vmem:[%s4 + $0x58] sm:$0xff]
  %v3084 = vld [vmem:[%s4 + $0x60] sm:$0xff]
  %v3085 = vld [vmem:[%s4 + $0x68] sm:$0xff]
  %v3086 = vld [vmem:[%s4 + $0x70] sm:$0xff]
  %v3087 = vld [vmem:[%s4 + $0x78] sm:$0xff]
  %v3088 = vld [vmem:[%s4 + $0x80] sm:$0xff]
  %v3089 = vld [vmem:[%s4 + $0x88] sm:$0xff]
  %v3090 = vld [vmem:[%s4 + $0x90] sm:$0xff]
  %v3091 = vld [vmem:[%s4 + $0x98] sm:$0xff]
  %v3092 = vld [vmem:[%s4 + $0xa0] sm:$0xff]
  %v3093 = vld [vmem:[%s4 + $0xa8] sm:$0xff]
  %v3094 = vld [vmem:[%s4 + $0xb0] sm:$0xff]
  %v3095 = vld [vmem:[%s4 + $0xb8] sm:$0xff]
  %v3096 = vld [vmem:[%s4 + $0xc0] sm:$0xff]
  %v3097 = vld [vmem:[%s4 + $0xc8] sm:$0xff]
  %v3098 = vld [vmem:[%s4 + $0xd0] sm:$0xff]
  %v3099 = vld [vmem:[%s4 + $0xd8] sm:$0xff]
  %v3100 = vld [vmem:[%s4 + $0xe0] sm:$0xff]
  %v3101 = vld [vmem:[%s4 + $0xe8] sm:$0xff]
  %v3102 = vld [vmem:[%s4 + $0xf0] sm:$0xff]
  %v3103 = vld [vmem:[%s4 + $0xf8] sm:$0xff]
  %v3105 = vlaneseq
  %v3106 = vshrl.u32 %v3105, 7
  %v3107 = vsub.s32 0, %v3106
  %v3108 = vrot.slane %v3063, %v3107
  %v3109 = vlaneseq
  %v3110 = vshrl.u32 %v3109, 7
  %v3111 = vsub.s32 1, %v3110
  %v3112 = vrot.slane %v3063, %v3111
  %v3113 = vlaneseq
  %v3114 = vshrl.u32 %v3113, 7
  %v3115 = vsub.s32 2, %v3114
  %v3116 = vrot.slane %v3063, %v3115
  %v3117 = vlaneseq
  %v3118 = vshrl.u32 %v3117, 7
  %v3119 = vsub.s32 3, %v3118
  %v3120 = vrot.slane %v3063, %v3119
  %v3133 = vunpack.c.l.b16 %v3064
  %v3134 = vunpack.c.l.b16 %v3065
  %v3135 = vunpack.c.l.b16 %v3066
  %v3136 = vunpack.c.l.b16 %v3067
  %v3137 = vunpack.c.l.b16 %v3068
  %v3138 = vunpack.c.l.b16 %v3069
  %v3139 = vunpack.c.l.b16 %v3070
  %v3140 = vunpack.c.l.b16 %v3071
  %v3141 = vpack.c.b16 %v3134, %v3133
  %v3142 = vpack.c.b16 %v3136, %v3135
  %v3143 = vpack.c.b16 %v3138, %v3137
  %v3144 = vpack.c.b16 %v3140, %v3139
  %v3181 = vunpack.c.l.b16 %v3072
  %v3182 = vunpack.c.h.b16 %v3072
  %v3183 = vunpack.c.l.b16 %v3073
  %v3184 = vunpack.c.h.b16 %v3073
  %v3185 = vunpack.c.l.b16 %v3074
  %v3186 = vunpack.c.h.b16 %v3074
  %v3187 = vunpack.c.l.b16 %v3075
  %v3188 = vunpack.c.h.b16 %v3075
  %v3189 = vunpack.c.l.b16 %v3076
  %v3190 = vunpack.c.h.b16 %v3076
  %v3191 = vunpack.c.l.b16 %v3077
  %v3192 = vunpack.c.h.b16 %v3077
  %v3193 = vunpack.c.l.b16 %v3078
  %v3194 = vunpack.c.h.b16 %v3078
  %v3195 = vunpack.c.l.b16 %v3079
  %v3196 = vunpack.c.h.b16 %v3079
  %v3197 = vunpack.c.l.b16 %v3080
  %v3198 = vunpack.c.h.b16 %v3080
  %v3199 = vunpack.c.l.b16 %v3081
  %v3200 = vunpack.c.h.b16 %v3081
  %v3201 = vunpack.c.l.b16 %v3082
  %v3202 = vunpack.c.h.b16 %v3082
  %v3203 = vunpack.c.l.b16 %v3083
  %v3204 = vunpack.c.h.b16 %v3083
  %v3205 = vunpack.c.l.b16 %v3084
  %v3206 = vunpack.c.h.b16 %v3084
  %v3207 = vunpack.c.l.b16 %v3085
  %v3208 = vunpack.c.h.b16 %v3085
  %v3209 = vunpack.c.l.b16 %v3086
  %v3210 = vunpack.c.h.b16 %v3086
  %v3211 = vunpack.c.l.b16 %v3087
  %v3212 = vunpack.c.h.b16 %v3087
  %v3213 = vunpack.c.l.b16 %v3088
  %v3214 = vunpack.c.h.b16 %v3088
  %v3215 = vunpack.c.l.b16 %v3089
  %v3216 = vunpack.c.h.b16 %v3089
  %v3217 = vunpack.c.l.b16 %v3090
  %v3218 = vunpack.c.h.b16 %v3090
  %v3219 = vunpack.c.l.b16 %v3091
  %v3220 = vunpack.c.h.b16 %v3091
  %v3221 = vunpack.c.l.b16 %v3092
  %v3222 = vunpack.c.h.b16 %v3092
  %v3223 = vunpack.c.l.b16 %v3093
  %v3224 = vunpack.c.h.b16 %v3093
  %v3225 = vunpack.c.l.b16 %v3094
  %v3226 = vunpack.c.h.b16 %v3094
  %v3227 = vunpack.c.l.b16 %v3095
  %v3228 = vunpack.c.h.b16 %v3095
  %v3229 = vunpack.c.l.b16 %v3096
  %v3230 = vunpack.c.h.b16 %v3096
  %v3231 = vunpack.c.l.b16 %v3097
  %v3232 = vunpack.c.h.b16 %v3097
  %v3233 = vunpack.c.l.b16 %v3098
  %v3234 = vunpack.c.h.b16 %v3098
  %v3235 = vunpack.c.l.b16 %v3099
  %v3236 = vunpack.c.h.b16 %v3099
  %v3237 = vunpack.c.l.b16 %v3100
  %v3238 = vunpack.c.h.b16 %v3100
  %v3239 = vunpack.c.l.b16 %v3101
  %v3240 = vunpack.c.h.b16 %v3101
  %v3241 = vunpack.c.l.b16 %v3102
  %v3242 = vunpack.c.h.b16 %v3102
  %v3243 = vunpack.c.l.b16 %v3103
  %v3244 = vunpack.c.h.b16 %v3103
  %v3245 = vpack.c.b16 %v3185, %v3181
  %v3246 = vpack.c.b16 %v3186, %v3182
  %v3247 = vpack.c.b16 %v3187, %v3183
  %v3248 = vpack.c.b16 %v3188, %v3184
  %v3249 = vpack.c.b16 %v3193, %v3189
  %v3250 = vpack.c.b16 %v3194, %v3190
  %v3251 = vpack.c.b16 %v3195, %v3191
  %v3252 = vpack.c.b16 %v3196, %v3192
  %v3253 = vpack.c.b16 %v3201, %v3197
  %v3254 = vpack.c.b16 %v3202, %v3198
  %v3255 = vpack.c.b16 %v3203, %v3199
  %v3256 = vpack.c.b16 %v3204, %v3200
  %v3257 = vpack.c.b16 %v3209, %v3205
  %v3258 = vpack.c.b16 %v3210, %v3206
  %v3259 = vpack.c.b16 %v3211, %v3207
  %v3260 = vpack.c.b16 %v3212, %v3208
  %v3261 = vpack.c.b16 %v3217, %v3213
  %v3262 = vpack.c.b16 %v3218, %v3214
  %v3263 = vpack.c.b16 %v3219, %v3215
  %v3264 = vpack.c.b16 %v3220, %v3216
  %v3265 = vpack.c.b16 %v3225, %v3221
  %v3266 = vpack.c.b16 %v3226, %v3222
  %v3267 = vpack.c.b16 %v3227, %v3223
  %v3268 = vpack.c.b16 %v3228, %v3224
  %v3269 = vpack.c.b16 %v3233, %v3229
  %v3270 = vpack.c.b16 %v3234, %v3230
  %v3271 = vpack.c.b16 %v3235, %v3231
  %v3272 = vpack.c.b16 %v3236, %v3232
  %v3273 = vpack.c.b16 %v3241, %v3237
  %v3274 = vpack.c.b16 %v3242, %v3238
  %v3275 = vpack.c.b16 %v3243, %v3239
  %v3276 = vpack.c.b16 %v3244, %v3240
  %3309 = vmatprep.subr.bf16.mxu0 %v3246
  %3310 = vmatpush1.bf16.msra.mxu0 %v3245
  %3311 = vmatprep.subr.bf16.mxu0 %v3250
  %3312 = vmatpush1.bf16.msra.mxu0 %v3249
  %3313 = vmatprep.subr.bf16.mxu0 %v3254
  %3314 = vmatpush1.bf16.msra.mxu0 %v3253
  %3315 = vmatprep.subr.bf16.mxu0 %v3258
  %3316 = vmatpush1.bf16.msra.mxu0 %v3257
  %3317 = vmatprep.subr.bf16.mxu0 %v3262
  %3318 = vmatpush1.bf16.msra.mxu0 %v3261
  %3319 = vmatprep.subr.bf16.mxu0 %v3266
  %3320 = vmatpush1.bf16.msra.mxu0 %v3265
  %3321 = vmatprep.subr.bf16.mxu0 %v3270
  %3322 = vmatpush1.bf16.msra.mxu0 %v3269
  %3323 = vmatprep.subr.bf16.mxu0 %v3274
  %3324 = vmatpush1.bf16.msra.mxu0 %v3273
  %3325 = vmatprep.subr.bf16.mxu0 0
  %3326 = vmatpush1.bf16.msra.mxu0 0
  %3327 = vmatprep.subr.bf16.mxu0 0
  %3328 = vmatpush1.bf16.msra.mxu0 0
  %3329 = vmatprep.subr.bf16.mxu0 0
  %3330 = vmatpush1.bf16.msra.mxu0 0
  %3331 = vmatprep.subr.bf16.mxu0 0
  %3332 = vmatpush1.bf16.msra.mxu0 0
  %3333 = vmatprep.subr.bf16.mxu0 0
  %3334 = vmatpush1.bf16.msra.mxu0 0
  %3335 = vmatprep.subr.bf16.mxu0 0
  %3336 = vmatpush1.bf16.msra.mxu0 0
  %3337 = vmatprep.subr.bf16.mxu0 0
  %3338 = vmatpush1.bf16.msra.mxu0 0
  %3339 = vmatprep.subr.bf16.mxu0 0
  %3340 = vmatpush1.bf16.msra.mxu0 0
  %3341 = vmatprep.mubr.bf16.mxu0 0
  %3342 = vmatmul.mubr.bf16.gmra.mrb[0].mxu0 %v3141
  %v3343 = vpop.f32.mrb[0].mxu0
  %v3344 = vadd.f32 %v3108, %v3343
  %v3345 = vpop.f32.mrb[0].mxu0
  %v3346 = vadd.f32 %v3112, %v3345
  %v3347 = vpop.f32.mrb[0].mxu0
  %v3348 = vadd.f32 %v3108, %v3347
  %v3349 = vpop.f32.mrb[0].mxu0
  %v3350 = vadd.f32 %v3112, %v3349
  %3351 = vmatprep.mubr.bf16.mxu0 0
  %3352 = vmatmul.mubr.bf16.gmra.mrb[0].mxu0 %v3142
  %v3353 = vpop.f32.mrb[0].mxu0
  %v3354 = vadd.f32 %v3108, %v3353
  %v3355 = vpop.f32.mrb[0].mxu0
  %v3356 = vadd.f32 %v3112, %v3355
  %v3357 = vpop.f32.mrb[0].mxu0
  %v3358 = vadd.f32 %v3108, %v3357
  %v3359 = vpop.f32.mrb[0].mxu0
  %v3360 = vadd.f32 %v3112, %v3359
  %3361 = vmatprep.mubr.bf16.mxu0 0
  %3362 = vmatmul.mubr.bf16.gmra.mrb[0].mxu0 %v3143
  %v3363 = vpop.f32.mrb[0].mxu0
  %v3364 = vadd.f32 %v3108, %v3363
  %v3365 = vpop.f32.mrb[0].mxu0
  %v3366 = vadd.f32 %v3112, %v3365
  %v3367 = vpop.f32.mrb[0].mxu0
  %v3368 = vadd.f32 %v3108, %v3367
  %v3369 = vpop.f32.mrb[0].mxu0
  %v3370 = vadd.f32 %v3112, %v3369
  %3371 = vmatprep.mubr.bf16.mxu0 0
  %3372 = vmatmul.mubr.bf16.gmra.mrb[0].mxu0 %v3144
  %v3373 = vpop.f32.mrb[0].mxu0
  %v3374 = vadd.f32 %v3108, %v3373
  %v3375 = vpop.f32.mrb[0].mxu0
  %v3376 = vadd.f32 %v3112, %v3375
  %v3377 = vpop.f32.mrb[0].mxu0
  %v3378 = vadd.f32 %v3108, %v3377
  %v3379 = vpop.f32.mrb[0].mxu0
  %v3380 = vadd.f32 %v3112, %v3379
  %3381 = vdwg.mxu0
  %3382 = vmatprep.subr.bf16.mxu0 %v3248
  %3383 = vmatpush1.bf16.msra.mxu0 %v3247
  %3384 = vmatprep.subr.bf16.mxu0 %v3252
  %3385 = vmatpush1.bf16.msra.mxu0 %v3251
  %3386 = vmatprep.subr.bf16.mxu0 %v3256
  %3387 = vmatpush1.bf16.msra.mxu0 %v3255
  %3388 = vmatprep.subr.bf16.mxu0 %v3260
  %3389 = vmatpush1.bf16.msra.mxu0 %v3259
  %3390 = vmatprep.subr.bf16.mxu0 %v3264
  %3391 = vmatpush1.bf16.msra.mxu0 %v3263
  %3392 = vmatprep.subr.bf16.mxu0 %v3268
  %3393 = vmatpush1.bf16.msra.mxu0 %v3267
  %3394 = vmatprep.subr.bf16.mxu0 %v3272
  %3395 = vmatpush1.bf16.msra.mxu0 %v3271
  %3396 = vmatprep.subr.bf16.mxu0 %v3276
  %3397 = vmatpush1.bf16.msra.mxu0 %v3275
  %3398 = vmatprep.subr.bf16.mxu0 0
  %3399 = vmatpush1.bf16.msra.mxu0 0
  %3400 = vmatprep.subr.bf16.mxu0 0
  %3401 = vmatpush1.bf16.msra.mxu0 0
  %3402 = vmatprep.subr.bf16.mxu0 0
  %3403 = vmatpush1.bf16.msra.mxu0 0
  %3404 = vmatprep.subr.bf16.mxu0 0
  %3405 = vmatpush1.bf16.msra.mxu0 0
  %3406 = vmatprep.subr.bf16.mxu0 0
  %3407 = vmatpush1.bf16.msra.mxu0 0
  %3408 = vmatprep.subr.bf16.mxu0 0
  %3409 = vmatpush1.bf16.msra.mxu0 0
  %3410 = vmatprep.subr.bf16.mxu0 0
  %3411 = vmatpush1.bf16.msra.mxu0 0
  %3412 = vmatprep.subr.bf16.mxu0 0
  %3413 = vmatpush1.bf16.msra.mxu0 0
  %3414 = vmatprep.mubr.bf16.mxu0 0
  %3415 = vmatmul.mubr.bf16.gmra.mrb[0].mxu0 %v3141
  %v3416 = vpop.f32.mrb[0].mxu0
  %v3417 = vadd.f32 %v3116, %v3416
  %v3418 = vpop.f32.mrb[0].mxu0
  %v3419 = vadd.f32 %v3120, %v3418
  %v3420 = vpop.f32.mrb[0].mxu0
  %v3421 = vadd.f32 %v3116, %v3420
  %v3422 = vpop.f32.mrb[0].mxu0
  %v3423 = vadd.f32 %v3120, %v3422
  %3424 = vmatprep.mubr.bf16.mxu0 0
  %3425 = vmatmul.mubr.bf16.gmra.mrb[0].mxu0 %v3142
  %v3426 = vpop.f32.mrb[0].mxu0
  %v3427 = vadd.f32 %v3116, %v3426
  %v3428 = vpop.f32.mrb[0].mxu0
  %v3429 = vadd.f32 %v3120, %v3428
  %v3430 = vpop.f32.mrb[0].mxu0
  %v3431 = vadd.f32 %v3116, %v3430
  %v3432 = vpop.f32.mrb[0].mxu0
  %v3433 = vadd.f32 %v3120, %v3432
  %3434 = vmatprep.mubr.bf16.mxu0 0
  %3435 = vmatmul.mubr.bf16.gmra.mrb[0].mxu0 %v3143
  %v3436 = vpop.f32.mrb[0].mxu0
  %v3437 = vadd.f32 %v3116, %v3436
  %v3438 = vpop.f32.mrb[0].mxu0
  %v3439 = vadd.f32 %v3120, %v3438
  %v3440 = vpop.f32.mrb[0].mxu0
  %v3441 = vadd.f32 %v3116, %v3440
  %v3442 = vpop.f32.mrb[0].mxu0
  %v3443 = vadd.f32 %v3120, %v3442
  %3444 = vmatprep.mubr.bf16.mxu0 0
  %3445 = vmatmul.mubr.bf16.gmra.mrb[0].mxu0 %v3144
  %v3446 = vpop.f32.mrb[0].mxu0
  %v3447 = vadd.f32 %v3116, %v3446
  %v3448 = vpop.f32.mrb[0].mxu0
  %v3449 = vadd.f32 %v3120, %v3448
  %v3450 = vpop.f32.mrb[0].mxu0
  %v3451 = vadd.f32 %v3116, %v3450
  %v3452 = vpop.f32.mrb[0].mxu0
  %v3453 = vadd.f32 %v3120, %v3452
  %3454 = vdwg.mxu0
  %v3455 = vpack.c.bf16 %v3344, %v3344
  %v3456 = vpack.c.bf16 %v3346, %v3346
  %v3457 = vpack.c.bf16 %v3417, %v3417
  %v3458 = vpack.c.bf16 %v3419, %v3419
  %v3459 = vpack.c.bf16 %v3348, %v3348
  %v3460 = vpack.c.bf16 %v3350, %v3350
  %v3461 = vpack.c.bf16 %v3421, %v3421
  %v3462 = vpack.c.bf16 %v3423, %v3423
  %v3463 = vpack.c.bf16 %v3354, %v3354
  %v3464 = vpack.c.bf16 %v3356, %v3356
  %v3465 = vpack.c.bf16 %v3427, %v3427
  %v3466 = vpack.c.bf16 %v3429, %v3429
  %v3467 = vpack.c.bf16 %v3358, %v3358
  %v3468 = vpack.c.bf16 %v3360, %v3360
  %v3469 = vpack.c.bf16 %v3431, %v3431
  %v3470 = vpack.c.bf16 %v3433, %v3433
  %v3471 = vpack.c.bf16 %v3364, %v3364
  %v3472 = vpack.c.bf16 %v3366, %v3366
  %v3473 = vpack.c.bf16 %v3437, %v3437
  %v3474 = vpack.c.bf16 %v3439, %v3439
  %v3475 = vpack.c.bf16 %v3368, %v3368
  %v3476 = vpack.c.bf16 %v3370, %v3370
  %v3477 = vpack.c.bf16 %v3441, %v3441
  %v3478 = vpack.c.bf16 %v3443, %v3443
  %v3479 = vpack.c.bf16 %v3374, %v3374
  %v3480 = vpack.c.bf16 %v3376, %v3376
  %v3481 = vpack.c.bf16 %v3447, %v3447
  %v3482 = vpack.c.bf16 %v3449, %v3449
  %v3483 = vpack.c.bf16 %v3378, %v3378
  %v3484 = vpack.c.bf16 %v3380, %v3380
  %v3485 = vpack.c.bf16 %v3451, %v3451
  %v3486 = vpack.c.bf16 %v3453, %v3453
  %v3519 = vunpack.c.l.b16 %v3455
  %v3520 = vunpack.c.l.b16 %v3456
  %v3521 = vunpack.c.l.b16 %v3457
  %v3522 = vunpack.c.l.b16 %v3458
  %v3523 = vunpack.c.l.b16 %v3459
  %v3524 = vunpack.c.l.b16 %v3460
  %v3525 = vunpack.c.l.b16 %v3461
  %v3526 = vunpack.c.l.b16 %v3462
  %v3527 = vunpack.c.l.b16 %v3463
  %v3528 = vunpack.c.l.b16 %v3464
  %v3529 = vunpack.c.l.b16 %v3465
  %v3530 = vunpack.c.l.b16 %v3466
  %v3531 = vunpack.c.l.b16 %v3467
  %v3532 = vunpack.c.l.b16 %v3468
  %v3533 = vunpack.c.l.b16 %v3469
  %v3534 = vunpack.c.l.b16 %v3470
  %v3535 = vunpack.c.l.b16 %v3471
  %v3536 = vunpack.c.l.b16 %v3472
  %v3537 = vunpack.c.l.b16 %v3473
  %v3538 = vunpack.c.l.b16 %v3474
  %v3539 = vunpack.c.l.b16 %v3475
  %v3540 = vunpack.c.l.b16 %v3476
  %v3541 = vunpack.c.l.b16 %v3477
  %v3542 = vunpack.c.l.b16 %v3478
  %v3543 = vunpack.c.l.b16 %v3479
  %v3544 = vunpack.c.l.b16 %v3480
  %v3545 = vunpack.c.l.b16 %v3481
  %v3546 = vunpack.c.l.b16 %v3482
  %v3547 = vunpack.c.l.b16 %v3483
  %v3548 = vunpack.c.l.b16 %v3484
  %v3549 = vunpack.c.l.b16 %v3485
  %v3550 = vunpack.c.l.b16 %v3486
  %v3551 = vpack.c.b16 %v3520, %v3519
  %v3552 = vpack.c.b16 %v3522, %v3521
  %v3553 = vpack.c.b16 %v3524, %v3523
  %v3554 = vpack.c.b16 %v3526, %v3525
  %v3555 = vpack.c.b16 %v3528, %v3527
  %v3556 = vpack.c.b16 %v3530, %v3529
  %v3557 = vpack.c.b16 %v3532, %v3531
  %v3558 = vpack.c.b16 %v3534, %v3533
  %v3559 = vpack.c.b16 %v3536, %v3535
  %v3560 = vpack.c.b16 %v3538, %v3537
  %v3561 = vpack.c.b16 %v3540, %v3539
  %v3562 = vpack.c.b16 %v3542, %v3541
  %v3563 = vpack.c.b16 %v3544, %v3543
  %v3564 = vpack.c.b16 %v3546, %v3545
  %v3565 = vpack.c.b16 %v3548, %v3547
  %v3566 = vpack.c.b16 %v3550, %v3549
  %3583 = vst [vmem:[#allocation2] sm:$0xff] %v3551
  %3584 = vst [vmem:[#allocation2 + $0x8] sm:$0xff] %v3552
  %3585 = vst [vmem:[#allocation2 + $0x10] sm:$0xff] %v3553
  %3586 = vst [vmem:[#allocation2 + $0x18] sm:$0xff] %v3554
  %3587 = vst [vmem:[#allocation2 + $0x20] sm:$0xff] %v3555
  %3588 = vst [vmem:[#allocation2 + $0x28] sm:$0xff] %v3556
  %3589 = vst [vmem:[#allocation2 + $0x30] sm:$0xff] %v3557
  %3590 = vst [vmem:[#allocation2 + $0x38] sm:$0xff] %v3558
  %3591 = vst [vmem:[#allocation2 + $0x40] sm:$0xff] %v3559
  %3592 = vst [vmem:[#allocation2 + $0x48] sm:$0xff] %v3560
  %3593 = vst [vmem:[#allocation2 + $0x50] sm:$0xff] %v3561
  %3594 = vst [vmem:[#allocation2 + $0x58] sm:$0xff] %v3562
  %3595 = vst [vmem:[#allocation2 + $0x60] sm:$0xff] %v3563
  %3596 = vst [vmem:[#allocation2 + $0x68] sm:$0xff] %v3564
  %3597 = vst [vmem:[#allocation2 + $0x70] sm:$0xff] %v3565
  %3598 = vst [vmem:[#allocation2 + $0x78] sm:$0xff] %v3566
  %v3599 = vld [vmem:[#allocation2] sm:$0xff]
  %v3600 = vld [vmem:[#allocation2 + $0x8] sm:$0xff]
  %v3601 = vunpack.c.l.bf16 %v3599
  %v3602 = vunpack.c.h.bf16 %v3599
  %v3603 = vunpack.c.l.bf16 %v3600
  %v3604 = vunpack.c.h.bf16 %v3600
  %v3605 = vld [vmem:[%s5] sm:$0xff]
  %v3606 = vld [vmem:[%s5 + $0x8] sm:$0xff]
  %v3607 = vld [vmem:[%s5 + $0x10] sm:$0xff]
  %v3608 = vld [vmem:[%s5 + $0x18] sm:$0xff]
  %v3609 = vld [vmem:[%s5 + $0x20] sm:$0xff]
  %v3610 = vld [vmem:[%s5 + $0x28] sm:$0xff]
  %v3611 = vld [vmem:[%s5 + $0x30] sm:$0xff]
  %v3612 = vld [vmem:[%s5 + $0x38] sm:$0xff]
  %v3613 = vld [vmem:[%s5 + $0x40] sm:$0xff]
  %v3614 = vld [vmem:[%s5 + $0x48] sm:$0xff]
  %v3615 = vld [vmem:[%s5 + $0x50] sm:$0xff]
  %v3616 = vld [vmem:[%s5 + $0x58] sm:$0xff]
  %v3617 = vld [vmem:[%s5 + $0x60] sm:$0xff]
  %v3618 = vld [vmem:[%s5 + $0x68] sm:$0xff]
  %v3619 = vld [vmem:[%s5 + $0x70] sm:$0xff]
  %v3620 = vld [vmem:[%s5 + $0x78] sm:$0xff]
  %v3621 = vld [vmem:[%s5 + $0x80] sm:$0xff]
  %v3622 = vld [vmem:[%s5 + $0x88] sm:$0xff]
  %v3623 = vld [vmem:[%s5 + $0x90] sm:$0xff]
  %v3624 = vld [vmem:[%s5 + $0x98] sm:$0xff]
  %v3625 = vld [vmem:[%s5 + $0xa0] sm:$0xff]
  %v3626 = vld [vmem:[%s5 + $0xa8] sm:$0xff]
  %v3627 = vld [vmem:[%s5 + $0xb0] sm:$0xff]
  %v3628 = vld [vmem:[%s5 + $0xb8] sm:$0xff]
  %v3629 = vld [vmem:[%s5 + $0xc0] sm:$0xff]
  %v3630 = vld [vmem:[%s5 + $0xc8] sm:$0xff]
  %v3631 = vld [vmem:[%s5 + $0xd0] sm:$0xff]
  %v3632 = vld [vmem:[%s5 + $0xd8] sm:$0xff]
  %v3633 = vld [vmem:[%s5 + $0xe0] sm:$0xff]
  %v3634 = vld [vmem:[%s5 + $0xe8] sm:$0xff]
  %v3635 = vld [vmem:[%s5 + $0xf0] sm:$0xff]
  %v3636 = vld [vmem:[%s5 + $0xf8] sm:$0xff]
  %v3669 = vunpack.c.l.b16 %v3605
  %v3670 = vunpack.c.h.b16 %v3605
  %v3671 = vunpack.c.l.b16 %v3606
  %v3672 = vunpack.c.h.b16 %v3606
  %v3673 = vunpack.c.l.b16 %v3607
  %v3674 = vunpack.c.h.b16 %v3607
  %v3675 = vunpack.c.l.b16 %v3608
  %v3676 = vunpack.c.h.b16 %v3608
  %v3677 = vunpack.c.l.b16 %v3609
  %v3678 = vunpack.c.h.b16 %v3609
  %v3679 = vunpack.c.l.b16 %v3610
  %v3680 = vunpack.c.h.b16 %v3610
  %v3681 = vunpack.c.l.b16 %v3611
  %v3682 = vunpack.c.h.b16 %v3611
  %v3683 = vunpack.c.l.b16 %v3612
  %v3684 = vunpack.c.h.b16 %v3612
  %v3685 = vunpack.c.l.b16 %v3613
  %v3686 = vunpack.c.h.b16 %v3613
  %v3687 = vunpack.c.l.b16 %v3614
  %v3688 = vunpack.c.h.b16 %v3614
  %v3689 = vunpack.c.l.b16 %v3615
  %v3690 = vunpack.c.h.b16 %v3615
  %v3691 = vunpack.c.l.b16 %v3616
  %v3692 = vunpack.c.h.b16 %v3616
  %v3693 = vunpack.c.l.b16 %v3617
  %v3694 = vunpack.c.h.b16 %v3617
  %v3695 = vunpack.c.l.b16 %v3618
  %v3696 = vunpack.c.h.b16 %v3618
  %v3697 = vunpack.c.l.b16 %v3619
  %v3698 = vunpack.c.h.b16 %v3619
  %v3699 = vunpack.c.l.b16 %v3620
  %v3700 = vunpack.c.h.b16 %v3620
  %v3701 = vunpack.c.l.b16 %v3621
  %v3702 = vunpack.c.h.b16 %v3621
  %v3703 = vunpack.c.l.b16 %v3622
  %v3704 = vunpack.c.h.b16 %v3622
  %v3705 = vunpack.c.l.b16 %v3623
  %v3706 = vunpack.c.h.b16 %v3623
  %v3707 = vunpack.c.l.b16 %v3624
  %v3708 = vunpack.c.h.b16 %v3624
  %v3709 = vunpack.c.l.b16 %v3625
  %v3710 = vunpack.c.h.b16 %v3625
  %v3711 = vunpack.c.l.b16 %v3626
  %v3712 = vunpack.c.h.b16 %v3626
  %v3713 = vunpack.c.l.b16 %v3627
  %v3714 = vunpack.c.h.b16 %v3627
  %v3715 = vunpack.c.l.b16 %v3628
  %v3716 = vunpack.c.h.b16 %v3628
  %v3717 = vunpack.c.l.b16 %v3629
  %v3718 = vunpack.c.h.b16 %v3629
  %v3719 = vunpack.c.l.b16 %v3630
  %v3720 = vunpack.c.h.b16 %v3630
  %v3721 = vunpack.c.l.b16 %v3631
  %v3722 = vunpack.c.h.b16 %v3631
  %v3723 = vunpack.c.l.b16 %v3632
  %v3724 = vunpack.c.h.b16 %v3632
  %v3725 = vunpack.c.l.b16 %v3633
  %v3726 = vunpack.c.h.b16 %v3633
  %v3727 = vunpack.c.l.b16 %v3634
  %v3728 = vunpack.c.h.b16 %v3634
  %v3729 = vunpack.c.l.b16 %v3635
  %v3730 = vunpack.c.h.b16 %v3635
  %v3731 = vunpack.c.l.b16 %v3636
  %v3732 = vunpack.c.h.b16 %v3636
  %v3733 = vpack.c.b16 %v3673, %v3669
  %v3734 = vpack.c.b16 %v3674, %v3670
  %v3735 = vpack.c.b16 %v3675, %v3671
  %v3736 = vpack.c.b16 %v3676, %v3672
  %v3737 = vpack.c.b16 %v3681, %v3677
  %v3738 = vpack.c.b16 %v3682, %v3678
  %v3739 = vpack.c.b16 %v3683, %v3679
  %v3740 = vpack.c.b16 %v3684, %v3680
  %v3741 = vpack.c.b16 %v3689, %v3685
  %v3742 = vpack.c.b16 %v3690, %v3686
  %v3743 = vpack.c.b16 %v3691, %v3687
  %v3744 = vpack.c.b16 %v3692, %v3688
  %v3745 = vpack.c.b16 %v3697, %v3693
  %v3746 = vpack.c.b16 %v3698, %v3694
  %v3747 = vpack.c.b16 %v3699, %v3695
  %v3748 = vpack.c.b16 %v3700, %v3696
  %v3749 = vpack.c.b16 %v3705, %v3701
  %v3750 = vpack.c.b16 %v3706, %v3702
  %v3751 = vpack.c.b16 %v3707, %v3703
  %v3752 = vpack.c.b16 %v3708, %v3704
  %v3753 = vpack.c.b16 %v3713, %v3709
  %v3754 = vpack.c.b16 %v3714, %v3710
  %v3755 = vpack.c.b16 %v3715, %v3711
  %v3756 = vpack.c.b16 %v3716, %v3712
  %v3757 = vpack.c.b16 %v3721, %v3717
  %v3758 = vpack.c.b16 %v3722, %v3718
  %v3759 = vpack.c.b16 %v3723, %v3719
  %v3760 = vpack.c.b16 %v3724, %v3720
  %v3761 = vpack.c.b16 %v3729, %v3725
  %v3762 = vpack.c.b16 %v3730, %v3726
  %v3763 = vpack.c.b16 %v3731, %v3727
  %v3764 = vpack.c.b16 %v3732, %v3728
  %3797 = vmatprep.subr.bf16.mxu0 %v3734
  %3798 = vmatpush1.bf16.msra.mxu0 %v3733
  %3799 = vmatprep.subr.bf16.mxu0 %v3738
  %3800 = vmatpush1.bf16.msra.mxu0 %v3737
  %3801 = vmatprep.subr.bf16.mxu0 %v3742
  %3802 = vmatpush1.bf16.msra.mxu0 %v3741
  %3803 = vmatprep.subr.bf16.mxu0 %v3746
  %3804 = vmatpush1.bf16.msra.mxu0 %v3745
  %3805 = vmatprep.subr.bf16.mxu0 %v3750
  %3806 = vmatpush1.bf16.msra.mxu0 %v3749
  %3807 = vmatprep.subr.bf16.mxu0 %v3754
  %3808 = vmatpush1.bf16.msra.mxu0 %v3753
  %3809 = vmatprep.subr.bf16.mxu0 %v3758
  %3810 = vmatpush1.bf16.msra.mxu0 %v3757
  %3811 = vmatprep.subr.bf16.mxu0 %v3762
  %3812 = vmatpush1.bf16.msra.mxu0 %v3761
  %3813 = vmatprep.subr.bf16.mxu0 0
  %3814 = vmatpush1.bf16.msra.mxu0 0
  %3815 = vmatprep.subr.bf16.mxu0 0
  %3816 = vmatpush1.bf16.msra.mxu0 0
  %3817 = vmatprep.subr.bf16.mxu0 0
  %3818 = vmatpush1.bf16.msra.mxu0 0
  %3819 = vmatprep.subr.bf16.mxu0 0
  %3820 = vmatpush1.bf16.msra.mxu0 0
  %3821 = vmatprep.subr.bf16.mxu0 0
  %3822 = vmatpush1.bf16.msra.mxu0 0
  %3823 = vmatprep.subr.bf16.mxu0 0
  %3824 = vmatpush1.bf16.msra.mxu0 0
  %3825 = vmatprep.subr.bf16.mxu0 0
  %3826 = vmatpush1.bf16.msra.mxu0 0
  %3827 = vmatprep.subr.bf16.mxu0 0
  %3828 = vmatpush1.bf16.msra.mxu0 0
  %3829 = vmatprep.mubr.bf16.mxu0 0
  %3830 = vmatmul.mubr.bf16.gmra.mrb[0].mxu0 0
  %v3831 = vpop.f32.mrb[0].mxu0
  %v3832 = vadd.f32 0.0, %v3831
  %v3833 = vpop.f32.mrb[0].mxu0
  %v3834 = vadd.f32 0.0, %v3833
  %v3835 = vpop.f32.mrb[0].mxu0
  %v3836 = vpop.f32.mrb[0].mxu0
  %3837 = vdwg.mxu0
  %3838 = vmatprep.subr.bf16.mxu0 %v3736
  %3839 = vmatpush1.bf16.msra.mxu0 %v3735
  %3840 = vmatprep.subr.bf16.mxu0 %v3740
  %3841 = vmatpush1.bf16.msra.mxu0 %v3739
  %3842 = vmatprep.subr.bf16.mxu0 %v3744
  %3843 = vmatpush1.bf16.msra.mxu0 %v3743
  %3844 = vmatprep.subr.bf16.mxu0 %v3748
  %3845 = vmatpush1.bf16.msra.mxu0 %v3747
  %3846 = vmatprep.subr.bf16.mxu0 %v3752
  %3847 = vmatpush1.bf16.msra.mxu0 %v3751
  %3848 = vmatprep.subr.bf16.mxu0 %v3756
  %3849 = vmatpush1.bf16.msra.mxu0 %v3755
  %3850 = vmatprep.subr.bf16.mxu0 %v3760
  %3851 = vmatpush1.bf16.msra.mxu0 %v3759
  %3852 = vmatprep.subr.bf16.mxu0 %v3764
  %3853 = vmatpush1.bf16.msra.mxu0 %v3763
  %3854 = vmatprep.subr.bf16.mxu0 0
  %3855 = vmatpush1.bf16.msra.mxu0 0
  %3856 = vmatprep.subr.bf16.mxu0 0
  %3857 = vmatpush1.bf16.msra.mxu0 0
  %3858 = vmatprep.subr.bf16.mxu0 0
  %3859 = vmatpush1.bf16.msra.mxu0 0
  %3860 = vmatprep.subr.bf16.mxu0 0
  %3861 = vmatpush1.bf16.msra.mxu0 0
  %3862 = vmatprep.subr.bf16.mxu0 0
  %3863 = vmatpush1.bf16.msra.mxu0 0
  %3864 = vmatprep.subr.bf16.mxu0 0
  %3865 = vmatpush1.bf16.msra.mxu0 0
  %3866 = vmatprep.subr.bf16.mxu0 0
  %3867 = vmatpush1.bf16.msra.mxu0 0
  %3868 = vmatprep.subr.bf16.mxu0 0
  %3869 = vmatpush1.bf16.msra.mxu0 0
  %3870 = vmatprep.mubr.bf16.mxu0 0
  %3871 = vmatmul.mubr.bf16.gmra.mrb[0].mxu0 0
  %v3872 = vpop.f32.mrb[0].mxu0
  %v3873 = vadd.f32 0.0, %v3872
  %v3874 = vpop.f32.mrb[0].mxu0
  %v3875 = vadd.f32 0.0, %v3874
  %v3876 = vpop.f32.mrb[0].mxu0
  %v3877 = vpop.f32.mrb[0].mxu0
  %3878 = vdwg.mxu0
  %v3879 = vadd.f32 %v3601, %v3832
  %v3880 = vadd.f32 %v3602, %v3834
  %v3881 = vadd.f32 %v3603, %v3873
  %v3882 = vadd.f32 %v3604, %v3875
  %v3883 = vxor.u32 %v3879, 2147483648
  %v3884 = vmul.f32 %v3883, 1.442695
  %v3885 = vpow.pop %v3884
  %v3886 = vadd.f32 %v3885, 1.0
  %v3887 = vrcp.pop %v3886
  %v3888 = vmul.f32 1.0, %v3887
  %v3889 = vxor.u32 %v3880, 2147483648
  %v3890 = vmul.f32 %v3889, 1.442695
  %v3891 = vpow.pop %v3890
  %v3892 = vadd.f32 %v3891, 1.0
  %v3893 = vrcp.pop %v3892
  %v3894 = vmul.f32 1.0, %v3893
  %v3895 = vtanh.pop %v3881
  %v3896 = vxor.u32 %v3882, 2147483648
  %v3897 = vmul.f32 %v3896, 1.442695
  %v3898 = vpow.pop %v3897
  %v3899 = vadd.f32 %v3898, 1.0
  %v3900 = vrcp.pop %v3899
  %v3901 = vmul.f32 1.0, %v3900
  %v3902 = vmul.f32 %v3894, 0.0
  %v3903 = vmul.f32 %v3888, %v3895
  %v3904 = vadd.f32 %v3902, %v3903
  %v3905 = vtanh.pop %v3904
  %v3906 = vmul.f32 %v3901, %v3905
  %v3907 = vld [vmem:[%s879] sm:$0xff]
  %v3908 = vld [vmem:[%s879 + $0x8] sm:$0xff]
  %v3909 = vunpack.c.l.bf16 %v3907
  %v3910 = vunpack.c.h.bf16 %v3907
  %v3911 = vunpack.c.l.bf16 %v3908
  %v3912 = vunpack.c.h.bf16 %v3908
  %v3913 = vpack.c.bf16 %v3906, %v3906
  %3914 = vmatprep.subr.bf16.mxu0 %v3734
  %3915 = vmatpush1.bf16.msra.mxu0 %v3733
  %3916 = vmatprep.subr.bf16.mxu0 %v3738
  %3917 = vmatpush1.bf16.msra.mxu0 %v3737
  %3918 = vmatprep.subr.bf16.mxu0 %v3742
  %3919 = vmatpush1.bf16.msra.mxu0 %v3741
  %3920 = vmatprep.subr.bf16.mxu0 %v3746
  %3921 = vmatpush1.bf16.msra.mxu0 %v3745
  %3922 = vmatprep.subr.bf16.mxu0 %v3750
  %3923 = vmatpush1.bf16.msra.mxu0 %v3749
  %3924 = vmatprep.subr.bf16.mxu0 %v3754
  %3925 = vmatpush1.bf16.msra.mxu0 %v3753
  %3926 = vmatprep.subr.bf16.mxu0 %v3758
  %3927 = vmatpush1.bf16.msra.mxu0 %v3757
  %3928 = vmatprep.subr.bf16.mxu0 %v3762
  %3929 = vmatpush1.bf16.msra.mxu0 %v3761
  %3930 = vmatprep.subr.bf16.mxu0 0
  %3931 = vmatpush1.bf16.msra.mxu0 0
  %3932 = vmatprep.subr.bf16.mxu0 0
  %3933 = vmatpush1.bf16.msra.mxu0 0
  %3934 = vmatprep.subr.bf16.mxu0 0
  %3935 = vmatpush1.bf16.msra.mxu0 0
  %3936 = vmatprep.subr.bf16.mxu0 0
  %3937 = vmatpush1.bf16.msra.mxu0 0
  %3938 = vmatprep.subr.bf16.mxu0 0
  %3939 = vmatpush1.bf16.msra.mxu0 0
  %3940 = vmatprep.subr.bf16.mxu0 0
  %3941 = vmatpush1.bf16.msra.mxu0 0
  %3942 = vmatprep.subr.bf16.mxu0 0
  %3943 = vmatpush1.bf16.msra.mxu0 0
  %3944 = vmatprep.subr.bf16.mxu0 0
  %3945 = vmatpush1.bf16.msra.mxu0 0
  %3946 = vmatprep.mubr.bf16.mxu0 0
  %3947 = vmatmul.mubr.bf16.gmra.mrb[0].mxu0 %v3913
  %v3948 = vpop.f32.mrb[0].mxu0
  %v3949 = vadd.f32 0.0, %v3948
  %v3950 = vpop.f32.mrb[0].mxu0
  %v3951 = vadd.f32 0.0, %v3950
  %v3952 = vpop.f32.mrb[0].mxu0
  %v3953 = vpop.f32.mrb[0].mxu0
  %3954 = vdwg.mxu0
  %3955 = vmatprep.subr.bf16.mxu0 %v3736
  %3956 = vmatpush1.bf16.msra.mxu0 %v3735
  %3957 = vmatprep.subr.bf16.mxu0 %v3740
  %3958 = vmatpush1.bf16.msra.mxu0 %v3739
  %3959 = vmatprep.subr.bf16.mxu0 %v3744
  %3960 = vmatpush1.bf16.msra.mxu0 %v3743
  %3961 = vmatprep.subr.bf16.mxu0 %v3748
  %3962 = vmatpush1.bf16.msra.mxu0 %v3747
  %3963 = vmatprep.subr.bf16.mxu0 %v3752
  %3964 = vmatpush1.bf16.msra.mxu0 %v3751
  %3965 = vmatprep.subr.bf16.mxu0 %v3756
  %3966 = vmatpush1.bf16.msra.mxu0 %v3755
  %3967 = vmatprep.subr.bf16.mxu0 %v3760
  %3968 = vmatpush1.bf16.msra.mxu0 %v3759
  %3969 = vmatprep.subr.bf16.mxu0 %v3764
  %3970 = vmatpush1.bf16.msra.mxu0 %v3763
  %3971 = vmatprep.subr.bf16.mxu0 0
  %3972 = vmatpush1.bf16.msra.mxu0 0
  %3973 = vmatprep.subr.bf16.mxu0 0
  %3974 = vmatpush1.bf16.msra.mxu0 0
  %3975 = vmatprep.subr.bf16.mxu0 0
  %3976 = vmatpush1.bf16.msra.mxu0 0
  %3977 = vmatprep.subr.bf16.mxu0 0
  %3978 = vmatpush1.bf16.msra.mxu0 0
  %3979 = vmatprep.subr.bf16.mxu0 0
  %3980 = vmatpush1.bf16.msra.mxu0 0
  %3981 = vmatprep.subr.bf16.mxu0 0
  %3982 = vmatpush1.bf16.msra.mxu0 0
  %3983 = vmatprep.subr.bf16.mxu0 0
  %3984 = vmatpush1.bf16.msra.mxu0 0
  %3985 = vmatprep.subr.bf16.mxu0 0
  %3986 = vmatpush1.bf16.msra.mxu0 0
  %3987 = vmatprep.mubr.bf16.mxu0 0
  %3988 = vmatmul.mubr.bf16.gmra.mrb[0].mxu0 %v3913
  %v3989 = vpop.f32.mrb[0].mxu0
  %v3990 = vadd.f32 0.0, %v3989
  %v3991 = vpop.f32.mrb[0].mxu0
  %v3992 = vadd.f32 0.0, %v3991
  %v3993 = vpop.f32.mrb[0].mxu0
  %v3994 = vpop.f32.mrb[0].mxu0
  %3995 = vdwg.mxu0
  %v3996 = vadd.f32 %v3909, %v3949
  %v3997 = vadd.f32 %v3910, %v3951
  %v3998 = vadd.f32 %v3911, %v3990
  %v3999 = vadd.f32 %v3912, %v3992
  %v4000 = vxor.u32 %v3996, 2147483648
  %v4001 = vmul.f32 %v4000, 1.442695
  %v4002 = vpow.pop %v4001
  %v4003 = vadd.f32 %v4002, 1.0
  %v4004 = vrcp.pop %v4003
  %v4005 = vmul.f32 1.0, %v4004
  %v4006 = vxor.u32 %v3997, 2147483648
  %v4007 = vmul.f32 %v4006, 1.442695
  %v4008 = vpow.pop %v4007
  %v4009 = vadd.f32 %v4008, 1.0
  %v4010 = vrcp.pop %v4009
  %v4011 = vmul.f32 1.0, %v4010
  %v4012 = vtanh.pop %v3998
  %v4013 = vxor.u32 %v3999, 2147483648
  %v4014 = vmul.f32 %v4013, 1.442695
  %v4015 = vpow.pop %v4014
  %v4016 = vadd.f32 %v4015, 1.0
  %v4017 = vrcp.pop %v4016
  %v4018 = vmul.f32 1.0, %v4017
  %v4019 = vmul.f32 %v4011, %v3904
  %v4020 = vmul.f32 %v4005, %v4012
  %v4021 = vadd.f32 %v4019, %v4020
  %v4022 = vtanh.pop %v4021
  %v4023 = vmul.f32 %v4018, %v4022
  %v4024 = vld [vmem:[%s1191] sm:$0xff]
  %v4025 = vld [vmem:[%s1191 + $0x8] sm:$0xff]
  %v4026 = vunpack.c.l.bf16 %v4024
  %v4027 = vunpack.c.h.bf16 %v4024
  %v4028 = vunpack.c.l.bf16 %v4025
  %v4029 = vunpack.c.h.bf16 %v4025
  %v4030 = vpack.c.bf16 %v4023, %v4023
  %4031 = vmatprep.subr.bf16.mxu0 %v3734
  %4032 = vmatpush1.bf16.msra.mxu0 %v3733
  %4033 = vmatprep.subr.bf16.mxu0 %v3738
  %4034 = vmatpush1.bf16.msra.mxu0 %v3737
  %4035 = vmatprep.subr.bf16.mxu0 %v3742
  %4036 = vmatpush1.bf16.msra.mxu0 %v3741
  %4037 = vmatprep.subr.bf16.mxu0 %v3746
  %4038 = vmatpush1.bf16.msra.mxu0 %v3745
  %4039 = vmatprep.subr.bf16.mxu0 %v3750
  %4040 = vmatpush1.bf16.msra.mxu0 %v3749
  %4041 = vmatprep.subr.bf16.mxu0 %v3754
  %4042 = vmatpush1.bf16.msra.mxu0 %v3753
  %4043 = vmatprep.subr.bf16.mxu0 %v3758
  %4044 = vmatpush1.bf16.msra.mxu0 %v3757
  %4045 = vmatprep.subr.bf16.mxu0 %v3762
  %4046 = vmatpush1.bf16.msra.mxu0 %v3761
  %4047 = vmatprep.subr.bf16.mxu0 0
  %4048 = vmatpush1.bf16.msra.mxu0 0
  %4049 = vmatprep.subr.bf16.mxu0 0
  %4050 = vmatpush1.bf16.msra.mxu0 0
  %4051 = vmatprep.subr.bf16.mxu0 0
  %4052 = vmatpush1.bf16.msra.mxu0 0
  %4053 = vmatprep.subr.bf16.mxu0 0
  %4054 = vmatpush1.bf16.msra.mxu0 0
  %4055 = vmatprep.subr.bf16.mxu0 0
  %4056 = vmatpush1.bf16.msra.mxu0 0
  %4057 = vmatprep.subr.bf16.mxu0 0
  %4058 = vmatpush1.bf16.msra.mxu0 0
  %4059 = vmatprep.subr.bf16.mxu0 0
  %4060 = vmatpush1.bf16.msra.mxu0 0
  %4061 = vmatprep.subr.bf16.mxu0 0
  %4062 = vmatpush1.bf16.msra.mxu0 0
  %4063 = vmatprep.mubr.bf16.mxu0 0
  %4064 = vmatmul.mubr.bf16.gmra.mrb[0].mxu0 %v4030
  %v4065 = vpop.f32.mrb[0].mxu0
  %v4066 = vadd.f32 0.0, %v4065
  %v4067 = vpop.f32.mrb[0].mxu0
  %v4068 = vadd.f32 0.0, %v4067
  %v4069 = vpop.f32.mrb[0].mxu0
  %v4070 = vpop.f32.mrb[0].mxu0
  %4071 = vdwg.mxu0
  %4072 = vmatprep.subr.bf16.mxu0 %v3736
  %4073 = vmatpush1.bf16.msra.mxu0 %v3735
  %4074 = vmatprep.subr.bf16.mxu0 %v3740
  %4075 = vmatpush1.bf16.msra.mxu0 %v3739
  %4076 = vmatprep.subr.bf16.mxu0 %v3744
  %4077 = vmatpush1.bf16.msra.mxu0 %v3743
  %4078 = vmatprep.subr.bf16.mxu0 %v3748
  %4079 = vmatpush1.bf16.msra.mxu0 %v3747
  %4080 = vmatprep.subr.bf16.mxu0 %v3752
  %4081 = vmatpush1.bf16.msra.mxu0 %v3751
  %4082 = vmatprep.subr.bf16.mxu0 %v3756
  %4083 = vmatpush1.bf16.msra.mxu0 %v3755
  %4084 = vmatprep.subr.bf16.mxu0 %v3760
  %4085 = vmatpush1.bf16.msra.mxu0 %v3759
  %4086 = vmatprep.subr.bf16.mxu0 %v3764
  %4087 = vmatpush1.bf16.msra.mxu0 %v3763
  %4088 = vmatprep.subr.bf16.mxu0 0
  %4089 = vmatpush1.bf16.msra.mxu0 0
  %4090 = vmatprep.subr.bf16.mxu0 0
  %4091 = vmatpush1.bf16.msra.mxu0 0
  %4092 = vmatprep.subr.bf16.mxu0 0
  %4093 = vmatpush1.bf16.msra.mxu0 0
  %4094 = vmatprep.subr.bf16.mxu0 0
  %4095 = vmatpush1.bf16.msra.mxu0 0
  %4096 = vmatprep.subr.bf16.mxu0 0
  %4097 = vmatpush1.bf16.msra.mxu0 0
  %4098 = vmatprep.subr.bf16.mxu0 0
  %4099 = vmatpush1.bf16.msra.mxu0 0
  %4100 = vmatprep.subr.bf16.mxu0 0
  %4101 = vmatpush1.bf16.msra.mxu0 0
  %4102 = vmatprep.subr.bf16.mxu0 0
  %4103 = vmatpush1.bf16.msra.mxu0 0
  %4104 = vmatprep.mubr.bf16.mxu0 0
  %4105 = vmatmul.mubr.bf16.gmra.mrb[0].mxu0 %v4030
  %v4106 = vpop.f32.mrb[0].mxu0
  %v4107 = vadd.f32 0.0, %v4106
  %v4108 = vpop.f32.mrb[0].mxu0
  %v4109 = vadd.f32 0.0, %v4108
  %v4110 = vpop.f32.mrb[0].mxu0
  %v4111 = vpop.f32.mrb[0].mxu0
  %4112 = vdwg.mxu0
  %v4113 = vadd.f32 %v4026, %v4066
  %v4114 = vadd.f32 %v4027, %v4068
  %v4115 = vadd.f32 %v4028, %v4107
  %v4116 = vadd.f32 %v4029, %v4109
  %v4117 = vxor.u32 %v4113, 2147483648
  %v4118 = vmul.f32 %v4117, 1.442695
  %v4119 = vpow.pop %v4118
  %v4120 = vadd.f32 %v4119, 1.0
  %v4121 = vrcp.pop %v4120
  %v4122 = vmul.f32 1.0, %v4121
  %v4123 = vxor.u32 %v4114, 2147483648
  %v4124 = vmul.f32 %v4123, 1.442695
  %v4125 = vpow.pop %v4124
  %v4126 = vadd.f32 %v4125, 1.0
  %v4127 = vrcp.pop %v4126
  %v4128 = vmul.f32 1.0, %v4127
  %v4129 = vtanh.pop %v4115
  %v4130 = vxor.u32 %v4116, 2147483648
  %v4131 = vmul.f32 %v4130, 1.442695
  %v4132 = vpow.pop %v4131
  %v4133 = vadd.f32 %v4132, 1.0
  %v4134 = vrcp.pop %v4133
  %v4135 = vmul.f32 1.0, %v4134
  %v4136 = vmul.f32 %v4128, %v4021
  %v4137 = vmul.f32 %v4122, %v4129
  %v4138 = vadd.f32 %v4136, %v4137
  %v4139 = vtanh.pop %v4138
  %v4140 = vmul.f32 %v4135, %v4139
  %v4141 = vld [vmem:[%s1503] sm:$0xff]
  %v4142 = vld [vmem:[%s1503 + $0x8] sm:$0xff]
  %v4143 = vunpack.c.l.bf16 %v4141
  %v4144 = vunpack.c.h.bf16 %v4141
  %v4145 = vunpack.c.l.bf16 %v4142
  %v4146 = vunpack.c.h.bf16 %v4142
  %v4147 = vpack.c.bf16 %v4140, %v4140
  %4148 = vmatprep.subr.bf16.mxu0 %v3734
  %4149 = vmatpush1.bf16.msra.mxu0 %v3733
  %4150 = vmatprep.subr.bf16.mxu0 %v3738
  %4151 = vmatpush1.bf16.msra.mxu0 %v3737
  %4152 = vmatprep.subr.bf16.mxu0 %v3742
  %4153 = vmatpush1.bf16.msra.mxu0 %v3741
  %4154 = vmatprep.subr.bf16.mxu0 %v3746
  %4155 = vmatpush1.bf16.msra.mxu0 %v3745
  %4156 = vmatprep.subr.bf16.mxu0 %v3750
  %4157 = vmatpush1.bf16.msra.mxu0 %v3749
  %4158 = vmatprep.subr.bf16.mxu0 %v3754
  %4159 = vmatpush1.bf16.msra.mxu0 %v3753
  %4160 = vmatprep.subr.bf16.mxu0 %v3758
  %4161 = vmatpush1.bf16.msra.mxu0 %v3757
  %4162 = vmatprep.subr.bf16.mxu0 %v3762
  %4163 = vmatpush1.bf16.msra.mxu0 %v3761
  %4164 = vmatprep.subr.bf16.mxu0 0
  %4165 = vmatpush1.bf16.msra.mxu0 0
  %4166 = vmatprep.subr.bf16.mxu0 0
  %4167 = vmatpush1.bf16.msra.mxu0 0
  %4168 = vmatprep.subr.bf16.mxu0 0
  %4169 = vmatpush1.bf16.msra.mxu0 0
  %4170 = vmatprep.subr.bf16.mxu0 0
  %4171 = vmatpush1.bf16.msra.mxu0 0
  %4172 = vmatprep.subr.bf16.mxu0 0
  %4173 = vmatpush1.bf16.msra.mxu0 0
  %4174 = vmatprep.subr.bf16.mxu0 0
  %4175 = vmatpush1.bf16.msra.mxu0 0
  %4176 = vmatprep.subr.bf16.mxu0 0
  %4177 = vmatpush1.bf16.msra.mxu0 0
  %4178 = vmatprep.subr.bf16.mxu0 0
  %4179 = vmatpush1.bf16.msra.mxu0 0
  %4180 = vmatprep.mubr.bf16.mxu0 0
  %4181 = vmatmul.mubr.bf16.gmra.mrb[0].mxu0 %v4147
  %v4182 = vpop.f32.mrb[0].mxu0
  %v4183 = vadd.f32 0.0, %v4182
  %v4184 = vpop.f32.mrb[0].mxu0
  %v4185 = vadd.f32 0.0, %v4184
  %v4186 = vpop.f32.mrb[0].mxu0
  %v4187 = vpop.f32.mrb[0].mxu0
  %4188 = vdwg.mxu0
  %4189 = vmatprep.subr.bf16.mxu0 %v3736
  %4190 = vmatpush1.bf16.msra.mxu0 %v3735
  %4191 = vmatprep.subr.bf16.mxu0 %v3740
  %4192 = vmatpush1.bf16.msra.mxu0 %v3739
  %4193 = vmatprep.subr.bf16.mxu0 %v3744
  %4194 = vmatpush1.bf16.msra.mxu0 %v3743
  %4195 = vmatprep.subr.bf16.mxu0 %v3748
  %4196 = vmatpush1.bf16.msra.mxu0 %v3747
  %4197 = vmatprep.subr.bf16.mxu0 %v3752
  %4198 = vmatpush1.bf16.msra.mxu0 %v3751
  %4199 = vmatprep.subr.bf16.mxu0 %v3756
  %4200 = vmatpush1.bf16.msra.mxu0 %v3755
  %4201 = vmatprep.subr.bf16.mxu0 %v3760
  %4202 = vmatpush1.bf16.msra.mxu0 %v3759
  %4203 = vmatprep.subr.bf16.mxu0 %v3764
  %4204 = vmatpush1.bf16.msra.mxu0 %v3763
  %4205 = vmatprep.subr.bf16.mxu0 0
  %4206 = vmatpush1.bf16.msra.mxu0 0
  %4207 = vmatprep.subr.bf16.mxu0 0
  %4208 = vmatpush1.bf16.msra.mxu0 0
  %4209 = vmatprep.subr.bf16.mxu0 0
  %4210 = vmatpush1.bf16.msra.mxu0 0
  %4211 = vmatprep.subr.bf16.mxu0 0
  %4212 = vmatpush1.bf16.msra.mxu0 0
  %4213 = vmatprep.subr.bf16.mxu0 0
  %4214 = vmatpush1.bf16.msra.mxu0 0
  %4215 = vmatprep.subr.bf16.mxu0 0
  %4216 = vmatpush1.bf16.msra.mxu0 0
  %4217 = vmatprep.subr.bf16.mxu0 0
  %4218 = vmatpush1.bf16.msra.mxu0 0
  %4219 = vmatprep.subr.bf16.mxu0 0
  %4220 = vmatpush1.bf16.msra.mxu0 0
  %4221 = vmatprep.mubr.bf16.mxu0 0
  %4222 = vmatmul.mubr.bf16.gmra.mrb[0].mxu0 %v4147
  %v4223 = vpop.f32.mrb[0].mxu0
  %v4224 = vadd.f32 0.0, %v4223
  %v4225 = vpop.f32.mrb[0].mxu0
  %v4226 = vadd.f32 0.0, %v4225
  %v4227 = vpop.f32.mrb[0].mxu0
  %v4228 = vpop.f32.mrb[0].mxu0
  %4229 = vdwg.mxu0
  %v4230 = vadd.f32 %v4143, %v4183
  %v4231 = vadd.f32 %v4144, %v4185
  %v4232 = vadd.f32 %v4145, %v4224
  %v4233 = vadd.f32 %v4146, %v4226
  %v4234 = vxor.u32 %v4230, 2147483648
  %v4235 = vmul.f32 %v4234, 1.442695
  %v4236 = vpow.pop %v4235
  %v4237 = vadd.f32 %v4236, 1.0
  %v4238 = vrcp.pop %v4237
  %v4239 = vmul.f32 1.0, %v4238
  %v4240 = vxor.u32 %v4231, 2147483648
  %v4241 = vmul.f32 %v4240, 1.442695
  %v4242 = vpow.pop %v4241
  %v4243 = vadd.f32 %v4242, 1.0
  %v4244 = vrcp.pop %v4243
  %v4245 = vmul.f32 1.0, %v4244
  %v4246 = vtanh.pop %v4232
  %v4247 = vxor.u32 %v4233, 2147483648
  %v4248 = vmul.f32 %v4247, 1.442695
  %v4249 = vpow.pop %v4248
  %v4250 = vadd.f32 %v4249, 1.0
  %v4251 = vrcp.pop %v4250
  %v4252 = vmul.f32 1.0, %v4251
  %v4253 = vmul.f32 %v4245, %v4138
  %v4254 = vmul.f32 %v4239, %v4246
  %v4255 = vadd.f32 %v4253, %v4254
  %v4256 = vtanh.pop %v4255
  %v4257 = vmul.f32 %v4252, %v4256
  %v4258 = vld [vmem:[%s1815] sm:$0xff]
  %v4259 = vld [vmem:[%s1815 + $0x8] sm:$0xff]
  %v4260 = vunpack.c.l.bf16 %v4258
  %v4261 = vunpack.c.h.bf16 %v4258
  %v4262 = vunpack.c.l.bf16 %v4259
  %v4263 = vunpack.c.h.bf16 %v4259
  %v4264 = vpack.c.bf16 %v4257, %v4257
  %4265 = vmatprep.subr.bf16.mxu0 %v3734
  %4266 = vmatpush1.bf16.msra.mxu0 %v3733
  %4267 = vmatprep.subr.bf16.mxu0 %v3738
  %4268 = vmatpush1.bf16.msra.mxu0 %v3737
  %4269 = vmatprep.subr.bf16.mxu0 %v3742
  %4270 = vmatpush1.bf16.msra.mxu0 %v3741
  %4271 = vmatprep.subr.bf16.mxu0 %v3746
  %4272 = vmatpush1.bf16.msra.mxu0 %v3745
  %4273 = vmatprep.subr.bf16.mxu0 %v3750
  %4274 = vmatpush1.bf16.msra.mxu0 %v3749
  %4275 = vmatprep.subr.bf16.mxu0 %v3754
  %4276 = vmatpush1.bf16.msra.mxu0 %v3753
  %4277 = vmatprep.subr.bf16.mxu0 %v3758
  %4278 = vmatpush1.bf16.msra.mxu0 %v3757
  %4279 = vmatprep.subr.bf16.mxu0 %v3762
  %4280 = vmatpush1.bf16.msra.mxu0 %v3761
  %4281 = vmatprep.subr.bf16.mxu0 0
  %4282 = vmatpush1.bf16.msra.mxu0 0
  %4283 = vmatprep.subr.bf16.mxu0 0
  %4284 = vmatpush1.bf16.msra.mxu0 0
  %4285 = vmatprep.subr.bf16.mxu0 0
  %4286 = vmatpush1.bf16.msra.mxu0 0
  %4287 = vmatprep.subr.bf16.mxu0 0
  %4288 = vmatpush1.bf16.msra.mxu0 0
  %4289 = vmatprep.subr.bf16.mxu0 0
  %4290 = vmatpush1.bf16.msra.mxu0 0
  %4291 = vmatprep.subr.bf16.mxu0 0
  %4292 = vmatpush1.bf16.msra.mxu0 0
  %4293 = vmatprep.subr.bf16.mxu0 0
  %4294 = vmatpush1.bf16.msra.mxu0 0
  %4295 = vmatprep.subr.bf16.mxu0 0
  %4296 = vmatpush1.bf16.msra.mxu0 0
  %4297 = vmatprep.mubr.bf16.mxu0 0
  %4298 = vmatmul.mubr.bf16.gmra.mrb[0].mxu0 %v4264
  %v4299 = vpop.f32.mrb[0].mxu0
  %v4300 = vadd.f32 0.0, %v4299
  %v4301 = vpop.f32.mrb[0].mxu0
  %v4302 = vadd.f32 0.0, %v4301
  %v4303 = vpop.f32.mrb[0].mxu0
  %v4304 = vpop.f32.mrb[0].mxu0
  %4305 = vdwg.mxu0
  %4306 = vmatprep.subr.bf16.mxu0 %v3736
  %4307 = vmatpush1.bf16.msra.mxu0 %v3735
  %4308 = vmatprep.subr.bf16.mxu0 %v3740
  %4309 = vmatpush1.bf16.msra.mxu0 %v3739
  %4310 = vmatprep.subr.bf16.mxu0 %v3744
  %4311 = vmatpush1.bf16.msra.mxu0 %v3743
  %4312 = vmatprep.subr.bf16.mxu0 %v3748
  %4313 = vmatpush1.bf16.msra.mxu0 %v3747
  %4314 = vmatprep.subr.bf16.mxu0 %v3752
  %4315 = vmatpush1.bf16.msra.mxu0 %v3751
  %4316 = vmatprep.subr.bf16.mxu0 %v3756
  %4317 = vmatpush1.bf16.msra.mxu0 %v3755
  %4318 = vmatprep.subr.bf16.mxu0 %v3760
  %4319 = vmatpush1.bf16.msra.mxu0 %v3759
  %4320 = vmatprep.subr.bf16.mxu0 %v3764
  %4321 = vmatpush1.bf16.msra.mxu0 %v3763
  %4322 = vmatprep.subr.bf16.mxu0 0
  %4323 = vmatpush1.bf16.msra.mxu0 0
  %4324 = vmatprep.subr.bf16.mxu0 0
  %4325 = vmatpush1.bf16.msra.mxu0 0
  %4326 = vmatprep.subr.bf16.mxu0 0
  %4327 = vmatpush1.bf16.msra.mxu0 0
  %4328 = vmatprep.subr.bf16.mxu0 0
  %4329 = vmatpush1.bf16.msra.mxu0 0
  %4330 = vmatprep.subr.bf16.mxu0 0
  %4331 = vmatpush1.bf16.msra.mxu0 0
  %4332 = vmatprep.subr.bf16.mxu0 0
  %4333 = vmatpush1.bf16.msra.mxu0 0
  %4334 = vmatprep.subr.bf16.mxu0 0
  %4335 = vmatpush1.bf16.msra.mxu0 0
  %4336 = vmatprep.subr.bf16.mxu0 0
  %4337 = vmatpush1.bf16.msra.mxu0 0
  %4338 = vmatprep.mubr.bf16.mxu0 0
  %4339 = vmatmul.mubr.bf16.gmra.mrb[0].mxu0 %v4264
  %v4340 = vpop.f32.mrb[0].mxu0
  %v4341 = vadd.f32 0.0, %v4340
  %v4342 = vpop.f32.mrb[0].mxu0
  %v4343 = vadd.f32 0.0, %v4342
  %v4344 = vpop.f32.mrb[0].mxu0
  %v4345 = vpop.f32.mrb[0].mxu0
  %4346 = vdwg.mxu0
  %v4347 = vadd.f32 %v4260, %v4300
  %v4348 = vadd.f32 %v4261, %v4302
  %v4349 = vadd.f32 %v4262, %v4341
  %v4350 = vadd.f32 %v4263, %v4343
  %v4351 = vxor.u32 %v4347, 2147483648
  %v4352 = vmul.f32 %v4351, 1.442695
  %v4353 = vpow.pop %v4352
  %v4354 = vadd.f32 %v4353, 1.0
  %v4355 = vrcp.pop %v4354
  %v4356 = vmul.f32 1.0, %v4355
  %v4357 = vxor.u32 %v4348, 2147483648
  %v4358 = vmul.f32 %v4357, 1.442695
  %v4359 = vpow.pop %v4358
  %v4360 = vadd.f32 %v4359, 1.0
  %v4361 = vrcp.pop %v4360
  %v4362 = vmul.f32 1.0, %v4361
  %v4363 = vtanh.pop %v4349
  %v4364 = vxor.u32 %v4350, 2147483648
  %v4365 = vmul.f32 %v4364, 1.442695
  %v4366 = vpow.pop %v4365
  %v4367 = vadd.f32 %v4366, 1.0
  %v4368 = vrcp.pop %v4367
  %v4369 = vmul.f32 1.0, %v4368
  %v4370 = vmul.f32 %v4362, %v4255
  %v4371 = vmul.f32 %v4356, %v4363
  %v4372 = vadd.f32 %v4370, %v4371
  %v4373 = vtanh.pop %v4372
  %v4374 = vmul.f32 %v4369, %v4373
  %v4375 = vld [vmem:[%s2127] sm:$0xff]
  %v4376 = vld [vmem:[%s2127 + $0x8] sm:$0xff]
  %v4377 = vunpack.c.l.bf16 %v4375
  %v4378 = vunpack.c.h.bf16 %v4375
  %v4379 = vunpack.c.l.bf16 %v4376
  %v4380 = vunpack.c.h.bf16 %v4376
  %v4381 = vpack.c.bf16 %v4374, %v4374
  %4382 = vmatprep.subr.bf16.mxu0 %v3734
  %4383 = vmatpush1.bf16.msra.mxu0 %v3733
  %4384 = vmatprep.subr.bf16.mxu0 %v3738
  %4385 = vmatpush1.bf16.msra.mxu0 %v3737
  %4386 = vmatprep.subr.bf16.mxu0 %v3742
  %4387 = vmatpush1.bf16.msra.mxu0 %v3741
  %4388 = vmatprep.subr.bf16.mxu0 %v3746
  %4389 = vmatpush1.bf16.msra.mxu0 %v3745
  %4390 = vmatprep.subr.bf16.mxu0 %v3750
  %4391 = vmatpush1.bf16.msra.mxu0 %v3749
  %4392 = vmatprep.subr.bf16.mxu0 %v3754
  %4393 = vmatpush1.bf16.msra.mxu0 %v3753
  %4394 = vmatprep.subr.bf16.mxu0 %v3758
  %4395 = vmatpush1.bf16.msra.mxu0 %v3757
  %4396 = vmatprep.subr.bf16.mxu0 %v3762
  %4397 = vmatpush1.bf16.msra.mxu0 %v3761
  %4398 = vmatprep.subr.bf16.mxu0 0
  %4399 = vmatpush1.bf16.msra.mxu0 0
  %4400 = vmatprep.subr.bf16.mxu0 0
  %4401 = vmatpush1.bf16.msra.mxu0 0
  %4402 = vmatprep.subr.bf16.mxu0 0
  %4403 = vmatpush1.bf16.msra.mxu0 0
  %4404 = vmatprep.subr.bf16.mxu0 0
  %4405 = vmatpush1.bf16.msra.mxu0 0
  %4406 = vmatprep.subr.bf16.mxu0 0
  %4407 = vmatpush1.bf16.msra.mxu0 0
  %4408 = vmatprep.subr.bf16.mxu0 0
  %4409 = vmatpush1.bf16.msra.mxu0 0
  %4410 = vmatprep.subr.bf16.mxu0 0
  %4411 = vmatpush1.bf16.msra.mxu0 0
  %4412 = vmatprep.subr.bf16.mxu0 0
  %4413 = vmatpush1.bf16.msra.mxu0 0
  %4414 = vmatprep.mubr.bf16.mxu0 0
  %4415 = vmatmul.mubr.bf16.gmra.mrb[0].mxu0 %v4381
  %v4416 = vpop.f32.mrb[0].mxu0
  %v4417 = vadd.f32 0.0, %v4416
  %v4418 = vpop.f32.mrb[0].mxu0
  %v4419 = vadd.f32 0.0, %v4418
  %v4420 = vpop.f32.mrb[0].mxu0
  %v4421 = vpop.f32.mrb[0].mxu0
  %4422 = vdwg.mxu0
  %4423 = vmatprep.subr.bf16.mxu0 %v3736
  %4424 = vmatpush1.bf16.msra.mxu0 %v3735
  %4425 = vmatprep.subr.bf16.mxu0 %v3740
  %4426 = vmatpush1.bf16.msra.mxu0 %v3739
  %4427 = vmatprep.subr.bf16.mxu0 %v3744
  %4428 = vmatpush1.bf16.msra.mxu0 %v3743
  %4429 = vmatprep.subr.bf16.mxu0 %v3748
  %4430 = vmatpush1.bf16.msra.mxu0 %v3747
  %4431 = vmatprep.subr.bf16.mxu0 %v3752
  %4432 = vmatpush1.bf16.msra.mxu0 %v3751
  %4433 = vmatprep.subr.bf16.mxu0 %v3756
  %4434 = vmatpush1.bf16.msra.mxu0 %v3755
  %4435 = vmatprep.subr.bf16.mxu0 %v3760
  %4436 = vmatpush1.bf16.msra.mxu0 %v3759
  %4437 = vmatprep.subr.bf16.mxu0 %v3764
  %4438 = vmatpush1.bf16.msra.mxu0 %v3763
  %4439 = vmatprep.subr.bf16.mxu0 0
  %4440 = vmatpush1.bf16.msra.mxu0 0
  %4441 = vmatprep.subr.bf16.mxu0 0
  %4442 = vmatpush1.bf16.msra.mxu0 0
  %4443 = vmatprep.subr.bf16.mxu0 0
  %4444 = vmatpush1.bf16.msra.mxu0 0
  %4445 = vmatprep.subr.bf16.mxu0 0
  %4446 = vmatpush1.bf16.msra.mxu0 0
  %4447 = vmatprep.subr.bf16.mxu0 0
  %4448 = vmatpush1.bf16.msra.mxu0 0
  %4449 = vmatprep.subr.bf16.mxu0 0
  %4450 = vmatpush1.bf16.msra.mxu0 0
  %4451 = vmatprep.subr.bf16.mxu0 0
  %4452 = vmatpush1.bf16.msra.mxu0 0
  %4453 = vmatprep.subr.bf16.mxu0 0
  %4454 = vmatpush1.bf16.msra.mxu0 0
  %4455 = vmatprep.mubr.bf16.mxu0 0
  %4456 = vmatmul.mubr.bf16.gmra.mrb[0].mxu0 %v4381
  %v4457 = vpop.f32.mrb[0].mxu0
  %v4458 = vadd.f32 0.0, %v4457
  %v4459 = vpop.f32.mrb[0].mxu0
  %v4460 = vadd.f32 0.0, %v4459
  %v4461 = vpop.f32.mrb[0].mxu0
  %v4462 = vpop.f32.mrb[0].mxu0
  %4463 = vdwg.mxu0
  %v4464 = vadd.f32 %v4377, %v4417
  %v4465 = vadd.f32 %v4378, %v4419
  %v4466 = vadd.f32 %v4379, %v4458
  %v4467 = vadd.f32 %v4380, %v4460
  %v4468 = vxor.u32 %v4464, 2147483648
  %v4469 = vmul.f32 %v4468, 1.442695
  %v4470 = vpow.pop %v4469
  %v4471 = vadd.f32 %v4470, 1.0
  %v4472 = vrcp.pop %v4471
  %v4473 = vmul.f32 1.0, %v4472
  %v4474 = vxor.u32 %v4465, 2147483648
  %v4475 = vmul.f32 %v4474, 1.442695
  %v4476 = vpow.pop %v4475
  %v4477 = vadd.f32 %v4476, 1.0
  %v4478 = vrcp.pop %v4477
  %v4479 = vmul.f32 1.0, %v4478
  %v4480 = vtanh.pop %v4466
  %v4481 = vxor.u32 %v4467, 2147483648
  %v4482 = vmul.f32 %v4481, 1.442695
  %v4483 = vpow.pop %v4482
  %v4484 = vadd.f32 %v4483, 1.0
  %v4485 = vrcp.pop %v4484
  %v4486 = vmul.f32 1.0, %v4485
  %v4487 = vmul.f32 %v4479, %v4372
  %v4488 = vmul.f32 %v4473, %v4480
  %v4489 = vadd.f32 %v4487, %v4488
  %v4490 = vtanh.pop %v4489
  %v4491 = vmul.f32 %v4486, %v4490
  %v4492 = vld [vmem:[%s2439] sm:$0xff]
  %v4493 = vld [vmem:[%s2439 + $0x8] sm:$0xff]
  %v4494 = vunpack.c.l.bf16 %v4492
  %v4495 = vunpack.c.h.bf16 %v4492
  %v4496 = vunpack.c.l.bf16 %v4493
  %v4497 = vunpack.c.h.bf16 %v4493
  %v4498 = vpack.c.bf16 %v4491, %v4491
  %4499 = vmatprep.subr.bf16.mxu0 %v3734
  %4500 = vmatpush1.bf16.msra.mxu0 %v3733
  %4501 = vmatprep.subr.bf16.mxu0 %v3738
  %4502 = vmatpush1.bf16.msra.mxu0 %v3737
  %4503 = vmatprep.subr.bf16.mxu0 %v3742
  %4504 = vmatpush1.bf16.msra.mxu0 %v3741
  %4505 = vmatprep.subr.bf16.mxu0 %v3746
  %4506 = vmatpush1.bf16.msra.mxu0 %v3745
  %4507 = vmatprep.subr.bf16.mxu0 %v3750
  %4508 = vmatpush1.bf16.msra.mxu0 %v3749
  %4509 = vmatprep.subr.bf16.mxu0 %v3754
  %4510 = vmatpush1.bf16.msra.mxu0 %v3753
  %4511 = vmatprep.subr.bf16.mxu0 %v3758
  %4512 = vmatpush1.bf16.msra.mxu0 %v3757
  %4513 = vmatprep.subr.bf16.mxu0 %v3762
  %4514 = vmatpush1.bf16.msra.mxu0 %v3761
  %4515 = vmatprep.subr.bf16.mxu0 0
  %4516 = vmatpush1.bf16.msra.mxu0 0
  %4517 = vmatprep.subr.bf16.mxu0 0
  %4518 = vmatpush1.bf16.msra.mxu0 0
  %4519 = vmatprep.subr.bf16.mxu0 0
  %4520 = vmatpush1.bf16.msra.mxu0 0
  %4521 = vmatprep.subr.bf16.mxu0 0
  %4522 = vmatpush1.bf16.msra.mxu0 0
  %4523 = vmatprep.subr.bf16.mxu0 0
  %4524 = vmatpush1.bf16.msra.mxu0 0
  %4525 = vmatprep.subr.bf16.mxu0 0
  %4526 = vmatpush1.bf16.msra.mxu0 0
  %4527 = vmatprep.subr.bf16.mxu0 0
  %4528 = vmatpush1.bf16.msra.mxu0 0
  %4529 = vmatprep.subr.bf16.mxu0 0
  %4530 = vmatpush1.bf16.msra.mxu0 0
  %4531 = vmatprep.mubr.bf16.mxu0 0
  %4532 = vmatmul.mubr.bf16.gmra.mrb[0].mxu0 %v4498
  %v4533 = vpop.f32.mrb[0].mxu0
  %v4534 = vadd.f32 0.0, %v4533
  %v4535 = vpop.f32.mrb[0].mxu0
  %v4536 = vadd.f32 0.0, %v4535
  %v4537 = vpop.f32.mrb[0].mxu0
  %v4538 = vpop.f32.mrb[0].mxu0
  %4539 = vdwg.mxu0
  %4540 = vmatprep.subr.bf16.mxu0 %v3736
  %4541 = vmatpush1.bf16.msra.mxu0 %v3735
  %4542 = vmatprep.subr.bf16.mxu0 %v3740
  %4543 = vmatpush1.bf16.msra.mxu0 %v3739
  %4544 = vmatprep.subr.bf16.mxu0 %v3744
  %4545 = vmatpush1.bf16.msra.mxu0 %v3743
  %4546 = vmatprep.subr.bf16.mxu0 %v3748
  %4547 = vmatpush1.bf16.msra.mxu0 %v3747
  %4548 = vmatprep.subr.bf16.mxu0 %v3752
  %4549 = vmatpush1.bf16.msra.mxu0 %v3751
  %4550 = vmatprep.subr.bf16.mxu0 %v3756
  %4551 = vmatpush1.bf16.msra.mxu0 %v3755
  %4552 = vmatprep.subr.bf16.mxu0 %v3760
  %4553 = vmatpush1.bf16.msra.mxu0 %v3759
  %4554 = vmatprep.subr.bf16.mxu0 %v3764
  %4555 = vmatpush1.bf16.msra.mxu0 %v3763
  %4556 = vmatprep.subr.bf16.mxu0 0
  %4557 = vmatpush1.bf16.msra.mxu0 0
  %4558 = vmatprep.subr.bf16.mxu0 0
  %4559 = vmatpush1.bf16.msra.mxu0 0
  %4560 = vmatprep.subr.bf16.mxu0 0
  %4561 = vmatpush1.bf16.msra.mxu0 0
  %4562 = vmatprep.subr.bf16.mxu0 0
  %4563 = vmatpush1.bf16.msra.mxu0 0
  %4564 = vmatprep.subr.bf16.mxu0 0
  %4565 = vmatpush1.bf16.msra.mxu0 0
  %4566 = vmatprep.subr.bf16.mxu0 0
  %4567 = vmatpush1.bf16.msra.mxu0 0
  %4568 = vmatprep.subr.bf16.mxu0 0
  %4569 = vmatpush1.bf16.msra.mxu0 0
  %4570 = vmatprep.subr.bf16.mxu0 0
  %4571 = vmatpush1.bf16.msra.mxu0 0
  %4572 = vmatprep.mubr.bf16.mxu0 0
  %4573 = vmatmul.mubr.bf16.gmra.mrb[0].mxu0 %v4498
  %v4574 = vpop.f32.mrb[0].mxu0
  %v4575 = vadd.f32 0.0, %v4574
  %v4576 = vpop.f32.mrb[0].mxu0
  %v4577 = vadd.f32 0.0, %v4576
  %v4578 = vpop.f32.mrb[0].mxu0
  %v4579 = vpop.f32.mrb[0].mxu0
  %4580 = vdwg.mxu0
  %v4581 = vadd.f32 %v4494, %v4534
  %v4582 = vadd.f32 %v4495, %v4536
  %v4583 = vadd.f32 %v4496, %v4575
  %v4584 = vadd.f32 %v4497, %v4577
  %v4585 = vxor.u32 %v4581, 2147483648
  %v4586 = vmul.f32 %v4585, 1.442695
  %v4587 = vpow.pop %v4586
  %v4588 = vadd.f32 %v4587, 1.0
  %v4589 = vrcp.pop %v4588
  %v4590 = vmul.f32 1.0, %v4589
  %v4591 = vxor.u32 %v4582, 2147483648
  %v4592 = vmul.f32 %v4591, 1.442695
  %v4593 = vpow.pop %v4592
  %v4594 = vadd.f32 %v4593, 1.0
  %v4595 = vrcp.pop %v4594
  %v4596 = vmul.f32 1.0, %v4595
  %v4597 = vtanh.pop %v4583
  %v4598 = vxor.u32 %v4584, 2147483648
  %v4599 = vmul.f32 %v4598, 1.442695
  %v4600 = vpow.pop %v4599
  %v4601 = vadd.f32 %v4600, 1.0
  %v4602 = vrcp.pop %v4601
  %v4603 = vmul.f32 1.0, %v4602
  %v4604 = vmul.f32 %v4596, %v4489
  %v4605 = vmul.f32 %v4590, %v4597
  %v4606 = vadd.f32 %v4604, %v4605
  %v4607 = vtanh.pop %v4606
  %v4608 = vmul.f32 %v4603, %v4607
  %v4609 = vld [vmem:[%s2751] sm:$0xff]
  %v4610 = vld [vmem:[%s2751 + $0x8] sm:$0xff]
  %v4611 = vunpack.c.l.bf16 %v4609
  %v4612 = vunpack.c.h.bf16 %v4609
  %v4613 = vunpack.c.l.bf16 %v4610
  %v4614 = vunpack.c.h.bf16 %v4610
  %v4615 = vpack.c.bf16 %v4608, %v4608
  %4616 = vmatprep.subr.bf16.mxu0 %v3734
  %4617 = vmatpush1.bf16.msra.mxu0 %v3733
  %4618 = vmatprep.subr.bf16.mxu0 %v3738
  %4619 = vmatpush1.bf16.msra.mxu0 %v3737
  %4620 = vmatprep.subr.bf16.mxu0 %v3742
  %4621 = vmatpush1.bf16.msra.mxu0 %v3741
  %4622 = vmatprep.subr.bf16.mxu0 %v3746
  %4623 = vmatpush1.bf16.msra.mxu0 %v3745
  %4624 = vmatprep.subr.bf16.mxu0 %v3750
  %4625 = vmatpush1.bf16.msra.mxu0 %v3749
  %4626 = vmatprep.subr.bf16.mxu0 %v3754
  %4627 = vmatpush1.bf16.msra.mxu0 %v3753
  %4628 = vmatprep.subr.bf16.mxu0 %v3758
  %4629 = vmatpush1.bf16.msra.mxu0 %v3757
  %4630 = vmatprep.subr.bf16.mxu0 %v3762
  %4631 = vmatpush1.bf16.msra.mxu0 %v3761
  %4632 = vmatprep.subr.bf16.mxu0 0
  %4633 = vmatpush1.bf16.msra.mxu0 0
  %4634 = vmatprep.subr.bf16.mxu0 0
  %4635 = vmatpush1.bf16.msra.mxu0 0
  %4636 = vmatprep.subr.bf16.mxu0 0
  %4637 = vmatpush1.bf16.msra.mxu0 0
  %4638 = vmatprep.subr.bf16.mxu0 0
  %4639 = vmatpush1.bf16.msra.mxu0 0
  %4640 = vmatprep.subr.bf16.mxu0 0
  %4641 = vmatpush1.bf16.msra.mxu0 0
  %4642 = vmatprep.subr.bf16.mxu0 0
  %4643 = vmatpush1.bf16.msra.mxu0 0
  %4644 = vmatprep.subr.bf16.mxu0 0
  %4645 = vmatpush1.bf16.msra.mxu0 0
  %4646 = vmatprep.subr.bf16.mxu0 0
  %4647 = vmatpush1.bf16.msra.mxu0 0
  %4648 = vmatprep.mubr.bf16.mxu0 0
  %4649 = vmatmul.mubr.bf16.gmra.mrb[0].mxu0 %v4615
  %v4650 = vpop.f32.mrb[0].mxu0
  %v4651 = vadd.f32 0.0, %v4650
  %v4652 = vpop.f32.mrb[0].mxu0
  %v4653 = vadd.f32 0.0, %v4652
  %v4654 = vpop.f32.mrb[0].mxu0
  %v4655 = vpop.f32.mrb[0].mxu0
  %4656 = vdwg.mxu0
  %4657 = vmatprep.subr.bf16.mxu0 %v3736
  %4658 = vmatpush1.bf16.msra.mxu0 %v3735
  %4659 = vmatprep.subr.bf16.mxu0 %v3740
  %4660 = vmatpush1.bf16.msra.mxu0 %v3739
  %4661 = vmatprep.subr.bf16.mxu0 %v3744
  %4662 = vmatpush1.bf16.msra.mxu0 %v3743
  %4663 = vmatprep.subr.bf16.mxu0 %v3748
  %4664 = vmatpush1.bf16.msra.mxu0 %v3747
  %4665 = vmatprep.subr.bf16.mxu0 %v3752
  %4666 = vmatpush1.bf16.msra.mxu0 %v3751
  %4667 = vmatprep.subr.bf16.mxu0 %v3756
  %4668 = vmatpush1.bf16.msra.mxu0 %v3755
  %4669 = vmatprep.subr.bf16.mxu0 %v3760
  %4670 = vmatpush1.bf16.msra.mxu0 %v3759
  %4671 = vmatprep.subr.bf16.mxu0 %v3764
  %4672 = vmatpush1.bf16.msra.mxu0 %v3763
  %4673 = vmatprep.subr.bf16.mxu0 0
  %4674 = vmatpush1.bf16.msra.mxu0 0
  %4675 = vmatprep.subr.bf16.mxu0 0
  %4676 = vmatpush1.bf16.msra.mxu0 0
  %4677 = vmatprep.subr.bf16.mxu0 0
  %4678 = vmatpush1.bf16.msra.mxu0 0
  %4679 = vmatprep.subr.bf16.mxu0 0
  %4680 = vmatpush1.bf16.msra.mxu0 0
  %4681 = vmatprep.subr.bf16.mxu0 0
  %4682 = vmatpush1.bf16.msra.mxu0 0
  %4683 = vmatprep.subr.bf16.mxu0 0
  %4684 = vmatpush1.bf16.msra.mxu0 0
  %4685 = vmatprep.subr.bf16.mxu0 0
  %4686 = vmatpush1.bf16.msra.mxu0 0
  %4687 = vmatprep.subr.bf16.mxu0 0
  %4688 = vmatpush1.bf16.msra.mxu0 0
  %4689 = vmatprep.mubr.bf16.mxu0 0
  %4690 = vmatmul.mubr.bf16.gmra.mrb[0].mxu0 %v4615
  %v4691 = vpop.f32.mrb[0].mxu0
  %v4692 = vadd.f32 0.0, %v4691
  %v4693 = vpop.f32.mrb[0].mxu0
  %v4694 = vadd.f32 0.0, %v4693
  %v4695 = vpop.f32.mrb[0].mxu0
  %v4696 = vpop.f32.mrb[0].mxu0
  %4697 = vdwg.mxu0
  %v4698 = vadd.f32 %v4611, %v4651
  %v4699 = vadd.f32 %v4612, %v4653
  %v4700 = vadd.f32 %v4613, %v4692
  %v4701 = vadd.f32 %v4614, %v4694
  %v4702 = vxor.u32 %v4698, 2147483648
  %v4703 = vmul.f32 %v4702, 1.442695
  %v4704 = vpow.pop %v4703
  %v4705 = vadd.f32 %v4704, 1.0
  %v4706 = vrcp.pop %v4705
  %v4707 = vmul.f32 1.0, %v4706
  %v4708 = vxor.u32 %v4699, 2147483648
  %v4709 = vmul.f32 %v4708, 1.442695
  %v4710 = vpow.pop %v4709
  %v4711 = vadd.f32 %v4710, 1.0
  %v4712 = vrcp.pop %v4711
  %v4713 = vmul.f32 1.0, %v4712
  %v4714 = vtanh.pop %v4700
  %v4715 = vxor.u32 %v4701, 2147483648
  %v4716 = vmul.f32 %v4715, 1.442695
  %v4717 = vpow.pop %v4716
  %v4718 = vadd.f32 %v4717, 1.0
  %v4719 = vrcp.pop %v4718
  %v4720 = vmul.f32 1.0, %v4719
  %v4721 = vmul.f32 %v4713, %v4606
  %v4722 = vmul.f32 %v4707, %v4714
  %v4723 = vadd.f32 %v4721, %v4722
  %v4724 = vtanh.pop %v4723
  %v4725 = vmul.f32 %v4720, %v4724
  %v4726 = vpack.c.bf16 %v4725, %v4725
  %v4727 = vld [vmem:[%s7] sm:$0xf]
  %v4728 = vld [vmem:[%s7 + $0x4] sm:$0xf]
  %v4729 = vld [vmem:[%s7 + $0x8] sm:$0xf]
  %v4730 = vld [vmem:[%s7 + $0xc] sm:$0xf]
  %v4731 = vld [vmem:[%s7 + $0x10] sm:$0xf]
  %v4732 = vld [vmem:[%s7 + $0x14] sm:$0xf]
  %v4733 = vld [vmem:[%s7 + $0x18] sm:$0xf]
  %v4734 = vld [vmem:[%s7 + $0x1c] sm:$0xf]
  %v4735 = vld [vmem:[%s7 + $0x20] sm:$0xf]
  %v4736 = vld [vmem:[%s7 + $0x24] sm:$0xf]
  %v4737 = vld [vmem:[%s7 + $0x28] sm:$0xf]
  %v4738 = vld [vmem:[%s7 + $0x2c] sm:$0xf]
  %v4739 = vld [vmem:[%s7 + $0x30] sm:$0xf]
  %v4740 = vld [vmem:[%s7 + $0x34] sm:$0xf]
  %v4741 = vld [vmem:[%s7 + $0x38] sm:$0xf]
  %v4742 = vld [vmem:[%s7 + $0x3c] sm:$0xf]
  %v4743 = vld [vmem:[%s8] sm:$0x1]
  %v4745 = vlaneseq
  %v4746 = vshrl.u32 %v4745, 7
  %v4747 = vsub.s32 0, %v4746
  %v4748 = vrot.slane %v4743, %v4747
  %v4766 = vunpack.c.l.b16 %v4727
  %v4767 = vunpack.c.l.b16 %v4728
  %v4768 = vunpack.c.l.b16 %v4729
  %v4769 = vunpack.c.l.b16 %v4730
  %v4770 = vunpack.c.l.b16 %v4731
  %v4771 = vunpack.c.l.b16 %v4732
  %v4772 = vunpack.c.l.b16 %v4733
  %v4773 = vunpack.c.l.b16 %v4734
  %v4774 = vunpack.c.l.b16 %v4735
  %v4775 = vunpack.c.l.b16 %v4736
  %v4776 = vunpack.c.l.b16 %v4737
  %v4777 = vunpack.c.l.b16 %v4738
  %v4778 = vunpack.c.l.b16 %v4739
  %v4779 = vunpack.c.l.b16 %v4740
  %v4780 = vunpack.c.l.b16 %v4741
  %v4781 = vunpack.c.l.b16 %v4742
  %v4782 = vpack.c.b16 %v4767, %v4766
  %v4783 = vpack.c.b16 %v4769, %v4768
  %v4784 = vpack.c.b16 %v4771, %v4770
  %v4785 = vpack.c.b16 %v4773, %v4772
  %v4786 = vpack.c.b16 %v4775, %v4774
  %v4787 = vpack.c.b16 %v4777, %v4776
  %v4788 = vpack.c.b16 %v4779, %v4778
  %v4789 = vpack.c.b16 %v4781, %v4780
  %4798 = vmatprep.subr.bf16.mxu0 0
  %4799 = vmatpush1.bf16.msra.mxu0 %v4782
  %4800 = vmatprep.subr.bf16.mxu0 0
  %4801 = vmatpush1.bf16.msra.mxu0 %v4783
  %4802 = vmatprep.subr.bf16.mxu0 0
  %4803 = vmatpush1.bf16.msra.mxu0 %v4784
  %4804 = vmatprep.subr.bf16.mxu0 0
  %4805 = vmatpush1.bf16.msra.mxu0 %v4785
  %4806 = vmatprep.subr.bf16.mxu0 0
  %4807 = vmatpush1.bf16.msra.mxu0 %v4786
  %4808 = vmatprep.subr.bf16.mxu0 0
  %4809 = vmatpush1.bf16.msra.mxu0 %v4787
  %4810 = vmatprep.subr.bf16.mxu0 0
  %4811 = vmatpush1.bf16.msra.mxu0 %v4788
  %4812 = vmatprep.subr.bf16.mxu0 0
  %4813 = vmatpush1.bf16.msra.mxu0 %v4789
  %4814 = vmatprep.subr.bf16.mxu0 0
  %4815 = vmatpush1.bf16.msra.mxu0 0
  %4816 = vmatprep.subr.bf16.mxu0 0
  %4817 = vmatpush1.bf16.msra.mxu0 0
  %4818 = vmatprep.subr.bf16.mxu0 0
  %4819 = vmatpush1.bf16.msra.mxu0 0
  %4820 = vmatprep.subr.bf16.mxu0 0
  %4821 = vmatpush1.bf16.msra.mxu0 0
  %4822 = vmatprep.subr.bf16.mxu0 0
  %4823 = vmatpush1.bf16.msra.mxu0 0
  %4824 = vmatprep.subr.bf16.mxu0 0
  %4825 = vmatpush1.bf16.msra.mxu0 0
  %4826 = vmatprep.subr.bf16.mxu0 0
  %4827 = vmatpush1.bf16.msra.mxu0 0
  %4828 = vmatprep.subr.bf16.mxu0 0
  %4829 = vmatpush1.bf16.msra.mxu0 0
  %4830 = vmatprep.mubr.bf16.mxu0 0
  %4831 = vmatmul.mubr.bf16.gmra.mrb[0].mxu0 %v4726
  %v4832 = vpop.f32.mrb[0].mxu0
  %v4833 = vadd.f32 %v4748, %v4832
  %v4834 = vpop.f32.mrb[0].mxu0
  %v4835 = vpop.f32.mrb[0].mxu0
  %v4836 = vpop.f32.mrb[0].mxu0
  %4837 = vdwg.mxu0
  %4838 = vst [vmem:[%s9] sm:$0xff] %v4833
  // Predicated region
  $region38: #{lstm_classifier_forward.1} parent=0 // pred_check
    _
  $region39: #{lstm_classifier_forward.1} parent=0 // pred_check_branch
    %4840 = sbr.rel (0) target = $region41
  $region40: #{lstm_classifier_forward.1} parent=0 // pred_region
    _
  $region41: #{lstm_classifier_forward.1} parent=0 // pred_fallthru
    _
  // Predicated region
  $region42: #{lstm_classifier_forward.1} parent=0 // pred_check
    _
  $region43: #{lstm_classifier_forward.1} parent=0 // pred_check_branch
    %4842 = sbr.rel (0) target = $region45
  $region44: #{lstm_classifier_forward.1} parent=0 // pred_region
    _
  $region45: #{lstm_classifier_forward.1} parent=0 // pred_fallthru
    _

</llo_original>
